<compile_context>
chip_gen: v7x
topology: tpu7x:2x2x1
jax: 0.10.0
libtpu: 0.0.40
codegen_flags: <defaults>
</compile_context>

<pallas_src>
import functools

import numpy as np
import jax
import jax.numpy as jnp
from jax.experimental import pallas as pl
from jax.experimental.pallas import tpu as pltpu

# ----------------------------- static config --------------------------------
N_BASIS = 5                                   # number of RBF basis functions
DOF = 1                                       # len(state_index)
OUTPUT_SIZE = N_BASIS * DOF + 2 * DOF         # 7
T_PARAM = 10
L_PARAM = 10
TAU = 1.0
DT = 1.0 / (T_PARAM * L_PARAM)                # 0.01
TIME_STEPS = int(round(TAU / DT)) + 1         # 101
A_X = 1.0
A_Z = 25.0
IMAGE_SIZE = 28
VMEM_LIMIT = 32 * 1024 * 1024


# ----------------------------- fused kernel ----------------------------------
def _ndp_kernel(bblk, x_ref, y0_ref,
                b1_ref, b1t_ref, b2_ref, b2t_ref, w1p_ref, fc1b_ref,
                mw0_ref, mb0_ref, mw1_ref, mb1_ref, mw2_ref, mb2_ref,
                mw3_ref, mb3_ref, wl_ref, bl_ref,
                p_ref, qz_ref, c_ref, g_ref, y_ref):
    """One batch block: CNN -> MLP -> closed-form DMP.

    x_ref:  (1, bblk, 2, 14, 28)  image rows split by parity (row = 2r + p)
    y0_ref: (1, bblk, 1)
    b1_ref: (2, 5, 28, 240) bf16  conv1 band matrices (col-pool phase, tap row)
    b2_ref: (2, 5, 240, 200) bf16 conv2 band matrices
    w1p_ref:(4, 200, 200)  bf16   fc1 weight split into conv2 row-pool blocks
    y_ref:  (1, bblk, 101)
    """
    f32, bf16 = jnp.float32, jnp.bfloat16
    rows = []
    for b in range(bblk):
        # ---- conv1 + bias + ReLU + 2x2 max-pool ------------------------------
        # lanes of the (12, 240) result are  oc*12 + pooled_w.
        m1 = None
        for rp in range(2):          # pool phase along rows
            for cp in range(2):      # pool phase along cols
                acc = None
                for ki in range(5):
                    r = rp + ki
                    xs = x_ref[0, b, r % 2, r // 2:r // 2 + 12, :].astype(bf16)
                    t = jnp.dot(xs, b1_ref[cp, ki],
                                preferred_element_type=f32)
                    acc = t if acc is None else acc + t
                m1 = acc if m1 is None else jnp.maximum(m1, acc)
        p1 = jnp.maximum(m1 + b1t_ref[...], 0.0)                    # (12, 240)

        # ---- conv2 + bias + ReLU; col-pool fused via even/odd bands ----------
        # lanes of the (8, 200) result are  oc*4 + pooled_w.
        m2 = None
        for cp in range(2):
            acc = None
            for ki in range(5):
                t = jnp.dot(p1[ki:ki + 8, :].astype(bf16), b2_ref[cp, ki],
                            preferred_element_type=f32)
                acc = t if acc is None else acc + t
            m2 = acc if m2 is None else jnp.maximum(m2, acc)
        h2 = jnp.maximum(m2 + b2t_ref[...], 0.0)                    # (8, 200)

        # ---- conv2 row-pool fused with fc1 (4 row-blocks of the weight) ------
        hb = None
        for i in range(4):
            pr = jnp.maximum(h2[2 * i:2 * i + 1, :], h2[2 * i + 1:2 * i + 2, :])
            t = jnp.dot(pr.astype(bf16), w1p_ref[i],
                        preferred_element_type=f32)
            hb = t if hb is None else hb + t
        rows.append(hb)                                             # (1, 200)

    h = rows[0] if bblk == 1 else jnp.concatenate(rows, axis=0)     # (bblk, 200)
    h = jnp.maximum(h + fc1b_ref[...], 0.0)

    # ---- middle layers + last_fc * 1000 --------------------------------------
    for w_ref, b_ref in ((mw0_ref, mb0_ref), (mw1_ref, mb1_ref),
                         (mw2_ref, mb2_ref), (mw3_ref, mb3_ref)):
        h = jnp.maximum(
            jnp.dot(h.astype(bf16), w_ref[...], preferred_element_type=f32)
            + b_ref[...], 0.0)
    out = (jnp.dot(h.astype(bf16), wl_ref[...], preferred_element_type=f32)
           + bl_ref[...]) * 1000.0                                  # (bblk, 7)

    # ---- closed-form DMP Euler integration (precomputed linear recurrence) ---
    goal = out[:, 0:DOF]                                            # (bblk, 1)
    wdmp = out[:, DOF:DOF * (N_BASIS + 1)]                          # (bblk, 5)
    y0 = y0_ref[0]                                                  # (bblk, 1)
    f = jnp.dot(wdmp, g_ref[...], preferred_element_type=f32)       # (bblk, T)
    y_ref[0] = (y0 * p_ref[...] + qz_ref[...] + goal * c_ref[...]
                + (goal - y0) * f)


# ----------------------------- host-side constants ---------------------------
def _dmp_constants():
    """Closed-form constants for the (linear) DMP Euler integration.

    Matches the reference `integrate`: x is decayed before psi is evaluated,
    dz/dy use the pre-update (y, z), z0 = dy0 * tau with dy0 = 0.01.
    """
    b_z = A_Z / 4.0
    gamma = DT / TAU
    c = np.exp(-A_X * np.linspace(0.0, 1.0, N_BASIS))
    hh = np.ones(N_BASIS) * N_BASIS ** 1.5 / c / A_X                 # sigma2
    xs = (1.0 - A_X * DT / TAU) ** (np.arange(TIME_STEPS - 1) + 1.0)
    psi = np.exp(-hh[None, :] * (xs[:, None] - c[None, :]) ** 2)
    phi = psi * xs[:, None] / psi.sum(axis=1, keepdims=True)         # (T-1, N)
    A = np.array([[1.0, gamma],
                  [-gamma * A_Z * b_z, 1.0 - gamma * A_Z]], np.float64)
    apow = np.zeros((TIME_STEPS, 2, 2), np.float64)
    apow[0] = np.eye(2)
    for t in range(1, TIME_STEPS):
        apow[t] = A @ apow[t - 1]
    R = np.zeros((TIME_STEPS, TIME_STEPS - 1), np.float64)
    for t in range(1, TIME_STEPS):
        R[t, :t] = apow[:t, 0, 1][::-1]                              # A^{t-1-i}[0,1]
    G = gamma * (R @ phi)                                            # (T, N)
    C = gamma * A_Z * b_z * R.sum(axis=1)
    P = apow[:, 0, 0]
    QZ = apow[:, 0, 1] * (0.01 * TAU)                                # z0 = dy0*tau
    return (P.astype(np.float32), QZ.astype(np.float32),
            C.astype(np.float32), G.astype(np.float32))


# ----------------------------- parameters ------------------------------------
def init_raw_params(key):
    ks = jax.random.split(key, 12)

    def u(k, shape, fan_in):
        b = 1.0 / np.sqrt(fan_in)
        return jax.random.uniform(k, shape, jnp.float32, -b, b)

    raw = {}
    raw["conv1_w"] = u(ks[0], (5, 5, 20), 25)          # (ki, kj, oc), Cin = 1
    raw["conv1_b"] = u(ks[1], (20,), 25)
    raw["conv2_w"] = u(ks[2], (5, 5, 20, 50), 500)     # (ki, kj, ic, oc)
    raw["conv2_b"] = u(ks[3], (50,), 500)
    raw["fc1_w"] = u(ks[4], (800, 200), 800)           # rows in torch NCHW order
    raw["fc1_b"] = u(ks[5], (200,), 800)
    # middle_layers: layer_sizes = [784, 200, 100, 200, 2*out, out]
    sizes = [200, 100, 200, 2 * OUTPUT_SIZE, OUTPUT_SIZE]
    mids = []
    for i in range(4):
        w = u(ks[6 + i], (sizes[i], sizes[i + 1]), sizes[i])
        mids.append((w, jnp.full((sizes[i + 1],), 0.1, jnp.float32)))
    raw["middle"] = mids
    q, _ = jnp.linalg.qr(
        jax.random.normal(ks[10], (OUTPUT_SIZE, OUTPUT_SIZE), jnp.float32))
    raw["last_w"] = q
    raw["last_b"] = jnp.zeros((OUTPUT_SIZE,), jnp.float32)
    return raw


def prepare_params(raw):
    w1 = np.asarray(raw["conv1_w"])
    b1 = np.asarray(raw["conv1_b"])
    w2 = np.asarray(raw["conv2_w"])
    b2 = np.asarray(raw["conv2_b"])
    fc1w = np.asarray(raw["fc1_w"])

    # conv1 band matrices, columns = oc*12 + pooled_w, split by col-pool phase.
    b1band = np.zeros((2, 5, 28, 20 * 12), np.float32)
    for cp in range(2):
        for ki in range(5):
            for pw in range(12):
                for kj in range(5):
                    j = 2 * pw + cp + kj
                    b1band[cp, ki, j, pw::12] = w1[ki, kj, :]

    # conv2 band matrices: rows = ic*12 + pw (conv1 pooled layout),
    # cols = oc*4 + pooled_w, split by col-pool phase.
    b2band = np.zeros((2, 5, 20 * 12, 50 * 4), np.float32)
    for cp in range(2):
        for ki in range(5):
            for j2 in range(4):
                for kj in range(5):
                    pw = 2 * j2 + cp + kj
                    b2band[cp, ki, pw::12, j2::4] = w2[ki, kj, :, :]

    # fc1 weight split into the 4 conv2 row-pool blocks; rows permuted so the
    # kernel's (oc*4 + j) lane order matches torch's NCHW flatten c*16 + i*4 + j.
    w1p = np.zeros((4, 200, 200), np.float32)
    for i in range(4):
        for j in range(4):
            w1p[i, j::4, :] = fc1w[i * 4 + j::16, :]

    P, QZ, C, G = _dmp_constants()

    p = {
        "b1band": jnp.asarray(b1band, jnp.bfloat16),
        "b1t": jnp.asarray(np.repeat(b1, 12).reshape(1, 240), jnp.float32),
        "b2band": jnp.asarray(b2band, jnp.bfloat16),
        "b2t": jnp.asarray(np.repeat(b2, 4).reshape(1, 200), jnp.float32),
        "w1p": jnp.asarray(w1p, jnp.bfloat16),
        "fc1_b": jnp.asarray(np.asarray(raw["fc1_b"]).reshape(1, 200),
                             jnp.float32),
        "m_w": [jnp.asarray(w, jnp.bfloat16) for (w, _) in raw["middle"]],
        "m_b": [jnp.asarray(b).reshape(1, -1).astype(jnp.float32)
                for (_, b) in raw["middle"]],
        "last_w": jnp.asarray(raw["last_w"], jnp.bfloat16),
        "last_b": jnp.asarray(raw["last_b"]).reshape(1, OUTPUT_SIZE)
                     .astype(jnp.float32),
        "dmp_P": jnp.asarray(P.reshape(1, TIME_STEPS)),
        "dmp_QZ": jnp.asarray(QZ.reshape(1, TIME_STEPS)),
        "dmp_C": jnp.asarray(C.reshape(1, TIME_STEPS)),
        "dmp_G": jnp.asarray(G.T),                                   # (5, 101)
    }
    return p


# ----------------------------- forward ----------------------------------------
def _choose_bblk(batch):
    # >= 2 grid steps when possible (keeps both v7x TensorCores busy); small
    # batch blocks keep the per-step VMEM footprint trivial on every gen.
    for d in (4, 2):
        if batch % d == 0 and batch // d >= 2:
            return d
    return 1


def _const_index_map(ndim):
    return lambda i: (0,) * ndim


def ndp_cnn_forward(params, x, y0):
    B = x.shape[0]
    bblk = _choose_bblk(B)
    nb = B // bblk

    img = x.astype(jnp.float32).reshape(B, IMAGE_SIZE, IMAGE_SIZE)
    # split rows by parity (row = 2r + p) -> (nb, bblk, 2, 14, 28), W in lanes
    img = img.reshape(B, 14, 2, IMAGE_SIZE).transpose(0, 2, 1, 3)
    img = img.reshape(nb, bblk, 2, 14, IMAGE_SIZE)
    y0b = jnp.reshape(y0.astype(jnp.float32), (nb, bblk, 1))

    const_args = (params["b1band"], params["b1t"],
                  params["b2band"], params["b2t"],
                  params["w1p"], params["fc1_b"],
                  params["m_w"][0], params["m_b"][0],
                  params["m_w"][1], params["m_b"][1],
                  params["m_w"][2], params["m_b"][2],
                  params["m_w"][3], params["m_b"][3],
                  params["last_w"], params["last_b"],
                  params["dmp_P"], params["dmp_QZ"],
                  params["dmp_C"], params["dmp_G"])

    in_specs = [
        pl.BlockSpec((1, bblk, 2, 14, IMAGE_SIZE), lambda i: (i, 0, 0, 0, 0)),
        pl.BlockSpec((1, bblk, 1), lambda i: (i, 0, 0)),
    ] + [pl.BlockSpec(a.shape, _const_index_map(a.ndim)) for a in const_args]

    flops = int(B * 12e6)
    bytes_accessed = int(
        img.size * 4 + y0b.size * 4 + B * TIME_STEPS * 4
        + sum(int(a.size) * a.dtype.itemsize for a in const_args))

    Y = pl.pallas_call(
        functools.partial(_ndp_kernel, bblk),
        out_shape=jax.ShapeDtypeStruct((nb, bblk, TIME_STEPS), jnp.float32),
        grid=(nb,),
        in_specs=in_specs,
        out_specs=pl.BlockSpec((1, bblk, TIME_STEPS), lambda i: (i, 0, 0)),
        compiler_params=pltpu.CompilerParams(
            dimension_semantics=("parallel",),
            vmem_limit_bytes=VMEM_LIMIT),
        cost_estimate=pl.CostEstimate(flops=flops, transcendentals=0,
                                      bytes_accessed=bytes_accessed),
    )(img, y0b, *const_args)

    Y = Y.reshape(B, TIME_STEPS)
    return jnp.transpose(Y.reshape(B, DOF, TIME_STEPS), (0, 2, 1))   # (B, T, 1)


# ----------------------------- main -------------------------------------------
if __name__ == "__main__":
    key = jax.random.PRNGKey(0)
    pk, xk, yk = jax.random.split(key, 3)
    params = prepare_params(init_raw_params(pk))

    B = 2
    x = jax.random.uniform(xk, (B, IMAGE_SIZE * IMAGE_SIZE), jnp.float32)
    y0 = jax.random.normal(yk, (B, 1), jnp.float32) * 0.1

    fwd = jax.jit(ndp_cnn_forward)
    out = jax.block_until_ready(fwd(params, x, y0))

    assert out.shape == (B, TIME_STEPS, DOF), out.shape
    assert bool(jnp.all(jnp.isfinite(out)))
    print("KERNEL_OK")
</pallas_src>

<mosaic_0001>
module attributes {stable_mosaic.version = 11 : i64} {
  func.func @_ndp_kernel(%arg0: i32, %arg1: memref<1x1x2x14x28xf32, #tpu.memory_space<vmem>>, %arg2: memref<1x1x1xf32, #tpu.memory_space<vmem>>, %arg3: memref<2x5x28x240xbf16, #tpu.memory_space<vmem>>, %arg4: memref<1x240xf32, #tpu.memory_space<vmem>>, %arg5: memref<2x5x240x200xbf16, #tpu.memory_space<vmem>>, %arg6: memref<1x200xf32, #tpu.memory_space<vmem>>, %arg7: memref<4x200x200xbf16, #tpu.memory_space<vmem>>, %arg8: memref<1x200xf32, #tpu.memory_space<vmem>>, %arg9: memref<200x100xbf16, #tpu.memory_space<vmem>>, %arg10: memref<1x100xf32, #tpu.memory_space<vmem>>, %arg11: memref<100x200xbf16, #tpu.memory_space<vmem>>, %arg12: memref<1x200xf32, #tpu.memory_space<vmem>>, %arg13: memref<200x14xbf16, #tpu.memory_space<vmem>>, %arg14: memref<1x14xf32, #tpu.memory_space<vmem>>, %arg15: memref<14x7xbf16, #tpu.memory_space<vmem>>, %arg16: memref<1x7xf32, #tpu.memory_space<vmem>>, %arg17: memref<7x7xbf16, #tpu.memory_space<vmem>>, %arg18: memref<1x7xf32, #tpu.memory_space<vmem>>, %arg19: memref<1x101xf32, #tpu.memory_space<vmem>>, %arg20: memref<1x101xf32, #tpu.memory_space<vmem>>, %arg21: memref<1x101xf32, #tpu.memory_space<vmem>>, %arg22: memref<5x101xf32, #tpu.memory_space<vmem>>, %arg23: memref<1x1x101xf32, #tpu.memory_space<vmem>>) attributes {dimension_semantics = [#tpu.dimension_semantics<parallel>], iteration_bounds = array<i64: 2>, scalar_prefetch = 0 : i64, scratch_operands = 0 : i64, tpu.core_type = #tpu.core_type<tc>, window_params = [{transform_indices = @transform_0, window_bounds = array<i64: 1, 1, 2, 14, 28>}, {transform_indices = @transform_1, window_bounds = array<i64: 1, 1, 1>}, {pipeline_mode = #tpu.pipeline_mode<synchronous>, transform_indices = @transform_2, window_bounds = array<i64: 2, 5, 28, 240>}, {pipeline_mode = #tpu.pipeline_mode<synchronous>, transform_indices = @transform_3, window_bounds = array<i64: 1, 240>}, {pipeline_mode = #tpu.pipeline_mode<synchronous>, transform_indices = @transform_4, window_bounds = array<i64: 2, 5, 240, 200>}, {pipeline_mode = #tpu.pipeline_mode<synchronous>, transform_indices = @transform_5, window_bounds = array<i64: 1, 200>}, {pipeline_mode = #tpu.pipeline_mode<synchronous>, transform_indices = @transform_6, window_bounds = array<i64: 4, 200, 200>}, {pipeline_mode = #tpu.pipeline_mode<synchronous>, transform_indices = @transform_7, window_bounds = array<i64: 1, 200>}, {pipeline_mode = #tpu.pipeline_mode<synchronous>, transform_indices = @transform_8, window_bounds = array<i64: 200, 100>}, {pipeline_mode = #tpu.pipeline_mode<synchronous>, transform_indices = @transform_9, window_bounds = array<i64: 1, 100>}, {pipeline_mode = #tpu.pipeline_mode<synchronous>, transform_indices = @transform_10, window_bounds = array<i64: 100, 200>}, {pipeline_mode = #tpu.pipeline_mode<synchronous>, transform_indices = @transform_11, window_bounds = array<i64: 1, 200>}, {pipeline_mode = #tpu.pipeline_mode<synchronous>, transform_indices = @transform_12, window_bounds = array<i64: 200, 14>}, {pipeline_mode = #tpu.pipeline_mode<synchronous>, transform_indices = @transform_13, window_bounds = array<i64: 1, 14>}, {pipeline_mode = #tpu.pipeline_mode<synchronous>, transform_indices = @transform_14, window_bounds = array<i64: 14, 7>}, {pipeline_mode = #tpu.pipeline_mode<synchronous>, transform_indices = @transform_15, window_bounds = array<i64: 1, 7>}, {pipeline_mode = #tpu.pipeline_mode<synchronous>, transform_indices = @transform_16, window_bounds = array<i64: 7, 7>}, {pipeline_mode = #tpu.pipeline_mode<synchronous>, transform_indices = @transform_17, window_bounds = array<i64: 1, 7>}, {pipeline_mode = #tpu.pipeline_mode<synchronous>, transform_indices = @transform_18, window_bounds = array<i64: 1, 101>}, {pipeline_mode = #tpu.pipeline_mode<synchronous>, transform_indices = @transform_19, window_bounds = array<i64: 1, 101>}, {pipeline_mode = #tpu.pipeline_mode<synchronous>, transform_indices = @transform_20, window_bounds = array<i64: 1, 101>}, {pipeline_mode = #tpu.pipeline_mode<synchronous>, transform_indices = @transform_21, window_bounds = array<i64: 5, 101>}, {transform_indices = @transform_22, window_bounds = array<i64: 1, 1, 101>}]} {
    %c0 = arith.constant 0 : index
    %c0_0 = arith.constant 0 : index
    %c0_1 = arith.constant 0 : index
    %c0_2 = arith.constant 0 : index
    %c0_3 = arith.constant 0 : index
    %0 = vector.load %arg1[%c0, %c0_0, %c0_1, %c0_2, %c0_3] : memref<1x1x2x14x28xf32, #tpu.memory_space<vmem>>, vector<1x1x1x12x28xf32>
    %1 = vector.shape_cast %0 : vector<1x1x1x12x28xf32> to vector<12x28xf32>
    %2 = arith.truncf %1 : vector<12x28xf32> to vector<12x28xbf16>
    %c0_4 = arith.constant 0 : index
    %c0_5 = arith.constant 0 : index
    %c0_6 = arith.constant 0 : index
    %c0_7 = arith.constant 0 : index
    %3 = vector.load %arg3[%c0_4, %c0_5, %c0_6, %c0_7] : memref<2x5x28x240xbf16, #tpu.memory_space<vmem>>, vector<1x1x28x240xbf16>
    %4 = vector.shape_cast %3 : vector<1x1x28x240xbf16> to vector<28x240xbf16>
    %cst = arith.constant dense<0.000000e+00> : vector<12x240xf32>
    %5 = tpu.matmul %2, %4, %cst {dimension_numbers = #tpu.dot_dimension_numbers<[1], [0], [0], [1], [0, 0, 1, 1], [], []>} : vector<12x28xbf16>, vector<28x240xbf16>, vector<12x240xf32> -> vector<12x240xf32>
    %c0_8 = arith.constant 0 : index
    %c0_9 = arith.constant 0 : index
    %c1 = arith.constant 1 : index
    %c0_10 = arith.constant 0 : index
    %c0_11 = arith.constant 0 : index
    %6 = vector.load %arg1[%c0_8, %c0_9, %c1, %c0_10, %c0_11] : memref<1x1x2x14x28xf32, #tpu.memory_space<vmem>>, vector<1x1x1x12x28xf32>
    %7 = vector.shape_cast %6 : vector<1x1x1x12x28xf32> to vector<12x28xf32>
    %8 = arith.truncf %7 : vector<12x28xf32> to vector<12x28xbf16>
    %c0_12 = arith.constant 0 : index
    %c1_13 = arith.constant 1 : index
    %c0_14 = arith.constant 0 : index
    %c0_15 = arith.constant 0 : index
    %9 = vector.load %arg3[%c0_12, %c1_13, %c0_14, %c0_15] : memref<2x5x28x240xbf16, #tpu.memory_space<vmem>>, vector<1x1x28x240xbf16>
    %10 = vector.shape_cast %9 : vector<1x1x28x240xbf16> to vector<28x240xbf16>
    %cst_16 = arith.constant dense<0.000000e+00> : vector<12x240xf32>
    %11 = tpu.matmul %8, %10, %cst_16 {dimension_numbers = #tpu.dot_dimension_numbers<[1], [0], [0], [1], [0, 0, 1, 1], [], []>} : vector<12x28xbf16>, vector<28x240xbf16>, vector<12x240xf32> -> vector<12x240xf32>
    %12 = arith.addf %5, %11 : vector<12x240xf32>
    %c0_17 = arith.constant 0 : index
    %c0_18 = arith.constant 0 : index
    %c0_19 = arith.constant 0 : index
    %c1_20 = arith.constant 1 : index
    %c0_21 = arith.constant 0 : index
    %13 = vector.load %arg1[%c0_17, %c0_18, %c0_19, %c1_20, %c0_21] : memref<1x1x2x14x28xf32, #tpu.memory_space<vmem>>, vector<1x1x1x12x28xf32>
    %14 = vector.shape_cast %13 : vector<1x1x1x12x28xf32> to vector<12x28xf32>
    %15 = arith.truncf %14 : vector<12x28xf32> to vector<12x28xbf16>
    %c0_22 = arith.constant 0 : index
    %c2 = arith.constant 2 : index
    %c0_23 = arith.constant 0 : index
    %c0_24 = arith.constant 0 : index
    %16 = vector.load %arg3[%c0_22, %c2, %c0_23, %c0_24] : memref<2x5x28x240xbf16, #tpu.memory_space<vmem>>, vector<1x1x28x240xbf16>
    %17 = vector.shape_cast %16 : vector<1x1x28x240xbf16> to vector<28x240xbf16>
    %cst_25 = arith.constant dense<0.000000e+00> : vector<12x240xf32>
    %18 = tpu.matmul %15, %17, %cst_25 {dimension_numbers = #tpu.dot_dimension_numbers<[1], [0], [0], [1], [0, 0, 1, 1], [], []>} : vector<12x28xbf16>, vector<28x240xbf16>, vector<12x240xf32> -> vector<12x240xf32>
    %19 = arith.addf %12, %18 : vector<12x240xf32>
    %c0_26 = arith.constant 0 : index
    %c0_27 = arith.constant 0 : index
    %c1_28 = arith.constant 1 : index
    %c1_29 = arith.constant 1 : index
    %c0_30 = arith.constant 0 : index
    %20 = vector.load %arg1[%c0_26, %c0_27, %c1_28, %c1_29, %c0_30] : memref<1x1x2x14x28xf32, #tpu.memory_space<vmem>>, vector<1x1x1x12x28xf32>
    %21 = vector.shape_cast %20 : vector<1x1x1x12x28xf32> to vector<12x28xf32>
    %22 = arith.truncf %21 : vector<12x28xf32> to vector<12x28xbf16>
    %c0_31 = arith.constant 0 : index
    %c3 = arith.constant 3 : index
    %c0_32 = arith.constant 0 : index
    %c0_33 = arith.constant 0 : index
    %23 = vector.load %arg3[%c0_31, %c3, %c0_32, %c0_33] : memref<2x5x28x240xbf16, #tpu.memory_space<vmem>>, vector<1x1x28x240xbf16>
    %24 = vector.shape_cast %23 : vector<1x1x28x240xbf16> to vector<28x240xbf16>
    %cst_34 = arith.constant dense<0.000000e+00> : vector<12x240xf32>
    %25 = tpu.matmul %22, %24, %cst_34 {dimension_numbers = #tpu.dot_dimension_numbers<[1], [0], [0], [1], [0, 0, 1, 1], [], []>} : vector<12x28xbf16>, vector<28x240xbf16>, vector<12x240xf32> -> vector<12x240xf32>
    %26 = arith.addf %19, %25 : vector<12x240xf32>
    %c0_35 = arith.constant 0 : index
    %c0_36 = arith.constant 0 : index
    %c0_37 = arith.constant 0 : index
    %c2_38 = arith.constant 2 : index
    %c0_39 = arith.constant 0 : index
    %27 = vector.load %arg1[%c0_35, %c0_36, %c0_37, %c2_38, %c0_39] : memref<1x1x2x14x28xf32, #tpu.memory_space<vmem>>, vector<1x1x1x12x28xf32>
    %28 = vector.shape_cast %27 : vector<1x1x1x12x28xf32> to vector<12x28xf32>
    %29 = arith.truncf %28 : vector<12x28xf32> to vector<12x28xbf16>
    %c0_40 = arith.constant 0 : index
    %c4 = arith.constant 4 : index
    %c0_41 = arith.constant 0 : index
    %c0_42 = arith.constant 0 : index
    %30 = vector.load %arg3[%c0_40, %c4, %c0_41, %c0_42] : memref<2x5x28x240xbf16, #tpu.memory_space<vmem>>, vector<1x1x28x240xbf16>
    %31 = vector.shape_cast %30 : vector<1x1x28x240xbf16> to vector<28x240xbf16>
    %cst_43 = arith.constant dense<0.000000e+00> : vector<12x240xf32>
    %32 = tpu.matmul %29, %31, %cst_43 {dimension_numbers = #tpu.dot_dimension_numbers<[1], [0], [0], [1], [0, 0, 1, 1], [], []>} : vector<12x28xbf16>, vector<28x240xbf16>, vector<12x240xf32> -> vector<12x240xf32>
    %33 = arith.addf %26, %32 : vector<12x240xf32>
    %c0_44 = arith.constant 0 : index
    %c0_45 = arith.constant 0 : index
    %c0_46 = arith.constant 0 : index
    %c0_47 = arith.constant 0 : index
    %c0_48 = arith.constant 0 : index
    %34 = vector.load %arg1[%c0_44, %c0_45, %c0_46, %c0_47, %c0_48] : memref<1x1x2x14x28xf32, #tpu.memory_space<vmem>>, vector<1x1x1x12x28xf32>
    %35 = vector.shape_cast %34 : vector<1x1x1x12x28xf32> to vector<12x28xf32>
    %36 = arith.truncf %35 : vector<12x28xf32> to vector<12x28xbf16>
    %c1_49 = arith.constant 1 : index
    %c0_50 = arith.constant 0 : index
    %c0_51 = arith.constant 0 : index
    %c0_52 = arith.constant 0 : index
    %37 = vector.load %arg3[%c1_49, %c0_50, %c0_51, %c0_52] : memref<2x5x28x240xbf16, #tpu.memory_space<vmem>>, vector<1x1x28x240xbf16>
    %38 = vector.shape_cast %37 : vector<1x1x28x240xbf16> to vector<28x240xbf16>
    %cst_53 = arith.constant dense<0.000000e+00> : vector<12x240xf32>
    %39 = tpu.matmul %36, %38, %cst_53 {dimension_numbers = #tpu.dot_dimension_numbers<[1], [0], [0], [1], [0, 0, 1, 1], [], []>} : vector<12x28xbf16>, vector<28x240xbf16>, vector<12x240xf32> -> vector<12x240xf32>
    %c0_54 = arith.constant 0 : index
    %c0_55 = arith.constant 0 : index
    %c1_56 = arith.constant 1 : index
    %c0_57 = arith.constant 0 : index
    %c0_58 = arith.constant 0 : index
    %40 = vector.load %arg1[%c0_54, %c0_55, %c1_56, %c0_57, %c0_58] : memref<1x1x2x14x28xf32, #tpu.memory_space<vmem>>, vector<1x1x1x12x28xf32>
    %41 = vector.shape_cast %40 : vector<1x1x1x12x28xf32> to vector<12x28xf32>
    %42 = arith.truncf %41 : vector<12x28xf32> to vector<12x28xbf16>
    %c1_59 = arith.constant 1 : index
    %c1_60 = arith.constant 1 : index
    %c0_61 = arith.constant 0 : index
    %c0_62 = arith.constant 0 : index
    %43 = vector.load %arg3[%c1_59, %c1_60, %c0_61, %c0_62] : memref<2x5x28x240xbf16, #tpu.memory_space<vmem>>, vector<1x1x28x240xbf16>
    %44 = vector.shape_cast %43 : vector<1x1x28x240xbf16> to vector<28x240xbf16>
    %cst_63 = arith.constant dense<0.000000e+00> : vector<12x240xf32>
    %45 = tpu.matmul %42, %44, %cst_63 {dimension_numbers = #tpu.dot_dimension_numbers<[1], [0], [0], [1], [0, 0, 1, 1], [], []>} : vector<12x28xbf16>, vector<28x240xbf16>, vector<12x240xf32> -> vector<12x240xf32>
    %46 = arith.addf %39, %45 : vector<12x240xf32>
    %c0_64 = arith.constant 0 : index
    %c0_65 = arith.constant 0 : index
    %c0_66 = arith.constant 0 : index
    %c1_67 = arith.constant 1 : index
    %c0_68 = arith.constant 0 : index
    %47 = vector.load %arg1[%c0_64, %c0_65, %c0_66, %c1_67, %c0_68] : memref<1x1x2x14x28xf32, #tpu.memory_space<vmem>>, vector<1x1x1x12x28xf32>
    %48 = vector.shape_cast %47 : vector<1x1x1x12x28xf32> to vector<12x28xf32>
    %49 = arith.truncf %48 : vector<12x28xf32> to vector<12x28xbf16>
    %c1_69 = arith.constant 1 : index
    %c2_70 = arith.constant 2 : index
    %c0_71 = arith.constant 0 : index
    %c0_72 = arith.constant 0 : index
    %50 = vector.load %arg3[%c1_69, %c2_70, %c0_71, %c0_72] : memref<2x5x28x240xbf16, #tpu.memory_space<vmem>>, vector<1x1x28x240xbf16>
    %51 = vector.shape_cast %50 : vector<1x1x28x240xbf16> to vector<28x240xbf16>
    %cst_73 = arith.constant dense<0.000000e+00> : vector<12x240xf32>
    %52 = tpu.matmul %49, %51, %cst_73 {dimension_numbers = #tpu.dot_dimension_numbers<[1], [0], [0], [1], [0, 0, 1, 1], [], []>} : vector<12x28xbf16>, vector<28x240xbf16>, vector<12x240xf32> -> vector<12x240xf32>
    %53 = arith.addf %46, %52 : vector<12x240xf32>
    %c0_74 = arith.constant 0 : index
    %c0_75 = arith.constant 0 : index
    %c1_76 = arith.constant 1 : index
    %c1_77 = arith.constant 1 : index
    %c0_78 = arith.constant 0 : index
    %54 = vector.load %arg1[%c0_74, %c0_75, %c1_76, %c1_77, %c0_78] : memref<1x1x2x14x28xf32, #tpu.memory_space<vmem>>, vector<1x1x1x12x28xf32>
    %55 = vector.shape_cast %54 : vector<1x1x1x12x28xf32> to vector<12x28xf32>
    %56 = arith.truncf %55 : vector<12x28xf32> to vector<12x28xbf16>
    %c1_79 = arith.constant 1 : index
    %c3_80 = arith.constant 3 : index
    %c0_81 = arith.constant 0 : index
    %c0_82 = arith.constant 0 : index
    %57 = vector.load %arg3[%c1_79, %c3_80, %c0_81, %c0_82] : memref<2x5x28x240xbf16, #tpu.memory_space<vmem>>, vector<1x1x28x240xbf16>
    %58 = vector.shape_cast %57 : vector<1x1x28x240xbf16> to vector<28x240xbf16>
    %cst_83 = arith.constant dense<0.000000e+00> : vector<12x240xf32>
    %59 = tpu.matmul %56, %58, %cst_83 {dimension_numbers = #tpu.dot_dimension_numbers<[1], [0], [0], [1], [0, 0, 1, 1], [], []>} : vector<12x28xbf16>, vector<28x240xbf16>, vector<12x240xf32> -> vector<12x240xf32>
    %60 = arith.addf %53, %59 : vector<12x240xf32>
    %c0_84 = arith.constant 0 : index
    %c0_85 = arith.constant 0 : index
    %c0_86 = arith.constant 0 : index
    %c2_87 = arith.constant 2 : index
    %c0_88 = arith.constant 0 : index
    %61 = vector.load %arg1[%c0_84, %c0_85, %c0_86, %c2_87, %c0_88] : memref<1x1x2x14x28xf32, #tpu.memory_space<vmem>>, vector<1x1x1x12x28xf32>
    %62 = vector.shape_cast %61 : vector<1x1x1x12x28xf32> to vector<12x28xf32>
    %63 = arith.truncf %62 : vector<12x28xf32> to vector<12x28xbf16>
    %c1_89 = arith.constant 1 : index
    %c4_90 = arith.constant 4 : index
    %c0_91 = arith.constant 0 : index
    %c0_92 = arith.constant 0 : index
    %64 = vector.load %arg3[%c1_89, %c4_90, %c0_91, %c0_92] : memref<2x5x28x240xbf16, #tpu.memory_space<vmem>>, vector<1x1x28x240xbf16>
    %65 = vector.shape_cast %64 : vector<1x1x28x240xbf16> to vector<28x240xbf16>
    %cst_93 = arith.constant dense<0.000000e+00> : vector<12x240xf32>
    %66 = tpu.matmul %63, %65, %cst_93 {dimension_numbers = #tpu.dot_dimension_numbers<[1], [0], [0], [1], [0, 0, 1, 1], [], []>} : vector<12x28xbf16>, vector<28x240xbf16>, vector<12x240xf32> -> vector<12x240xf32>
    %67 = arith.addf %60, %66 : vector<12x240xf32>
    %68 = arith.maximumf %33, %67 : vector<12x240xf32>
    %c0_94 = arith.constant 0 : index
    %c0_95 = arith.constant 0 : index
    %c1_96 = arith.constant 1 : index
    %c0_97 = arith.constant 0 : index
    %c0_98 = arith.constant 0 : index
    %69 = vector.load %arg1[%c0_94, %c0_95, %c1_96, %c0_97, %c0_98] : memref<1x1x2x14x28xf32, #tpu.memory_space<vmem>>, vector<1x1x1x12x28xf32>
    %70 = vector.shape_cast %69 : vector<1x1x1x12x28xf32> to vector<12x28xf32>
    %71 = arith.truncf %70 : vector<12x28xf32> to vector<12x28xbf16>
    %c0_99 = arith.constant 0 : index
    %c0_100 = arith.constant 0 : index
    %c0_101 = arith.constant 0 : index
    %c0_102 = arith.constant 0 : index
    %72 = vector.load %arg3[%c0_99, %c0_100, %c0_101, %c0_102] : memref<2x5x28x240xbf16, #tpu.memory_space<vmem>>, vector<1x1x28x240xbf16>
    %73 = vector.shape_cast %72 : vector<1x1x28x240xbf16> to vector<28x240xbf16>
    %cst_103 = arith.constant dense<0.000000e+00> : vector<12x240xf32>
    %74 = tpu.matmul %71, %73, %cst_103 {dimension_numbers = #tpu.dot_dimension_numbers<[1], [0], [0], [1], [0, 0, 1, 1], [], []>} : vector<12x28xbf16>, vector<28x240xbf16>, vector<12x240xf32> -> vector<12x240xf32>
    %c0_104 = arith.constant 0 : index
    %c0_105 = arith.constant 0 : index
    %c0_106 = arith.constant 0 : index
    %c1_107 = arith.constant 1 : index
    %c0_108 = arith.constant 0 : index
    %75 = vector.load %arg1[%c0_104, %c0_105, %c0_106, %c1_107, %c0_108] : memref<1x1x2x14x28xf32, #tpu.memory_space<vmem>>, vector<1x1x1x12x28xf32>
    %76 = vector.shape_cast %75 : vector<1x1x1x12x28xf32> to vector<12x28xf32>
    %77 = arith.truncf %76 : vector<12x28xf32> to vector<12x28xbf16>
    %c0_109 = arith.constant 0 : index
    %c1_110 = arith.constant 1 : index
    %c0_111 = arith.constant 0 : index
    %c0_112 = arith.constant 0 : index
    %78 = vector.load %arg3[%c0_109, %c1_110, %c0_111, %c0_112] : memref<2x5x28x240xbf16, #tpu.memory_space<vmem>>, vector<1x1x28x240xbf16>
    %79 = vector.shape_cast %78 : vector<1x1x28x240xbf16> to vector<28x240xbf16>
    %cst_113 = arith.constant dense<0.000000e+00> : vector<12x240xf32>
    %80 = tpu.matmul %77, %79, %cst_113 {dimension_numbers = #tpu.dot_dimension_numbers<[1], [0], [0], [1], [0, 0, 1, 1], [], []>} : vector<12x28xbf16>, vector<28x240xbf16>, vector<12x240xf32> -> vector<12x240xf32>
    %81 = arith.addf %74, %80 : vector<12x240xf32>
    %c0_114 = arith.constant 0 : index
    %c0_115 = arith.constant 0 : index
    %c1_116 = arith.constant 1 : index
    %c1_117 = arith.constant 1 : index
    %c0_118 = arith.constant 0 : index
    %82 = vector.load %arg1[%c0_114, %c0_115, %c1_116, %c1_117, %c0_118] : memref<1x1x2x14x28xf32, #tpu.memory_space<vmem>>, vector<1x1x1x12x28xf32>
    %83 = vector.shape_cast %82 : vector<1x1x1x12x28xf32> to vector<12x28xf32>
    %84 = arith.truncf %83 : vector<12x28xf32> to vector<12x28xbf16>
    %c0_119 = arith.constant 0 : index
    %c2_120 = arith.constant 2 : index
    %c0_121 = arith.constant 0 : index
    %c0_122 = arith.constant 0 : index
    %85 = vector.load %arg3[%c0_119, %c2_120, %c0_121, %c0_122] : memref<2x5x28x240xbf16, #tpu.memory_space<vmem>>, vector<1x1x28x240xbf16>
    %86 = vector.shape_cast %85 : vector<1x1x28x240xbf16> to vector<28x240xbf16>
    %cst_123 = arith.constant dense<0.000000e+00> : vector<12x240xf32>
    %87 = tpu.matmul %84, %86, %cst_123 {dimension_numbers = #tpu.dot_dimension_numbers<[1], [0], [0], [1], [0, 0, 1, 1], [], []>} : vector<12x28xbf16>, vector<28x240xbf16>, vector<12x240xf32> -> vector<12x240xf32>
    %88 = arith.addf %81, %87 : vector<12x240xf32>
    %c0_124 = arith.constant 0 : index
    %c0_125 = arith.constant 0 : index
    %c0_126 = arith.constant 0 : index
    %c2_127 = arith.constant 2 : index
    %c0_128 = arith.constant 0 : index
    %89 = vector.load %arg1[%c0_124, %c0_125, %c0_126, %c2_127, %c0_128] : memref<1x1x2x14x28xf32, #tpu.memory_space<vmem>>, vector<1x1x1x12x28xf32>
    %90 = vector.shape_cast %89 : vector<1x1x1x12x28xf32> to vector<12x28xf32>
    %91 = arith.truncf %90 : vector<12x28xf32> to vector<12x28xbf16>
    %c0_129 = arith.constant 0 : index
    %c3_130 = arith.constant 3 : index
    %c0_131 = arith.constant 0 : index
    %c0_132 = arith.constant 0 : index
    %92 = vector.load %arg3[%c0_129, %c3_130, %c0_131, %c0_132] : memref<2x5x28x240xbf16, #tpu.memory_space<vmem>>, vector<1x1x28x240xbf16>
    %93 = vector.shape_cast %92 : vector<1x1x28x240xbf16> to vector<28x240xbf16>
    %cst_133 = arith.constant dense<0.000000e+00> : vector<12x240xf32>
    %94 = tpu.matmul %91, %93, %cst_133 {dimension_numbers = #tpu.dot_dimension_numbers<[1], [0], [0], [1], [0, 0, 1, 1], [], []>} : vector<12x28xbf16>, vector<28x240xbf16>, vector<12x240xf32> -> vector<12x240xf32>
    %95 = arith.addf %88, %94 : vector<12x240xf32>
    %c0_134 = arith.constant 0 : index
    %c0_135 = arith.constant 0 : index
    %c1_136 = arith.constant 1 : index
    %c2_137 = arith.constant 2 : index
    %c0_138 = arith.constant 0 : index
    %96 = vector.load %arg1[%c0_134, %c0_135, %c1_136, %c2_137, %c0_138] : memref<1x1x2x14x28xf32, #tpu.memory_space<vmem>>, vector<1x1x1x12x28xf32>
    %97 = vector.shape_cast %96 : vector<1x1x1x12x28xf32> to vector<12x28xf32>
    %98 = arith.truncf %97 : vector<12x28xf32> to vector<12x28xbf16>
    %c0_139 = arith.constant 0 : index
    %c4_140 = arith.constant 4 : index
    %c0_141 = arith.constant 0 : index
    %c0_142 = arith.constant 0 : index
    %99 = vector.load %arg3[%c0_139, %c4_140, %c0_141, %c0_142] : memref<2x5x28x240xbf16, #tpu.memory_space<vmem>>, vector<1x1x28x240xbf16>
    %100 = vector.shape_cast %99 : vector<1x1x28x240xbf16> to vector<28x240xbf16>
    %cst_143 = arith.constant dense<0.000000e+00> : vector<12x240xf32>
    %101 = tpu.matmul %98, %100, %cst_143 {dimension_numbers = #tpu.dot_dimension_numbers<[1], [0], [0], [1], [0, 0, 1, 1], [], []>} : vector<12x28xbf16>, vector<28x240xbf16>, vector<12x240xf32> -> vector<12x240xf32>
    %102 = arith.addf %95, %101 : vector<12x240xf32>
    %103 = arith.maximumf %68, %102 : vector<12x240xf32>
    %c0_144 = arith.constant 0 : index
    %c0_145 = arith.constant 0 : index
    %c1_146 = arith.constant 1 : index
    %c0_147 = arith.constant 0 : index
    %c0_148 = arith.constant 0 : index
    %104 = vector.load %arg1[%c0_144, %c0_145, %c1_146, %c0_147, %c0_148] : memref<1x1x2x14x28xf32, #tpu.memory_space<vmem>>, vector<1x1x1x12x28xf32>
    %105 = vector.shape_cast %104 : vector<1x1x1x12x28xf32> to vector<12x28xf32>
    %106 = arith.truncf %105 : vector<12x28xf32> to vector<12x28xbf16>
    %c1_149 = arith.constant 1 : index
    %c0_150 = arith.constant 0 : index
    %c0_151 = arith.constant 0 : index
    %c0_152 = arith.constant 0 : index
    %107 = vector.load %arg3[%c1_149, %c0_150, %c0_151, %c0_152] : memref<2x5x28x240xbf16, #tpu.memory_space<vmem>>, vector<1x1x28x240xbf16>
    %108 = vector.shape_cast %107 : vector<1x1x28x240xbf16> to vector<28x240xbf16>
    %cst_153 = arith.constant dense<0.000000e+00> : vector<12x240xf32>
    %109 = tpu.matmul %106, %108, %cst_153 {dimension_numbers = #tpu.dot_dimension_numbers<[1], [0], [0], [1], [0, 0, 1, 1], [], []>} : vector<12x28xbf16>, vector<28x240xbf16>, vector<12x240xf32> -> vector<12x240xf32>
    %c0_154 = arith.constant 0 : index
    %c0_155 = arith.constant 0 : index
    %c0_156 = arith.constant 0 : index
    %c1_157 = arith.constant 1 : index
    %c0_158 = arith.constant 0 : index
    %110 = vector.load %arg1[%c0_154, %c0_155, %c0_156, %c1_157, %c0_158] : memref<1x1x2x14x28xf32, #tpu.memory_space<vmem>>, vector<1x1x1x12x28xf32>
    %111 = vector.shape_cast %110 : vector<1x1x1x12x28xf32> to vector<12x28xf32>
    %112 = arith.truncf %111 : vector<12x28xf32> to vector<12x28xbf16>
    %c1_159 = arith.constant 1 : index
    %c1_160 = arith.constant 1 : index
    %c0_161 = arith.constant 0 : index
    %c0_162 = arith.constant 0 : index
    %113 = vector.load %arg3[%c1_159, %c1_160, %c0_161, %c0_162] : memref<2x5x28x240xbf16, #tpu.memory_space<vmem>>, vector<1x1x28x240xbf16>
    %114 = vector.shape_cast %113 : vector<1x1x28x240xbf16> to vector<28x240xbf16>
    %cst_163 = arith.constant dense<0.000000e+00> : vector<12x240xf32>
    %115 = tpu.matmul %112, %114, %cst_163 {dimension_numbers = #tpu.dot_dimension_numbers<[1], [0], [0], [1], [0, 0, 1, 1], [], []>} : vector<12x28xbf16>, vector<28x240xbf16>, vector<12x240xf32> -> vector<12x240xf32>
    %116 = arith.addf %109, %115 : vector<12x240xf32>
    %c0_164 = arith.constant 0 : index
    %c0_165 = arith.constant 0 : index
    %c1_166 = arith.constant 1 : index
    %c1_167 = arith.constant 1 : index
    %c0_168 = arith.constant 0 : index
    %117 = vector.load %arg1[%c0_164, %c0_165, %c1_166, %c1_167, %c0_168] : memref<1x1x2x14x28xf32, #tpu.memory_space<vmem>>, vector<1x1x1x12x28xf32>
    %118 = vector.shape_cast %117 : vector<1x1x1x12x28xf32> to vector<12x28xf32>
    %119 = arith.truncf %118 : vector<12x28xf32> to vector<12x28xbf16>
    %c1_169 = arith.constant 1 : index
    %c2_170 = arith.constant 2 : index
    %c0_171 = arith.constant 0 : index
    %c0_172 = arith.constant 0 : index
    %120 = vector.load %arg3[%c1_169, %c2_170, %c0_171, %c0_172] : memref<2x5x28x240xbf16, #tpu.memory_space<vmem>>, vector<1x1x28x240xbf16>
    %121 = vector.shape_cast %120 : vector<1x1x28x240xbf16> to vector<28x240xbf16>
    %cst_173 = arith.constant dense<0.000000e+00> : vector<12x240xf32>
    %122 = tpu.matmul %119, %121, %cst_173 {dimension_numbers = #tpu.dot_dimension_numbers<[1], [0], [0], [1], [0, 0, 1, 1], [], []>} : vector<12x28xbf16>, vector<28x240xbf16>, vector<12x240xf32> -> vector<12x240xf32>
    %123 = arith.addf %116, %122 : vector<12x240xf32>
    %c0_174 = arith.constant 0 : index
    %c0_175 = arith.constant 0 : index
    %c0_176 = arith.constant 0 : index
    %c2_177 = arith.constant 2 : index
    %c0_178 = arith.constant 0 : index
    %124 = vector.load %arg1[%c0_174, %c0_175, %c0_176, %c2_177, %c0_178] : memref<1x1x2x14x28xf32, #tpu.memory_space<vmem>>, vector<1x1x1x12x28xf32>
    %125 = vector.shape_cast %124 : vector<1x1x1x12x28xf32> to vector<12x28xf32>
    %126 = arith.truncf %125 : vector<12x28xf32> to vector<12x28xbf16>
    %c1_179 = arith.constant 1 : index
    %c3_180 = arith.constant 3 : index
    %c0_181 = arith.constant 0 : index
    %c0_182 = arith.constant 0 : index
    %127 = vector.load %arg3[%c1_179, %c3_180, %c0_181, %c0_182] : memref<2x5x28x240xbf16, #tpu.memory_space<vmem>>, vector<1x1x28x240xbf16>
    %128 = vector.shape_cast %127 : vector<1x1x28x240xbf16> to vector<28x240xbf16>
    %cst_183 = arith.constant dense<0.000000e+00> : vector<12x240xf32>
    %129 = tpu.matmul %126, %128, %cst_183 {dimension_numbers = #tpu.dot_dimension_numbers<[1], [0], [0], [1], [0, 0, 1, 1], [], []>} : vector<12x28xbf16>, vector<28x240xbf16>, vector<12x240xf32> -> vector<12x240xf32>
    %130 = arith.addf %123, %129 : vector<12x240xf32>
    %c0_184 = arith.constant 0 : index
    %c0_185 = arith.constant 0 : index
    %c1_186 = arith.constant 1 : index
    %c2_187 = arith.constant 2 : index
    %c0_188 = arith.constant 0 : index
    %131 = vector.load %arg1[%c0_184, %c0_185, %c1_186, %c2_187, %c0_188] : memref<1x1x2x14x28xf32, #tpu.memory_space<vmem>>, vector<1x1x1x12x28xf32>
    %132 = vector.shape_cast %131 : vector<1x1x1x12x28xf32> to vector<12x28xf32>
    %133 = arith.truncf %132 : vector<12x28xf32> to vector<12x28xbf16>
    %c1_189 = arith.constant 1 : index
    %c4_190 = arith.constant 4 : index
    %c0_191 = arith.constant 0 : index
    %c0_192 = arith.constant 0 : index
    %134 = vector.load %arg3[%c1_189, %c4_190, %c0_191, %c0_192] : memref<2x5x28x240xbf16, #tpu.memory_space<vmem>>, vector<1x1x28x240xbf16>
    %135 = vector.shape_cast %134 : vector<1x1x28x240xbf16> to vector<28x240xbf16>
    %cst_193 = arith.constant dense<0.000000e+00> : vector<12x240xf32>
    %136 = tpu.matmul %133, %135, %cst_193 {dimension_numbers = #tpu.dot_dimension_numbers<[1], [0], [0], [1], [0, 0, 1, 1], [], []>} : vector<12x28xbf16>, vector<28x240xbf16>, vector<12x240xf32> -> vector<12x240xf32>
    %137 = arith.addf %130, %136 : vector<12x240xf32>
    %138 = arith.maximumf %103, %137 : vector<12x240xf32>
    %c0_194 = arith.constant 0 : index
    %c0_195 = arith.constant 0 : index
    %139 = vector.load %arg4[%c0_194, %c0_195] : memref<1x240xf32, #tpu.memory_space<vmem>>, vector<1x240xf32>
    %140 = vector.broadcast %139 : vector<1x240xf32> to vector<12x240xf32>
    %141 = arith.addf %138, %140 : vector<12x240xf32>
    %cst_196 = arith.constant 0.000000e+00 : f32
    %142 = vector.broadcast %cst_196 : f32 to vector<12x240xf32>
    %143 = arith.maximumf %141, %142 : vector<12x240xf32>
    %144 = vector.extract_strided_slice %143 {offsets = [0, 0], sizes = [8, 240], strides = [1, 1]} : vector<12x240xf32> to vector<8x240xf32>
    %145 = arith.truncf %144 : vector<8x240xf32> to vector<8x240xbf16>
    %c0_197 = arith.constant 0 : index
    %c0_198 = arith.constant 0 : index
    %c0_199 = arith.constant 0 : index
    %c0_200 = arith.constant 0 : index
    %146 = vector.load %arg5[%c0_197, %c0_198, %c0_199, %c0_200] : memref<2x5x240x200xbf16, #tpu.memory_space<vmem>>, vector<1x1x240x200xbf16>
    %147 = vector.shape_cast %146 : vector<1x1x240x200xbf16> to vector<240x200xbf16>
    %cst_201 = arith.constant dense<0.000000e+00> : vector<8x200xf32>
    %148 = tpu.matmul %145, %147, %cst_201 {dimension_numbers = #tpu.dot_dimension_numbers<[1], [0], [0], [1], [0, 0, 1, 1], [], []>} : vector<8x240xbf16>, vector<240x200xbf16>, vector<8x200xf32> -> vector<8x200xf32>
    %149 = vector.extract_strided_slice %143 {offsets = [1, 0], sizes = [8, 240], strides = [1, 1]} : vector<12x240xf32> to vector<8x240xf32>
    %150 = arith.truncf %149 : vector<8x240xf32> to vector<8x240xbf16>
    %c0_202 = arith.constant 0 : index
    %c1_203 = arith.constant 1 : index
    %c0_204 = arith.constant 0 : index
    %c0_205 = arith.constant 0 : index
    %151 = vector.load %arg5[%c0_202, %c1_203, %c0_204, %c0_205] : memref<2x5x240x200xbf16, #tpu.memory_space<vmem>>, vector<1x1x240x200xbf16>
    %152 = vector.shape_cast %151 : vector<1x1x240x200xbf16> to vector<240x200xbf16>
    %cst_206 = arith.constant dense<0.000000e+00> : vector<8x200xf32>
    %153 = tpu.matmul %150, %152, %cst_206 {dimension_numbers = #tpu.dot_dimension_numbers<[1], [0], [0], [1], [0, 0, 1, 1], [], []>} : vector<8x240xbf16>, vector<240x200xbf16>, vector<8x200xf32> -> vector<8x200xf32>
    %154 = arith.addf %148, %153 : vector<8x200xf32>
    %155 = vector.extract_strided_slice %143 {offsets = [2, 0], sizes = [8, 240], strides = [1, 1]} : vector<12x240xf32> to vector<8x240xf32>
    %156 = arith.truncf %155 : vector<8x240xf32> to vector<8x240xbf16>
    %c0_207 = arith.constant 0 : index
    %c2_208 = arith.constant 2 : index
    %c0_209 = arith.constant 0 : index
    %c0_210 = arith.constant 0 : index
    %157 = vector.load %arg5[%c0_207, %c2_208, %c0_209, %c0_210] : memref<2x5x240x200xbf16, #tpu.memory_space<vmem>>, vector<1x1x240x200xbf16>
    %158 = vector.shape_cast %157 : vector<1x1x240x200xbf16> to vector<240x200xbf16>
    %cst_211 = arith.constant dense<0.000000e+00> : vector<8x200xf32>
    %159 = tpu.matmul %156, %158, %cst_211 {dimension_numbers = #tpu.dot_dimension_numbers<[1], [0], [0], [1], [0, 0, 1, 1], [], []>} : vector<8x240xbf16>, vector<240x200xbf16>, vector<8x200xf32> -> vector<8x200xf32>
    %160 = arith.addf %154, %159 : vector<8x200xf32>
    %161 = vector.extract_strided_slice %143 {offsets = [3, 0], sizes = [8, 240], strides = [1, 1]} : vector<12x240xf32> to vector<8x240xf32>
    %162 = arith.truncf %161 : vector<8x240xf32> to vector<8x240xbf16>
    %c0_212 = arith.constant 0 : index
    %c3_213 = arith.constant 3 : index
    %c0_214 = arith.constant 0 : index
    %c0_215 = arith.constant 0 : index
    %163 = vector.load %arg5[%c0_212, %c3_213, %c0_214, %c0_215] : memref<2x5x240x200xbf16, #tpu.memory_space<vmem>>, vector<1x1x240x200xbf16>
    %164 = vector.shape_cast %163 : vector<1x1x240x200xbf16> to vector<240x200xbf16>
    %cst_216 = arith.constant dense<0.000000e+00> : vector<8x200xf32>
    %165 = tpu.matmul %162, %164, %cst_216 {dimension_numbers = #tpu.dot_dimension_numbers<[1], [0], [0], [1], [0, 0, 1, 1], [], []>} : vector<8x240xbf16>, vector<240x200xbf16>, vector<8x200xf32> -> vector<8x200xf32>
    %166 = arith.addf %160, %165 : vector<8x200xf32>
    %167 = vector.extract_strided_slice %143 {offsets = [4, 0], sizes = [8, 240], strides = [1, 1]} : vector<12x240xf32> to vector<8x240xf32>
    %168 = arith.truncf %167 : vector<8x240xf32> to vector<8x240xbf16>
    %c0_217 = arith.constant 0 : index
    %c4_218 = arith.constant 4 : index
    %c0_219 = arith.constant 0 : index
    %c0_220 = arith.constant 0 : index
    %169 = vector.load %arg5[%c0_217, %c4_218, %c0_219, %c0_220] : memref<2x5x240x200xbf16, #tpu.memory_space<vmem>>, vector<1x1x240x200xbf16>
    %170 = vector.shape_cast %169 : vector<1x1x240x200xbf16> to vector<240x200xbf16>
    %cst_221 = arith.constant dense<0.000000e+00> : vector<8x200xf32>
    %171 = tpu.matmul %168, %170, %cst_221 {dimension_numbers = #tpu.dot_dimension_numbers<[1], [0], [0], [1], [0, 0, 1, 1], [], []>} : vector<8x240xbf16>, vector<240x200xbf16>, vector<8x200xf32> -> vector<8x200xf32>
    %172 = arith.addf %166, %171 : vector<8x200xf32>
    %173 = vector.extract_strided_slice %143 {offsets = [0, 0], sizes = [8, 240], strides = [1, 1]} : vector<12x240xf32> to vector<8x240xf32>
    %174 = arith.truncf %173 : vector<8x240xf32> to vector<8x240xbf16>
    %c1_222 = arith.constant 1 : index
    %c0_223 = arith.constant 0 : index
    %c0_224 = arith.constant 0 : index
    %c0_225 = arith.constant 0 : index
    %175 = vector.load %arg5[%c1_222, %c0_223, %c0_224, %c0_225] : memref<2x5x240x200xbf16, #tpu.memory_space<vmem>>, vector<1x1x240x200xbf16>
    %176 = vector.shape_cast %175 : vector<1x1x240x200xbf16> to vector<240x200xbf16>
    %cst_226 = arith.constant dense<0.000000e+00> : vector<8x200xf32>
    %177 = tpu.matmul %174, %176, %cst_226 {dimension_numbers = #tpu.dot_dimension_numbers<[1], [0], [0], [1], [0, 0, 1, 1], [], []>} : vector<8x240xbf16>, vector<240x200xbf16>, vector<8x200xf32> -> vector<8x200xf32>
    %178 = vector.extract_strided_slice %143 {offsets = [1, 0], sizes = [8, 240], strides = [1, 1]} : vector<12x240xf32> to vector<8x240xf32>
    %179 = arith.truncf %178 : vector<8x240xf32> to vector<8x240xbf16>
    %c1_227 = arith.constant 1 : index
    %c1_228 = arith.constant 1 : index
    %c0_229 = arith.constant 0 : index
    %c0_230 = arith.constant 0 : index
    %180 = vector.load %arg5[%c1_227, %c1_228, %c0_229, %c0_230] : memref<2x5x240x200xbf16, #tpu.memory_space<vmem>>, vector<1x1x240x200xbf16>
    %181 = vector.shape_cast %180 : vector<1x1x240x200xbf16> to vector<240x200xbf16>
    %cst_231 = arith.constant dense<0.000000e+00> : vector<8x200xf32>
    %182 = tpu.matmul %179, %181, %cst_231 {dimension_numbers = #tpu.dot_dimension_numbers<[1], [0], [0], [1], [0, 0, 1, 1], [], []>} : vector<8x240xbf16>, vector<240x200xbf16>, vector<8x200xf32> -> vector<8x200xf32>
    %183 = arith.addf %177, %182 : vector<8x200xf32>
    %184 = vector.extract_strided_slice %143 {offsets = [2, 0], sizes = [8, 240], strides = [1, 1]} : vector<12x240xf32> to vector<8x240xf32>
    %185 = arith.truncf %184 : vector<8x240xf32> to vector<8x240xbf16>
    %c1_232 = arith.constant 1 : index
    %c2_233 = arith.constant 2 : index
    %c0_234 = arith.constant 0 : index
    %c0_235 = arith.constant 0 : index
    %186 = vector.load %arg5[%c1_232, %c2_233, %c0_234, %c0_235] : memref<2x5x240x200xbf16, #tpu.memory_space<vmem>>, vector<1x1x240x200xbf16>
    %187 = vector.shape_cast %186 : vector<1x1x240x200xbf16> to vector<240x200xbf16>
    %cst_236 = arith.constant dense<0.000000e+00> : vector<8x200xf32>
    %188 = tpu.matmul %185, %187, %cst_236 {dimension_numbers = #tpu.dot_dimension_numbers<[1], [0], [0], [1], [0, 0, 1, 1], [], []>} : vector<8x240xbf16>, vector<240x200xbf16>, vector<8x200xf32> -> vector<8x200xf32>
    %189 = arith.addf %183, %188 : vector<8x200xf32>
    %190 = vector.extract_strided_slice %143 {offsets = [3, 0], sizes = [8, 240], strides = [1, 1]} : vector<12x240xf32> to vector<8x240xf32>
    %191 = arith.truncf %190 : vector<8x240xf32> to vector<8x240xbf16>
    %c1_237 = arith.constant 1 : index
    %c3_238 = arith.constant 3 : index
    %c0_239 = arith.constant 0 : index
    %c0_240 = arith.constant 0 : index
    %192 = vector.load %arg5[%c1_237, %c3_238, %c0_239, %c0_240] : memref<2x5x240x200xbf16, #tpu.memory_space<vmem>>, vector<1x1x240x200xbf16>
    %193 = vector.shape_cast %192 : vector<1x1x240x200xbf16> to vector<240x200xbf16>
    %cst_241 = arith.constant dense<0.000000e+00> : vector<8x200xf32>
    %194 = tpu.matmul %191, %193, %cst_241 {dimension_numbers = #tpu.dot_dimension_numbers<[1], [0], [0], [1], [0, 0, 1, 1], [], []>} : vector<8x240xbf16>, vector<240x200xbf16>, vector<8x200xf32> -> vector<8x200xf32>
    %195 = arith.addf %189, %194 : vector<8x200xf32>
    %196 = vector.extract_strided_slice %143 {offsets = [4, 0], sizes = [8, 240], strides = [1, 1]} : vector<12x240xf32> to vector<8x240xf32>
    %197 = arith.truncf %196 : vector<8x240xf32> to vector<8x240xbf16>
    %c1_242 = arith.constant 1 : index
    %c4_243 = arith.constant 4 : index
    %c0_244 = arith.constant 0 : index
    %c0_245 = arith.constant 0 : index
    %198 = vector.load %arg5[%c1_242, %c4_243, %c0_244, %c0_245] : memref<2x5x240x200xbf16, #tpu.memory_space<vmem>>, vector<1x1x240x200xbf16>
    %199 = vector.shape_cast %198 : vector<1x1x240x200xbf16> to vector<240x200xbf16>
    %cst_246 = arith.constant dense<0.000000e+00> : vector<8x200xf32>
    %200 = tpu.matmul %197, %199, %cst_246 {dimension_numbers = #tpu.dot_dimension_numbers<[1], [0], [0], [1], [0, 0, 1, 1], [], []>} : vector<8x240xbf16>, vector<240x200xbf16>, vector<8x200xf32> -> vector<8x200xf32>
    %201 = arith.addf %195, %200 : vector<8x200xf32>
    %202 = arith.maximumf %172, %201 : vector<8x200xf32>
    %c0_247 = arith.constant 0 : index
    %c0_248 = arith.constant 0 : index
    %203 = vector.load %arg6[%c0_247, %c0_248] : memref<1x200xf32, #tpu.memory_space<vmem>>, vector<1x200xf32>
    %204 = vector.broadcast %203 : vector<1x200xf32> to vector<8x200xf32>
    %205 = arith.addf %202, %204 : vector<8x200xf32>
    %cst_249 = arith.constant 0.000000e+00 : f32
    %206 = vector.broadcast %cst_249 : f32 to vector<8x200xf32>
    %207 = arith.maximumf %205, %206 : vector<8x200xf32>
    %208 = vector.extract_strided_slice %207 {offsets = [0, 0], sizes = [1, 200], strides = [1, 1]} : vector<8x200xf32> to vector<1x200xf32>
    %209 = vector.extract_strided_slice %207 {offsets = [1, 0], sizes = [1, 200], strides = [1, 1]} : vector<8x200xf32> to vector<1x200xf32>
    %210 = arith.maximumf %208, %209 : vector<1x200xf32>
    %211 = arith.truncf %210 : vector<1x200xf32> to vector<1x200xbf16>
    %c0_250 = arith.constant 0 : index
    %c0_251 = arith.constant 0 : index
    %c0_252 = arith.constant 0 : index
    %212 = vector.load %arg7[%c0_250, %c0_251, %c0_252] : memref<4x200x200xbf16, #tpu.memory_space<vmem>>, vector<1x200x200xbf16>
    %213 = vector.shape_cast %212 : vector<1x200x200xbf16> to vector<200x200xbf16>
    %cst_253 = arith.constant dense<0.000000e+00> : vector<1x200xf32>
    %214 = tpu.matmul %211, %213, %cst_253 {dimension_numbers = #tpu.dot_dimension_numbers<[1], [0], [0], [1], [0, 0, 1, 1], [], []>} : vector<1x200xbf16>, vector<200x200xbf16>, vector<1x200xf32> -> vector<1x200xf32>
    %215 = vector.extract_strided_slice %207 {offsets = [2, 0], sizes = [1, 200], strides = [1, 1]} : vector<8x200xf32> to vector<1x200xf32>
    %216 = vector.extract_strided_slice %207 {offsets = [3, 0], sizes = [1, 200], strides = [1, 1]} : vector<8x200xf32> to vector<1x200xf32>
    %217 = arith.maximumf %215, %216 : vector<1x200xf32>
    %218 = arith.truncf %217 : vector<1x200xf32> to vector<1x200xbf16>
    %c1_254 = arith.constant 1 : index
    %c0_255 = arith.constant 0 : index
    %c0_256 = arith.constant 0 : index
    %219 = vector.load %arg7[%c1_254, %c0_255, %c0_256] : memref<4x200x200xbf16, #tpu.memory_space<vmem>>, vector<1x200x200xbf16>
    %220 = vector.shape_cast %219 : vector<1x200x200xbf16> to vector<200x200xbf16>
    %cst_257 = arith.constant dense<0.000000e+00> : vector<1x200xf32>
    %221 = tpu.matmul %218, %220, %cst_257 {dimension_numbers = #tpu.dot_dimension_numbers<[1], [0], [0], [1], [0, 0, 1, 1], [], []>} : vector<1x200xbf16>, vector<200x200xbf16>, vector<1x200xf32> -> vector<1x200xf32>
    %222 = arith.addf %214, %221 : vector<1x200xf32>
    %223 = vector.extract_strided_slice %207 {offsets = [4, 0], sizes = [1, 200], strides = [1, 1]} : vector<8x200xf32> to vector<1x200xf32>
    %224 = vector.extract_strided_slice %207 {offsets = [5, 0], sizes = [1, 200], strides = [1, 1]} : vector<8x200xf32> to vector<1x200xf32>
    %225 = arith.maximumf %223, %224 : vector<1x200xf32>
    %226 = arith.truncf %225 : vector<1x200xf32> to vector<1x200xbf16>
    %c2_258 = arith.constant 2 : index
    %c0_259 = arith.constant 0 : index
    %c0_260 = arith.constant 0 : index
    %227 = vector.load %arg7[%c2_258, %c0_259, %c0_260] : memref<4x200x200xbf16, #tpu.memory_space<vmem>>, vector<1x200x200xbf16>
    %228 = vector.shape_cast %227 : vector<1x200x200xbf16> to vector<200x200xbf16>
    %cst_261 = arith.constant dense<0.000000e+00> : vector<1x200xf32>
    %229 = tpu.matmul %226, %228, %cst_261 {dimension_numbers = #tpu.dot_dimension_numbers<[1], [0], [0], [1], [0, 0, 1, 1], [], []>} : vector<1x200xbf16>, vector<200x200xbf16>, vector<1x200xf32> -> vector<1x200xf32>
    %230 = arith.addf %222, %229 : vector<1x200xf32>
    %231 = vector.extract_strided_slice %207 {offsets = [6, 0], sizes = [1, 200], strides = [1, 1]} : vector<8x200xf32> to vector<1x200xf32>
    %232 = vector.extract_strided_slice %207 {offsets = [7, 0], sizes = [1, 200], strides = [1, 1]} : vector<8x200xf32> to vector<1x200xf32>
    %233 = arith.maximumf %231, %232 : vector<1x200xf32>
    %234 = arith.truncf %233 : vector<1x200xf32> to vector<1x200xbf16>
    %c3_262 = arith.constant 3 : index
    %c0_263 = arith.constant 0 : index
    %c0_264 = arith.constant 0 : index
    %235 = vector.load %arg7[%c3_262, %c0_263, %c0_264] : memref<4x200x200xbf16, #tpu.memory_space<vmem>>, vector<1x200x200xbf16>
    %236 = vector.shape_cast %235 : vector<1x200x200xbf16> to vector<200x200xbf16>
    %cst_265 = arith.constant dense<0.000000e+00> : vector<1x200xf32>
    %237 = tpu.matmul %234, %236, %cst_265 {dimension_numbers = #tpu.dot_dimension_numbers<[1], [0], [0], [1], [0, 0, 1, 1], [], []>} : vector<1x200xbf16>, vector<200x200xbf16>, vector<1x200xf32> -> vector<1x200xf32>
    %238 = arith.addf %230, %237 : vector<1x200xf32>
    %c0_266 = arith.constant 0 : index
    %c0_267 = arith.constant 0 : index
    %239 = vector.load %arg8[%c0_266, %c0_267] : memref<1x200xf32, #tpu.memory_space<vmem>>, vector<1x200xf32>
    %240 = arith.addf %238, %239 : vector<1x200xf32>
    %cst_268 = arith.constant 0.000000e+00 : f32
    %241 = vector.broadcast %cst_268 : f32 to vector<1x200xf32>
    %242 = arith.maximumf %240, %241 : vector<1x200xf32>
    %243 = arith.truncf %242 : vector<1x200xf32> to vector<1x200xbf16>
    %c0_269 = arith.constant 0 : index
    %c0_270 = arith.constant 0 : index
    %244 = vector.load %arg9[%c0_269, %c0_270] : memref<200x100xbf16, #tpu.memory_space<vmem>>, vector<200x100xbf16>
    %cst_271 = arith.constant dense<0.000000e+00> : vector<1x100xf32>
    %245 = tpu.matmul %243, %244, %cst_271 {dimension_numbers = #tpu.dot_dimension_numbers<[1], [0], [0], [1], [0, 0, 1, 1], [], []>} : vector<1x200xbf16>, vector<200x100xbf16>, vector<1x100xf32> -> vector<1x100xf32>
    %c0_272 = arith.constant 0 : index
    %c0_273 = arith.constant 0 : index
    %246 = vector.load %arg10[%c0_272, %c0_273] : memref<1x100xf32, #tpu.memory_space<vmem>>, vector<1x100xf32>
    %247 = arith.addf %245, %246 : vector<1x100xf32>
    %cst_274 = arith.constant 0.000000e+00 : f32
    %248 = vector.broadcast %cst_274 : f32 to vector<1x100xf32>
    %249 = arith.maximumf %247, %248 : vector<1x100xf32>
    %250 = arith.truncf %249 : vector<1x100xf32> to vector<1x100xbf16>
    %c0_275 = arith.constant 0 : index
    %c0_276 = arith.constant 0 : index
    %251 = vector.load %arg11[%c0_275, %c0_276] : memref<100x200xbf16, #tpu.memory_space<vmem>>, vector<100x200xbf16>
    %cst_277 = arith.constant dense<0.000000e+00> : vector<1x200xf32>
    %252 = tpu.matmul %250, %251, %cst_277 {dimension_numbers = #tpu.dot_dimension_numbers<[1], [0], [0], [1], [0, 0, 1, 1], [], []>} : vector<1x100xbf16>, vector<100x200xbf16>, vector<1x200xf32> -> vector<1x200xf32>
    %c0_278 = arith.constant 0 : index
    %c0_279 = arith.constant 0 : index
    %253 = vector.load %arg12[%c0_278, %c0_279] : memref<1x200xf32, #tpu.memory_space<vmem>>, vector<1x200xf32>
    %254 = arith.addf %252, %253 : vector<1x200xf32>
    %cst_280 = arith.constant 0.000000e+00 : f32
    %255 = vector.broadcast %cst_280 : f32 to vector<1x200xf32>
    %256 = arith.maximumf %254, %255 : vector<1x200xf32>
    %257 = arith.truncf %256 : vector<1x200xf32> to vector<1x200xbf16>
    %c0_281 = arith.constant 0 : index
    %c0_282 = arith.constant 0 : index
    %258 = vector.load %arg13[%c0_281, %c0_282] : memref<200x14xbf16, #tpu.memory_space<vmem>>, vector<200x14xbf16>
    %cst_283 = arith.constant dense<0.000000e+00> : vector<1x14xf32>
    %259 = tpu.matmul %257, %258, %cst_283 {dimension_numbers = #tpu.dot_dimension_numbers<[1], [0], [0], [1], [0, 0, 1, 1], [], []>} : vector<1x200xbf16>, vector<200x14xbf16>, vector<1x14xf32> -> vector<1x14xf32>
    %c0_284 = arith.constant 0 : index
    %c0_285 = arith.constant 0 : index
    %260 = vector.load %arg14[%c0_284, %c0_285] : memref<1x14xf32, #tpu.memory_space<vmem>>, vector<1x14xf32>
    %261 = arith.addf %259, %260 : vector<1x14xf32>
    %cst_286 = arith.constant 0.000000e+00 : f32
    %262 = vector.broadcast %cst_286 : f32 to vector<1x14xf32>
    %263 = arith.maximumf %261, %262 : vector<1x14xf32>
    %264 = arith.truncf %263 : vector<1x14xf32> to vector<1x14xbf16>
    %c0_287 = arith.constant 0 : index
    %c0_288 = arith.constant 0 : index
    %265 = vector.load %arg15[%c0_287, %c0_288] : memref<14x7xbf16, #tpu.memory_space<vmem>>, vector<14x7xbf16>
    %cst_289 = arith.constant dense<0.000000e+00> : vector<1x7xf32>
    %266 = tpu.matmul %264, %265, %cst_289 {dimension_numbers = #tpu.dot_dimension_numbers<[1], [0], [0], [1], [0, 0, 1, 1], [], []>} : vector<1x14xbf16>, vector<14x7xbf16>, vector<1x7xf32> -> vector<1x7xf32>
    %c0_290 = arith.constant 0 : index
    %c0_291 = arith.constant 0 : index
    %267 = vector.load %arg16[%c0_290, %c0_291] : memref<1x7xf32, #tpu.memory_space<vmem>>, vector<1x7xf32>
    %268 = arith.addf %266, %267 : vector<1x7xf32>
    %cst_292 = arith.constant 0.000000e+00 : f32
    %269 = vector.broadcast %cst_292 : f32 to vector<1x7xf32>
    %270 = arith.maximumf %268, %269 : vector<1x7xf32>
    %271 = arith.truncf %270 : vector<1x7xf32> to vector<1x7xbf16>
    %c0_293 = arith.constant 0 : index
    %c0_294 = arith.constant 0 : index
    %272 = vector.load %arg17[%c0_293, %c0_294] : memref<7x7xbf16, #tpu.memory_space<vmem>>, vector<7x7xbf16>
    %cst_295 = arith.constant dense<0.000000e+00> : vector<1x7xf32>
    %273 = tpu.matmul %271, %272, %cst_295 {dimension_numbers = #tpu.dot_dimension_numbers<[1], [0], [0], [1], [0, 0, 1, 1], [], []>} : vector<1x7xbf16>, vector<7x7xbf16>, vector<1x7xf32> -> vector<1x7xf32>
    %c0_296 = arith.constant 0 : index
    %c0_297 = arith.constant 0 : index
    %274 = vector.load %arg18[%c0_296, %c0_297] : memref<1x7xf32, #tpu.memory_space<vmem>>, vector<1x7xf32>
    %275 = arith.addf %273, %274 : vector<1x7xf32>
    %cst_298 = arith.constant 1.000000e+03 : f32
    %276 = vector.broadcast %cst_298 : f32 to vector<1x7xf32>
    %277 = arith.mulf %275, %276 : vector<1x7xf32>
    %278 = vector.extract_strided_slice %277 {offsets = [0, 0], sizes = [1, 1], strides = [1, 1]} : vector<1x7xf32> to vector<1x1xf32>
    %279 = vector.extract_strided_slice %277 {offsets = [0, 1], sizes = [1, 5], strides = [1, 1]} : vector<1x7xf32> to vector<1x5xf32>
    %c0_299 = arith.constant 0 : index
    %c0_300 = arith.constant 0 : index
    %c0_301 = arith.constant 0 : index
    %280 = vector.load %arg2[%c0_299, %c0_300, %c0_301] : memref<1x1x1xf32, #tpu.memory_space<vmem>>, vector<1x1x1xf32>
    %281 = vector.shape_cast %280 : vector<1x1x1xf32> to vector<1x1xf32>
    %c0_302 = arith.constant 0 : index
    %c0_303 = arith.constant 0 : index
    %282 = vector.load %arg22[%c0_302, %c0_303] : memref<5x101xf32, #tpu.memory_space<vmem>>, vector<5x101xf32>
    %cst_304 = arith.constant dense<0.000000e+00> : vector<1x101xf32>
    %283 = tpu.matmul %279, %282, %cst_304 {dimension_numbers = #tpu.dot_dimension_numbers<[1], [0], [0], [1], [0, 0, 1, 1], [], []>} : vector<1x5xf32>, vector<5x101xf32>, vector<1x101xf32> -> vector<1x101xf32>
    %c0_305 = arith.constant 0 : index
    %c0_306 = arith.constant 0 : index
    %284 = vector.load %arg19[%c0_305, %c0_306] : memref<1x101xf32, #tpu.memory_space<vmem>>, vector<1x101xf32>
    %285 = vector.broadcast %281 : vector<1x1xf32> to vector<1x101xf32>
    %286 = arith.mulf %285, %284 : vector<1x101xf32>
    %c0_307 = arith.constant 0 : index
    %c0_308 = arith.constant 0 : index
    %287 = vector.load %arg20[%c0_307, %c0_308] : memref<1x101xf32, #tpu.memory_space<vmem>>, vector<1x101xf32>
    %288 = arith.addf %286, %287 : vector<1x101xf32>
    %c0_309 = arith.constant 0 : index
    %c0_310 = arith.constant 0 : index
    %289 = vector.load %arg21[%c0_309, %c0_310] : memref<1x101xf32, #tpu.memory_space<vmem>>, vector<1x101xf32>
    %290 = vector.broadcast %278 : vector<1x1xf32> to vector<1x101xf32>
    %291 = arith.mulf %290, %289 : vector<1x101xf32>
    %292 = arith.addf %288, %291 : vector<1x101xf32>
    %293 = arith.subf %278, %281 : vector<1x1xf32>
    %294 = vector.broadcast %293 : vector<1x1xf32> to vector<1x101xf32>
    %295 = arith.mulf %294, %283 : vector<1x101xf32>
    %296 = arith.addf %292, %295 : vector<1x101xf32>
    %c0_311 = arith.constant 0 : index
    %c0_312 = arith.constant 0 : index
    %c0_313 = arith.constant 0 : index
    %297 = vector.load %arg23[%c0_311, %c0_312, %c0_313] : memref<1x1x101xf32, #tpu.memory_space<vmem>>, vector<1x1x101xf32>
    %298 = vector.shape_cast %297 : vector<1x1x101xf32> to vector<1x101xf32>
    %299 = vector.shape_cast %296 : vector<1x101xf32> to vector<1x1x101xf32>
    tpu.vector_store %arg23[%c0_311, %c0_312, %c0_313], %299 {strides = array<i32>} : memref<1x1x101xf32, #tpu.memory_space<vmem>>, vector<1x1x101xf32>,
    return
  }
  func.func @transform_0(%arg0: i32) -> (i32, i32, i32, i32, i32) {
    %c0_i32 = arith.constant 0 : i32
    %c0_i32_0 = arith.constant 0 : i32
    %c0_i32_1 = arith.constant 0 : i32
    %c0_i32_2 = arith.constant 0 : i32
    %c0_i32_3 = arith.constant 0 : i32
    return %arg0, %c0_i32, %c0_i32_0, %c0_i32_1, %c0_i32_2 : i32, i32, i32, i32, i32
  }
  func.func @transform_1(%arg0: i32) -> (i32, i32, i32) {
    %c0_i32 = arith.constant 0 : i32
    %c0_i32_0 = arith.constant 0 : i32
    %c0_i32_1 = arith.constant 0 : i32
    return %arg0, %c0_i32, %c0_i32_0 : i32, i32, i32
  }
  func.func @transform_2(%arg0: i32) -> (i32, i32, i32, i32) {
    %c0_i32 = arith.constant 0 : i32
    %c0_i32_0 = arith.constant 0 : i32
    %c0_i32_1 = arith.constant 0 : i32
    %c0_i32_2 = arith.constant 0 : i32
    %c0_i32_3 = arith.constant 0 : i32
    return %c0_i32, %c0_i32_0, %c0_i32_1, %c0_i32_2 : i32, i32, i32, i32
  }
  func.func @transform_3(%arg0: i32) -> (i32, i32) {
    %c0_i32 = arith.constant 0 : i32
    %c0_i32_0 = arith.constant 0 : i32
    %c0_i32_1 = arith.constant 0 : i32
    return %c0_i32, %c0_i32_0 : i32, i32
  }
  func.func @transform_4(%arg0: i32) -> (i32, i32, i32, i32) {
    %c0_i32 = arith.constant 0 : i32
    %c0_i32_0 = arith.constant 0 : i32
    %c0_i32_1 = arith.constant 0 : i32
    %c0_i32_2 = arith.constant 0 : i32
    %c0_i32_3 = arith.constant 0 : i32
    return %c0_i32, %c0_i32_0, %c0_i32_1, %c0_i32_2 : i32, i32, i32, i32
  }
  func.func @transform_5(%arg0: i32) -> (i32, i32) {
    %c0_i32 = arith.constant 0 : i32
    %c0_i32_0 = arith.constant 0 : i32
    %c0_i32_1 = arith.constant 0 : i32
    return %c0_i32, %c0_i32_0 : i32, i32
  }
  func.func @transform_6(%arg0: i32) -> (i32, i32, i32) {
    %c0_i32 = arith.constant 0 : i32
    %c0_i32_0 = arith.constant 0 : i32
    %c0_i32_1 = arith.constant 0 : i32
    %c0_i32_2 = arith.constant 0 : i32
    return %c0_i32, %c0_i32_0, %c0_i32_1 : i32, i32, i32
  }
  func.func @transform_7(%arg0: i32) -> (i32, i32) {
    %c0_i32 = arith.constant 0 : i32
    %c0_i32_0 = arith.constant 0 : i32
    %c0_i32_1 = arith.constant 0 : i32
    return %c0_i32, %c0_i32_0 : i32, i32
  }
  func.func @transform_8(%arg0: i32) -> (i32, i32) {
    %c0_i32 = arith.constant 0 : i32
    %c0_i32_0 = arith.constant 0 : i32
    %c0_i32_1 = arith.constant 0 : i32
    return %c0_i32, %c0_i32_0 : i32, i32
  }
  func.func @transform_9(%arg0: i32) -> (i32, i32) {
    %c0_i32 = arith.constant 0 : i32
    %c0_i32_0 = arith.constant 0 : i32
    %c0_i32_1 = arith.constant 0 : i32
    return %c0_i32, %c0_i32_0 : i32, i32
  }
  func.func @transform_10(%arg0: i32) -> (i32, i32) {
    %c0_i32 = arith.constant 0 : i32
    %c0_i32_0 = arith.constant 0 : i32
    %c0_i32_1 = arith.constant 0 : i32
    return %c0_i32, %c0_i32_0 : i32, i32
  }
  func.func @transform_11(%arg0: i32) -> (i32, i32) {
    %c0_i32 = arith.constant 0 : i32
    %c0_i32_0 = arith.constant 0 : i32
    %c0_i32_1 = arith.constant 0 : i32
    return %c0_i32, %c0_i32_0 : i32, i32
  }
  func.func @transform_12(%arg0: i32) -> (i32, i32) {
    %c0_i32 = arith.constant 0 : i32
    %c0_i32_0 = arith.constant 0 : i32
    %c0_i32_1 = arith.constant 0 : i32
    return %c0_i32, %c0_i32_0 : i32, i32
  }
  func.func @transform_13(%arg0: i32) -> (i32, i32) {
    %c0_i32 = arith.constant 0 : i32
    %c0_i32_0 = arith.constant 0 : i32
    %c0_i32_1 = arith.constant 0 : i32
    return %c0_i32, %c0_i32_0 : i32, i32
  }
  func.func @transform_14(%arg0: i32) -> (i32, i32) {
    %c0_i32 = arith.constant 0 : i32
    %c0_i32_0 = arith.constant 0 : i32
    %c0_i32_1 = arith.constant 0 : i32
    return %c0_i32, %c0_i32_0 : i32, i32
  }
  func.func @transform_15(%arg0: i32) -> (i32, i32) {
    %c0_i32 = arith.constant 0 : i32
    %c0_i32_0 = arith.constant 0 : i32
    %c0_i32_1 = arith.constant 0 : i32
    return %c0_i32, %c0_i32_0 : i32, i32
  }
  func.func @transform_16(%arg0: i32) -> (i32, i32) {
    %c0_i32 = arith.constant 0 : i32
    %c0_i32_0 = arith.constant 0 : i32
    %c0_i32_1 = arith.constant 0 : i32
    return %c0_i32, %c0_i32_0 : i32, i32
  }
  func.func @transform_17(%arg0: i32) -> (i32, i32) {
    %c0_i32 = arith.constant 0 : i32
    %c0_i32_0 = arith.constant 0 : i32
    %c0_i32_1 = arith.constant 0 : i32
    return %c0_i32, %c0_i32_0 : i32, i32
  }
  func.func @transform_18(%arg0: i32) -> (i32, i32) {
    %c0_i32 = arith.constant 0 : i32
    %c0_i32_0 = arith.constant 0 : i32
    %c0_i32_1 = arith.constant 0 : i32
    return %c0_i32, %c0_i32_0 : i32, i32
  }
  func.func @transform_19(%arg0: i32) -> (i32, i32) {
    %c0_i32 = arith.constant 0 : i32
    %c0_i32_0 = arith.constant 0 : i32
    %c0_i32_1 = arith.constant 0 : i32
    return %c0_i32, %c0_i32_0 : i32, i32
  }
  func.func @transform_20(%arg0: i32) -> (i32, i32) {
    %c0_i32 = arith.constant 0 : i32
    %c0_i32_0 = arith.constant 0 : i32
    %c0_i32_1 = arith.constant 0 : i32
    return %c0_i32, %c0_i32_0 : i32, i32
  }
  func.func @transform_21(%arg0: i32) -> (i32, i32) {
    %c0_i32 = arith.constant 0 : i32
    %c0_i32_0 = arith.constant 0 : i32
    %c0_i32_1 = arith.constant 0 : i32
    return %c0_i32, %c0_i32_0 : i32, i32
  }
  func.func @transform_22(%arg0: i32) -> (i32, i32, i32) {
    %c0_i32 = arith.constant 0 : i32
    %c0_i32_0 = arith.constant 0 : i32
    %c0_i32_1 = arith.constant 0 : i32
    return %arg0, %c0_i32, %c0_i32_0 : i32, i32, i32
  }
}

</mosaic_0001>

<llo_original>
// kernel: ndp_cnn_forward.1
$region0: #{ndp_cnn_forward.1}
  #allocation0 [shape = 'u32[]', space=smem, size = 0x4, offset = 0x4, fixed_abs, tag = 'smem constant byte address 0x4 - core index']
  #allocation1 [shape = 'u32[144,128]{1,0:T(1,128)}', space=vmem, size = 0x12000, scoped, tag = 'internal scratch']
  %s0 = inlined_call_operand.vmem [shape: f32[2,1,2,14,28], index: 0, kind: input, shape index: {}]
  %s1 = inlined_call_operand.vmem [shape: f32[2,1,1], index: 1, kind: input, shape index: {}]
  %s2 = inlined_call_operand.vmem [shape: bf16[2,5,28,240], index: 2, kind: input, shape index: {}]
  %s3 = inlined_call_operand.vmem [shape: f32[1,240], index: 3, kind: input, shape index: {}]
  %s4 = inlined_call_operand.vmem [shape: bf16[2,5,240,200], index: 4, kind: input, shape index: {}]
  %s5 = inlined_call_operand.vmem [shape: f32[1,200], index: 5, kind: input, shape index: {}]
  %s6 = inlined_call_operand.vmem [shape: bf16[4,200,200], index: 6, kind: input, shape index: {}]
  %s7 = inlined_call_operand.vmem [shape: f32[1,200], index: 7, kind: input, shape index: {}]
  %s8 = inlined_call_operand.vmem [shape: bf16[200,100], index: 8, kind: input, shape index: {}]
  %s9 = inlined_call_operand.vmem [shape: f32[1,100], index: 9, kind: input, shape index: {}]
  %s10 = inlined_call_operand.vmem [shape: bf16[100,200], index: 10, kind: input, shape index: {}]
  %s11 = inlined_call_operand.vmem [shape: f32[1,200], index: 11, kind: input, shape index: {}]
  %s12 = inlined_call_operand.vmem [shape: bf16[200,14], index: 12, kind: input, shape index: {}]
  %s13 = inlined_call_operand.vmem [shape: f32[1,14], index: 13, kind: input, shape index: {}]
  %s14 = inlined_call_operand.vmem [shape: bf16[14,7], index: 14, kind: input, shape index: {}]
  %s15 = inlined_call_operand.vmem [shape: f32[1,7], index: 15, kind: input, shape index: {}]
  %s16 = inlined_call_operand.vmem [shape: bf16[7,7], index: 16, kind: input, shape index: {}]
  %s17 = inlined_call_operand.vmem [shape: f32[1,7], index: 17, kind: input, shape index: {}]
  %s18 = inlined_call_operand.vmem [shape: f32[1,101], index: 18, kind: input, shape index: {}]
  %s19 = inlined_call_operand.vmem [shape: f32[1,101], index: 19, kind: input, shape index: {}]
  %s20 = inlined_call_operand.vmem [shape: f32[1,101], index: 20, kind: input, shape index: {}]
  %s21 = inlined_call_operand.vmem [shape: f32[5,101], index: 21, kind: input, shape index: {}]
  %s22 = inlined_call_operand.hbm [shape: f32[2,1,101], index: 22, kind: output, shape index: {}]
  %s23 = sld [smem:[#allocation0]]
  $region121: #{ndp_cnn_forward.1} parent=0
    _
  %s25 = ssub.s32 1, %s23
  %s26 = scalar_select 0, %s25, %s23
  $region1: #{ndp_cnn_forward.1} parent=0
    #allocation2 [shape = 'u8[1024]{0}', space=vmem, size = 0x400, scoped, tag = 'output window, operand 0']
    #allocation3 [shape = 's32[2]{0}', space=sflag, size = 0x8, scoped, tag = 'scoped memory for ndp_cnn_forward.1']
    %27 = vsyncpa [#allocation3], 0
    %s28 = scalar_lea.sflag [#allocation3], 1
    %29 = vsyncpa %s28, 0
    loop: start=0, step=1, limit=4
    $region2: #{ndp_cnn_forward.1} parent=1 // loop_pre_header
      _
    $region3: #{ndp_cnn_forward.1} parent=1 // loop_header
      %s31 = sphi 0, %s35
      %p32 = scmp.ge.s32.totalorder %s31, 4
      %s41 = sphi 0, %s43
      %s44 = sphi 0, %s41
      %s45 = sphi 0, %s44
      %s61 = sphi 0, %s45
      %s67 = sphi 0, %s69
      %s70 = sphi 0, %s67
      %s71 = sphi 0, %s70
      %s87 = sphi 0, %s71
      %s91 = sphi 0, %s91
      %s93 = sphi 0, %s91
      %s94 = sphi 0, %s93
      %s108 = sphi 0, %s94
      %s112 = sphi 0, %s112
      %s114 = sphi 0, %s112
      %s115 = sphi 0, %s114
      %s129 = sphi 0, %s115
      %s133 = sphi 0, %s133
      %s135 = sphi 0, %s133
      %s136 = sphi 0, %s135
      %s150 = sphi 0, %s136
      %s154 = sphi 0, %s154
      %s156 = sphi 0, %s154
      %s157 = sphi 0, %s156
      %s171 = sphi 0, %s157
      %s175 = sphi 0, %s175
      %s177 = sphi 0, %s175
      %s178 = sphi 0, %s177
      %s192 = sphi 0, %s178
      %s196 = sphi 0, %s196
      %s198 = sphi 0, %s196
      %s199 = sphi 0, %s198
      %s213 = sphi 0, %s199
      %s217 = sphi 0, %s217
      %s219 = sphi 0, %s217
      %s220 = sphi 0, %s219
      %s234 = sphi 0, %s220
      %s238 = sphi 0, %s238
      %s240 = sphi 0, %s238
      %s241 = sphi 0, %s240
      %s255 = sphi 0, %s241
      %s259 = sphi 0, %s259
      %s261 = sphi 0, %s259
      %s262 = sphi 0, %s261
      %s276 = sphi 0, %s262
      %s280 = sphi 0, %s280
      %s282 = sphi 0, %s280
      %s283 = sphi 0, %s282
      %s297 = sphi 0, %s283
      %s301 = sphi 0, %s301
      %s303 = sphi 0, %s301
      %s304 = sphi 0, %s303
      %s318 = sphi 0, %s304
      %s322 = sphi 0, %s322
      %s324 = sphi 0, %s322
      %s325 = sphi 0, %s324
      %s339 = sphi 0, %s325
      %s343 = sphi 0, %s343
      %s345 = sphi 0, %s343
      %s346 = sphi 0, %s345
      %s360 = sphi 0, %s346
      %s364 = sphi 0, %s364
      %s366 = sphi 0, %s364
      %s367 = sphi 0, %s366
      %s381 = sphi 0, %s367
      %s385 = sphi 0, %s385
      %s387 = sphi 0, %s385
      %s388 = sphi 0, %s387
      %s402 = sphi 0, %s388
      %s406 = sphi 0, %s406
      %s408 = sphi 0, %s406
      %s409 = sphi 0, %s408
      %s423 = sphi 0, %s409
      %s427 = sphi 0, %s427
      %s429 = sphi 0, %s427
      %s430 = sphi 0, %s429
      %s444 = sphi 0, %s430
      %s448 = sphi 0, %s448
      %s450 = sphi 0, %s448
      %s451 = sphi 0, %s450
      %s465 = sphi 0, %s451
      %s469 = sphi 0, %s469
      %s471 = sphi 0, %s469
      %s472 = sphi 0, %s471
      %s486 = sphi 0, %s472
      %s490 = sphi 0, %s490
      %s492 = sphi 0, %s490
      %s493 = sphi 0, %s492
      %s507 = sphi 0, %s493
      %s513 = sphi 0, %s515
      %s516 = sphi 0, %s513
      %s517 = sphi 0, %s516
      %s533 = sphi 0, %s517
    $region4: #{ndp_cnn_forward.1} parent=1 // loop_header_branch
      %34 = sbr.rel (%p32) target = $region8
    $region5: #{ndp_cnn_forward.1} parent=1 // loop_body
      %s36 = ssub.s32 %s31, 1
      %s37 = ssub.s32 %s31, 2
      %s38 = sadd.s32 %s31, 1
      %s39 = ssub.s32 %s31, %s38
      %p40 = scmp.eq.s32.totalorder %s39, 0
      %s42 = sadd.s32 %s41, 1
      %s43 = scalar_select %p40, %s41, %s42
      %p46 = pneg %p40
      %p47 = scmp.eq.s32.totalorder %s31, 1
      %p48 = por %p46, %p47
      %p49 = scmp.ne.s32.totalorder %s41, %s44
      %p50 = scmp.eq.s32.totalorder %s31, 0
      %p51 = por %p49, %p50
      %p52 = scmp.ne.s32.totalorder %s41, %s44
      %p53 = scmp.eq.s32.totalorder %s36, 1
      %p54 = por %p52, %p53
      %p55 = scmp.ne.s32.totalorder %s44, %s45
      %p56 = scmp.eq.s32.totalorder %s36, 0
      %p57 = por %p55, %p56
      %p58 = scmp.ne.s32.totalorder %s44, %s45
      %p59 = scmp.eq.s32.totalorder %s37, 1
      %p60 = por %p58, %p59
      %p62 = scmp.ne.s32.totalorder %s45, %s61
      %p63 = scmp.eq.s32.totalorder %s37, 0
      %p64 = por %p62, %p63
      %s65 = ssub.s32 %s31, %s38
      %p66 = scmp.eq.s32.totalorder %s65, 0
      %s68 = sadd.s32 %s67, 1
      %s69 = scalar_select %p66, %s67, %s68
      %p72 = pneg %p66
      %p73 = scmp.eq.s32.totalorder %s31, 1
      %p74 = por %p72, %p73
      %p75 = scmp.ne.s32.totalorder %s67, %s70
      %p76 = scmp.eq.s32.totalorder %s31, 0
      %p77 = por %p75, %p76
      %p78 = scmp.ne.s32.totalorder %s67, %s70
      %p79 = scmp.eq.s32.totalorder %s36, 1
      %p80 = por %p78, %p79
      %p81 = scmp.ne.s32.totalorder %s70, %s71
      %p82 = scmp.eq.s32.totalorder %s36, 0
      %p83 = por %p81, %p82
      %p84 = scmp.ne.s32.totalorder %s70, %s71
      %p85 = scmp.eq.s32.totalorder %s37, 1
      %p86 = por %p84, %p85
      %p88 = scmp.ne.s32.totalorder %s71, %s87
      %p89 = scmp.eq.s32.totalorder %s37, 0
      %p90 = por %p88, %p89
      %s92 = sadd.s32 %s91, 1
      %p95 = scmp.eq.s32.totalorder %s31, 1
      %p96 = scmp.ne.s32.totalorder %s91, %s93
      %p97 = scmp.eq.s32.totalorder %s31, 0
      %p98 = por %p96, %p97
      %p99 = scmp.ne.s32.totalorder %s91, %s93
      %p100 = scmp.eq.s32.totalorder %s36, 1
      %p101 = por %p99, %p100
      %p102 = scmp.ne.s32.totalorder %s93, %s94
      %p103 = scmp.eq.s32.totalorder %s36, 0
      %p104 = por %p102, %p103
      %p105 = scmp.ne.s32.totalorder %s93, %s94
      %p106 = scmp.eq.s32.totalorder %s37, 1
      %p107 = por %p105, %p106
      %p109 = scmp.ne.s32.totalorder %s94, %s108
      %p110 = scmp.eq.s32.totalorder %s37, 0
      %p111 = por %p109, %p110
      %s113 = sadd.s32 %s112, 1
      %p116 = scmp.eq.s32.totalorder %s31, 1
      %p117 = scmp.ne.s32.totalorder %s112, %s114
      %p118 = scmp.eq.s32.totalorder %s31, 0
      %p119 = por %p117, %p118
      %p120 = scmp.ne.s32.totalorder %s112, %s114
      %p121 = scmp.eq.s32.totalorder %s36, 1
      %p122 = por %p120, %p121
      %p123 = scmp.ne.s32.totalorder %s114, %s115
      %p124 = scmp.eq.s32.totalorder %s36, 0
      %p125 = por %p123, %p124
      %p126 = scmp.ne.s32.totalorder %s114, %s115
      %p127 = scmp.eq.s32.totalorder %s37, 1
      %p128 = por %p126, %p127
      %p130 = scmp.ne.s32.totalorder %s115, %s129
      %p131 = scmp.eq.s32.totalorder %s37, 0
      %p132 = por %p130, %p131
      %s134 = sadd.s32 %s133, 1
      %p137 = scmp.eq.s32.totalorder %s31, 1
      %p138 = scmp.ne.s32.totalorder %s133, %s135
      %p139 = scmp.eq.s32.totalorder %s31, 0
      %p140 = por %p138, %p139
      %p141 = scmp.ne.s32.totalorder %s133, %s135
      %p142 = scmp.eq.s32.totalorder %s36, 1
      %p143 = por %p141, %p142
      %p144 = scmp.ne.s32.totalorder %s135, %s136
      %p145 = scmp.eq.s32.totalorder %s36, 0
      %p146 = por %p144, %p145
      %p147 = scmp.ne.s32.totalorder %s135, %s136
      %p148 = scmp.eq.s32.totalorder %s37, 1
      %p149 = por %p147, %p148
      %p151 = scmp.ne.s32.totalorder %s136, %s150
      %p152 = scmp.eq.s32.totalorder %s37, 0
      %p153 = por %p151, %p152
      %s155 = sadd.s32 %s154, 1
      %p158 = scmp.eq.s32.totalorder %s31, 1
      %p159 = scmp.ne.s32.totalorder %s154, %s156
      %p160 = scmp.eq.s32.totalorder %s31, 0
      %p161 = por %p159, %p160
      %p162 = scmp.ne.s32.totalorder %s154, %s156
      %p163 = scmp.eq.s32.totalorder %s36, 1
      %p164 = por %p162, %p163
      %p165 = scmp.ne.s32.totalorder %s156, %s157
      %p166 = scmp.eq.s32.totalorder %s36, 0
      %p167 = por %p165, %p166
      %p168 = scmp.ne.s32.totalorder %s156, %s157
      %p169 = scmp.eq.s32.totalorder %s37, 1
      %p170 = por %p168, %p169
      %p172 = scmp.ne.s32.totalorder %s157, %s171
      %p173 = scmp.eq.s32.totalorder %s37, 0
      %p174 = por %p172, %p173
      %s176 = sadd.s32 %s175, 1
      %p179 = scmp.eq.s32.totalorder %s31, 1
      %p180 = scmp.ne.s32.totalorder %s175, %s177
      %p181 = scmp.eq.s32.totalorder %s31, 0
      %p182 = por %p180, %p181
      %p183 = scmp.ne.s32.totalorder %s175, %s177
      %p184 = scmp.eq.s32.totalorder %s36, 1
      %p185 = por %p183, %p184
      %p186 = scmp.ne.s32.totalorder %s177, %s178
      %p187 = scmp.eq.s32.totalorder %s36, 0
      %p188 = por %p186, %p187
      %p189 = scmp.ne.s32.totalorder %s177, %s178
      %p190 = scmp.eq.s32.totalorder %s37, 1
      %p191 = por %p189, %p190
      %p193 = scmp.ne.s32.totalorder %s178, %s192
      %p194 = scmp.eq.s32.totalorder %s37, 0
      %p195 = por %p193, %p194
      %s197 = sadd.s32 %s196, 1
      %p200 = scmp.eq.s32.totalorder %s31, 1
      %p201 = scmp.ne.s32.totalorder %s196, %s198
      %p202 = scmp.eq.s32.totalorder %s31, 0
      %p203 = por %p201, %p202
      %p204 = scmp.ne.s32.totalorder %s196, %s198
      %p205 = scmp.eq.s32.totalorder %s36, 1
      %p206 = por %p204, %p205
      %p207 = scmp.ne.s32.totalorder %s198, %s199
      %p208 = scmp.eq.s32.totalorder %s36, 0
      %p209 = por %p207, %p208
      %p210 = scmp.ne.s32.totalorder %s198, %s199
      %p211 = scmp.eq.s32.totalorder %s37, 1
      %p212 = por %p210, %p211
      %p214 = scmp.ne.s32.totalorder %s199, %s213
      %p215 = scmp.eq.s32.totalorder %s37, 0
      %p216 = por %p214, %p215
      %s218 = sadd.s32 %s217, 1
      %p221 = scmp.eq.s32.totalorder %s31, 1
      %p222 = scmp.ne.s32.totalorder %s217, %s219
      %p223 = scmp.eq.s32.totalorder %s31, 0
      %p224 = por %p222, %p223
      %p225 = scmp.ne.s32.totalorder %s217, %s219
      %p226 = scmp.eq.s32.totalorder %s36, 1
      %p227 = por %p225, %p226
      %p228 = scmp.ne.s32.totalorder %s219, %s220
      %p229 = scmp.eq.s32.totalorder %s36, 0
      %p230 = por %p228, %p229
      %p231 = scmp.ne.s32.totalorder %s219, %s220
      %p232 = scmp.eq.s32.totalorder %s37, 1
      %p233 = por %p231, %p232
      %p235 = scmp.ne.s32.totalorder %s220, %s234
      %p236 = scmp.eq.s32.totalorder %s37, 0
      %p237 = por %p235, %p236
      %s239 = sadd.s32 %s238, 1
      %p242 = scmp.eq.s32.totalorder %s31, 1
      %p243 = scmp.ne.s32.totalorder %s238, %s240
      %p244 = scmp.eq.s32.totalorder %s31, 0
      %p245 = por %p243, %p244
      %p246 = scmp.ne.s32.totalorder %s238, %s240
      %p247 = scmp.eq.s32.totalorder %s36, 1
      %p248 = por %p246, %p247
      %p249 = scmp.ne.s32.totalorder %s240, %s241
      %p250 = scmp.eq.s32.totalorder %s36, 0
      %p251 = por %p249, %p250
      %p252 = scmp.ne.s32.totalorder %s240, %s241
      %p253 = scmp.eq.s32.totalorder %s37, 1
      %p254 = por %p252, %p253
      %p256 = scmp.ne.s32.totalorder %s241, %s255
      %p257 = scmp.eq.s32.totalorder %s37, 0
      %p258 = por %p256, %p257
      %s260 = sadd.s32 %s259, 1
      %p263 = scmp.eq.s32.totalorder %s31, 1
      %p264 = scmp.ne.s32.totalorder %s259, %s261
      %p265 = scmp.eq.s32.totalorder %s31, 0
      %p266 = por %p264, %p265
      %p267 = scmp.ne.s32.totalorder %s259, %s261
      %p268 = scmp.eq.s32.totalorder %s36, 1
      %p269 = por %p267, %p268
      %p270 = scmp.ne.s32.totalorder %s261, %s262
      %p271 = scmp.eq.s32.totalorder %s36, 0
      %p272 = por %p270, %p271
      %p273 = scmp.ne.s32.totalorder %s261, %s262
      %p274 = scmp.eq.s32.totalorder %s37, 1
      %p275 = por %p273, %p274
      %p277 = scmp.ne.s32.totalorder %s262, %s276
      %p278 = scmp.eq.s32.totalorder %s37, 0
      %p279 = por %p277, %p278
      %s281 = sadd.s32 %s280, 1
      %p284 = scmp.eq.s32.totalorder %s31, 1
      %p285 = scmp.ne.s32.totalorder %s280, %s282
      %p286 = scmp.eq.s32.totalorder %s31, 0
      %p287 = por %p285, %p286
      %p288 = scmp.ne.s32.totalorder %s280, %s282
      %p289 = scmp.eq.s32.totalorder %s36, 1
      %p290 = por %p288, %p289
      %p291 = scmp.ne.s32.totalorder %s282, %s283
      %p292 = scmp.eq.s32.totalorder %s36, 0
      %p293 = por %p291, %p292
      %p294 = scmp.ne.s32.totalorder %s282, %s283
      %p295 = scmp.eq.s32.totalorder %s37, 1
      %p296 = por %p294, %p295
      %p298 = scmp.ne.s32.totalorder %s283, %s297
      %p299 = scmp.eq.s32.totalorder %s37, 0
      %p300 = por %p298, %p299
      %s302 = sadd.s32 %s301, 1
      %p305 = scmp.eq.s32.totalorder %s31, 1
      %p306 = scmp.ne.s32.totalorder %s301, %s303
      %p307 = scmp.eq.s32.totalorder %s31, 0
      %p308 = por %p306, %p307
      %p309 = scmp.ne.s32.totalorder %s301, %s303
      %p310 = scmp.eq.s32.totalorder %s36, 1
      %p311 = por %p309, %p310
      %p312 = scmp.ne.s32.totalorder %s303, %s304
      %p313 = scmp.eq.s32.totalorder %s36, 0
      %p314 = por %p312, %p313
      %p315 = scmp.ne.s32.totalorder %s303, %s304
      %p316 = scmp.eq.s32.totalorder %s37, 1
      %p317 = por %p315, %p316
      %p319 = scmp.ne.s32.totalorder %s304, %s318
      %p320 = scmp.eq.s32.totalorder %s37, 0
      %p321 = por %p319, %p320
      %s323 = sadd.s32 %s322, 1
      %p326 = scmp.eq.s32.totalorder %s31, 1
      %p327 = scmp.ne.s32.totalorder %s322, %s324
      %p328 = scmp.eq.s32.totalorder %s31, 0
      %p329 = por %p327, %p328
      %p330 = scmp.ne.s32.totalorder %s322, %s324
      %p331 = scmp.eq.s32.totalorder %s36, 1
      %p332 = por %p330, %p331
      %p333 = scmp.ne.s32.totalorder %s324, %s325
      %p334 = scmp.eq.s32.totalorder %s36, 0
      %p335 = por %p333, %p334
      %p336 = scmp.ne.s32.totalorder %s324, %s325
      %p337 = scmp.eq.s32.totalorder %s37, 1
      %p338 = por %p336, %p337
      %p340 = scmp.ne.s32.totalorder %s325, %s339
      %p341 = scmp.eq.s32.totalorder %s37, 0
      %p342 = por %p340, %p341
      %s344 = sadd.s32 %s343, 1
      %p347 = scmp.eq.s32.totalorder %s31, 1
      %p348 = scmp.ne.s32.totalorder %s343, %s345
      %p349 = scmp.eq.s32.totalorder %s31, 0
      %p350 = por %p348, %p349
      %p351 = scmp.ne.s32.totalorder %s343, %s345
      %p352 = scmp.eq.s32.totalorder %s36, 1
      %p353 = por %p351, %p352
      %p354 = scmp.ne.s32.totalorder %s345, %s346
      %p355 = scmp.eq.s32.totalorder %s36, 0
      %p356 = por %p354, %p355
      %p357 = scmp.ne.s32.totalorder %s345, %s346
      %p358 = scmp.eq.s32.totalorder %s37, 1
      %p359 = por %p357, %p358
      %p361 = scmp.ne.s32.totalorder %s346, %s360
      %p362 = scmp.eq.s32.totalorder %s37, 0
      %p363 = por %p361, %p362
      %s365 = sadd.s32 %s364, 1
      %p368 = scmp.eq.s32.totalorder %s31, 1
      %p369 = scmp.ne.s32.totalorder %s364, %s366
      %p370 = scmp.eq.s32.totalorder %s31, 0
      %p371 = por %p369, %p370
      %p372 = scmp.ne.s32.totalorder %s364, %s366
      %p373 = scmp.eq.s32.totalorder %s36, 1
      %p374 = por %p372, %p373
      %p375 = scmp.ne.s32.totalorder %s366, %s367
      %p376 = scmp.eq.s32.totalorder %s36, 0
      %p377 = por %p375, %p376
      %p378 = scmp.ne.s32.totalorder %s366, %s367
      %p379 = scmp.eq.s32.totalorder %s37, 1
      %p380 = por %p378, %p379
      %p382 = scmp.ne.s32.totalorder %s367, %s381
      %p383 = scmp.eq.s32.totalorder %s37, 0
      %p384 = por %p382, %p383
      %s386 = sadd.s32 %s385, 1
      %p389 = scmp.eq.s32.totalorder %s31, 1
      %p390 = scmp.ne.s32.totalorder %s385, %s387
      %p391 = scmp.eq.s32.totalorder %s31, 0
      %p392 = por %p390, %p391
      %p393 = scmp.ne.s32.totalorder %s385, %s387
      %p394 = scmp.eq.s32.totalorder %s36, 1
      %p395 = por %p393, %p394
      %p396 = scmp.ne.s32.totalorder %s387, %s388
      %p397 = scmp.eq.s32.totalorder %s36, 0
      %p398 = por %p396, %p397
      %p399 = scmp.ne.s32.totalorder %s387, %s388
      %p400 = scmp.eq.s32.totalorder %s37, 1
      %p401 = por %p399, %p400
      %p403 = scmp.ne.s32.totalorder %s388, %s402
      %p404 = scmp.eq.s32.totalorder %s37, 0
      %p405 = por %p403, %p404
      %s407 = sadd.s32 %s406, 1
      %p410 = scmp.eq.s32.totalorder %s31, 1
      %p411 = scmp.ne.s32.totalorder %s406, %s408
      %p412 = scmp.eq.s32.totalorder %s31, 0
      %p413 = por %p411, %p412
      %p414 = scmp.ne.s32.totalorder %s406, %s408
      %p415 = scmp.eq.s32.totalorder %s36, 1
      %p416 = por %p414, %p415
      %p417 = scmp.ne.s32.totalorder %s408, %s409
      %p418 = scmp.eq.s32.totalorder %s36, 0
      %p419 = por %p417, %p418
      %p420 = scmp.ne.s32.totalorder %s408, %s409
      %p421 = scmp.eq.s32.totalorder %s37, 1
      %p422 = por %p420, %p421
      %p424 = scmp.ne.s32.totalorder %s409, %s423
      %p425 = scmp.eq.s32.totalorder %s37, 0
      %p426 = por %p424, %p425
      %s428 = sadd.s32 %s427, 1
      %p431 = scmp.eq.s32.totalorder %s31, 1
      %p432 = scmp.ne.s32.totalorder %s427, %s429
      %p433 = scmp.eq.s32.totalorder %s31, 0
      %p434 = por %p432, %p433
      %p435 = scmp.ne.s32.totalorder %s427, %s429
      %p436 = scmp.eq.s32.totalorder %s36, 1
      %p437 = por %p435, %p436
      %p438 = scmp.ne.s32.totalorder %s429, %s430
      %p439 = scmp.eq.s32.totalorder %s36, 0
      %p440 = por %p438, %p439
      %p441 = scmp.ne.s32.totalorder %s429, %s430
      %p442 = scmp.eq.s32.totalorder %s37, 1
      %p443 = por %p441, %p442
      %p445 = scmp.ne.s32.totalorder %s430, %s444
      %p446 = scmp.eq.s32.totalorder %s37, 0
      %p447 = por %p445, %p446
      %s449 = sadd.s32 %s448, 1
      %p452 = scmp.eq.s32.totalorder %s31, 1
      %p453 = scmp.ne.s32.totalorder %s448, %s450
      %p454 = scmp.eq.s32.totalorder %s31, 0
      %p455 = por %p453, %p454
      %p456 = scmp.ne.s32.totalorder %s448, %s450
      %p457 = scmp.eq.s32.totalorder %s36, 1
      %p458 = por %p456, %p457
      %p459 = scmp.ne.s32.totalorder %s450, %s451
      %p460 = scmp.eq.s32.totalorder %s36, 0
      %p461 = por %p459, %p460
      %p462 = scmp.ne.s32.totalorder %s450, %s451
      %p463 = scmp.eq.s32.totalorder %s37, 1
      %p464 = por %p462, %p463
      %p466 = scmp.ne.s32.totalorder %s451, %s465
      %p467 = scmp.eq.s32.totalorder %s37, 0
      %p468 = por %p466, %p467
      %s470 = sadd.s32 %s469, 1
      %p473 = scmp.eq.s32.totalorder %s31, 1
      %p474 = scmp.ne.s32.totalorder %s469, %s471
      %p475 = scmp.eq.s32.totalorder %s31, 0
      %p476 = por %p474, %p475
      %p477 = scmp.ne.s32.totalorder %s469, %s471
      %p478 = scmp.eq.s32.totalorder %s36, 1
      %p479 = por %p477, %p478
      %p480 = scmp.ne.s32.totalorder %s471, %s472
      %p481 = scmp.eq.s32.totalorder %s36, 0
      %p482 = por %p480, %p481
      %p483 = scmp.ne.s32.totalorder %s471, %s472
      %p484 = scmp.eq.s32.totalorder %s37, 1
      %p485 = por %p483, %p484
      %p487 = scmp.ne.s32.totalorder %s472, %s486
      %p488 = scmp.eq.s32.totalorder %s37, 0
      %p489 = por %p487, %p488
      %s491 = sadd.s32 %s490, 1
      %p494 = scmp.eq.s32.totalorder %s31, 1
      %p495 = scmp.ne.s32.totalorder %s490, %s492
      %p496 = scmp.eq.s32.totalorder %s31, 0
      %p497 = por %p495, %p496
      %p498 = scmp.ne.s32.totalorder %s490, %s492
      %p499 = scmp.eq.s32.totalorder %s36, 1
      %p500 = por %p498, %p499
      %p501 = scmp.ne.s32.totalorder %s492, %s493
      %p502 = scmp.eq.s32.totalorder %s36, 0
      %p503 = por %p501, %p502
      %p504 = scmp.ne.s32.totalorder %s492, %s493
      %p505 = scmp.eq.s32.totalorder %s37, 1
      %p506 = por %p504, %p505
      %p508 = scmp.ne.s32.totalorder %s493, %s507
      %p509 = scmp.eq.s32.totalorder %s37, 0
      %p510 = por %p508, %p509
      %s511 = ssub.s32 %s31, %s38
      %p512 = scmp.eq.s32.totalorder %s511, 0
      %s514 = sadd.s32 %s513, 1
      %s515 = scalar_select %p512, %s513, %s514
      %p518 = pneg %p512
      %p519 = scmp.eq.s32.totalorder %s31, 1
      %p520 = por %p518, %p519
      %p521 = scmp.ne.s32.totalorder %s513, %s516
      %p522 = scmp.eq.s32.totalorder %s31, 0
      %p523 = por %p521, %p522
      %p524 = scmp.ne.s32.totalorder %s513, %s516
      %p525 = scmp.eq.s32.totalorder %s36, 1
      %p526 = por %p524, %p525
      %p527 = scmp.ne.s32.totalorder %s516, %s517
      %p528 = scmp.eq.s32.totalorder %s36, 0
      %p529 = por %p527, %p528
      %p530 = scmp.ne.s32.totalorder %s516, %s517
      %p531 = scmp.eq.s32.totalorder %s37, 1
      %p532 = por %p530, %p531
      %p534 = scmp.ne.s32.totalorder %s517, %s533
      %p535 = scmp.eq.s32.totalorder %s37, 0
      %p536 = por %p534, %p535
      %p537 = scmp.le.s32.totalorder 1, %s31
      %p538 = scmp.lt.s32.totalorder %s31, 3
      %p539 = pnand %p537, %p538
      %p540 = pneg %p539
      // Predicated region
      $region9: #{ndp_cnn_forward.1} parent=5 // pred_check
        _
      $region10: #{ndp_cnn_forward.1} parent=5 // pred_check_branch
        %542 = sbr.rel (%p539) target = $region12
      $region11: #{ndp_cnn_forward.1} parent=5 // pred_region
        %s543 = ssub.s32 %s31, 1
        // Predicated region
        $region13: #{ndp_cnn_forward.1} parent=11 // pred_check
          %p544 = pneg %p104
        $region14: #{ndp_cnn_forward.1} parent=11 // pred_check_branch
          %546 = sbr.rel (%p544) target = $region16
        $region15: #{ndp_cnn_forward.1} parent=11 // pred_region
          _
        $region16: #{ndp_cnn_forward.1} parent=11 // pred_fallthru
          _
        // Predicated region
        $region17: #{ndp_cnn_forward.1} parent=11 // pred_check
          %p547 = pneg %p125
        $region18: #{ndp_cnn_forward.1} parent=11 // pred_check_branch
          %549 = sbr.rel (%p547) target = $region20
        $region19: #{ndp_cnn_forward.1} parent=11 // pred_region
          _
        $region20: #{ndp_cnn_forward.1} parent=11 // pred_fallthru
          _
        // Predicated region
        $region21: #{ndp_cnn_forward.1} parent=11 // pred_check
          %p550 = pneg %p146
        $region22: #{ndp_cnn_forward.1} parent=11 // pred_check_branch
          %552 = sbr.rel (%p550) target = $region24
        $region23: #{ndp_cnn_forward.1} parent=11 // pred_region
          _
        $region24: #{ndp_cnn_forward.1} parent=11 // pred_fallthru
          _
        // Predicated region
        $region25: #{ndp_cnn_forward.1} parent=11 // pred_check
          %p553 = pneg %p167
        $region26: #{ndp_cnn_forward.1} parent=11 // pred_check_branch
          %555 = sbr.rel (%p553) target = $region28
        $region27: #{ndp_cnn_forward.1} parent=11 // pred_region
          _
        $region28: #{ndp_cnn_forward.1} parent=11 // pred_fallthru
          _
        // Predicated region
        $region29: #{ndp_cnn_forward.1} parent=11 // pred_check
          %p556 = pneg %p188
        $region30: #{ndp_cnn_forward.1} parent=11 // pred_check_branch
          %558 = sbr.rel (%p556) target = $region32
        $region31: #{ndp_cnn_forward.1} parent=11 // pred_region
          _
        $region32: #{ndp_cnn_forward.1} parent=11 // pred_fallthru
          _
        // Predicated region
        $region33: #{ndp_cnn_forward.1} parent=11 // pred_check
          %p559 = pneg %p209
        $region34: #{ndp_cnn_forward.1} parent=11 // pred_check_branch
          %561 = sbr.rel (%p559) target = $region36
        $region35: #{ndp_cnn_forward.1} parent=11 // pred_region
          _
        $region36: #{ndp_cnn_forward.1} parent=11 // pred_fallthru
          _
        // Predicated region
        $region37: #{ndp_cnn_forward.1} parent=11 // pred_check
          %p562 = pneg %p230
        $region38: #{ndp_cnn_forward.1} parent=11 // pred_check_branch
          %564 = sbr.rel (%p562) target = $region40
        $region39: #{ndp_cnn_forward.1} parent=11 // pred_region
          _
        $region40: #{ndp_cnn_forward.1} parent=11 // pred_fallthru
          _
        // Predicated region
        $region41: #{ndp_cnn_forward.1} parent=11 // pred_check
          %p565 = pneg %p251
        $region42: #{ndp_cnn_forward.1} parent=11 // pred_check_branch
          %567 = sbr.rel (%p565) target = $region44
        $region43: #{ndp_cnn_forward.1} parent=11 // pred_region
          _
        $region44: #{ndp_cnn_forward.1} parent=11 // pred_fallthru
          _
        // Predicated region
        $region45: #{ndp_cnn_forward.1} parent=11 // pred_check
          %p568 = pneg %p272
        $region46: #{ndp_cnn_forward.1} parent=11 // pred_check_branch
          %570 = sbr.rel (%p568) target = $region48
        $region47: #{ndp_cnn_forward.1} parent=11 // pred_region
          _
        $region48: #{ndp_cnn_forward.1} parent=11 // pred_fallthru
          _
        // Predicated region
        $region49: #{ndp_cnn_forward.1} parent=11 // pred_check
          %p571 = pneg %p293
        $region50: #{ndp_cnn_forward.1} parent=11 // pred_check_branch
          %573 = sbr.rel (%p571) target = $region52
        $region51: #{ndp_cnn_forward.1} parent=11 // pred_region
          _
        $region52: #{ndp_cnn_forward.1} parent=11 // pred_fallthru
          _
        // Predicated region
        $region53: #{ndp_cnn_forward.1} parent=11 // pred_check
          %p574 = pneg %p314
        $region54: #{ndp_cnn_forward.1} parent=11 // pred_check_branch
          %576 = sbr.rel (%p574) target = $region56
        $region55: #{ndp_cnn_forward.1} parent=11 // pred_region
          _
        $region56: #{ndp_cnn_forward.1} parent=11 // pred_fallthru
          _
        // Predicated region
        $region57: #{ndp_cnn_forward.1} parent=11 // pred_check
          %p577 = pneg %p335
        $region58: #{ndp_cnn_forward.1} parent=11 // pred_check_branch
          %579 = sbr.rel (%p577) target = $region60
        $region59: #{ndp_cnn_forward.1} parent=11 // pred_region
          _
        $region60: #{ndp_cnn_forward.1} parent=11 // pred_fallthru
          _
        // Predicated region
        $region61: #{ndp_cnn_forward.1} parent=11 // pred_check
          %p580 = pneg %p356
        $region62: #{ndp_cnn_forward.1} parent=11 // pred_check_branch
          %582 = sbr.rel (%p580) target = $region64
        $region63: #{ndp_cnn_forward.1} parent=11 // pred_region
          _
        $region64: #{ndp_cnn_forward.1} parent=11 // pred_fallthru
          _
        // Predicated region
        $region65: #{ndp_cnn_forward.1} parent=11 // pred_check
          %p583 = pneg %p377
        $region66: #{ndp_cnn_forward.1} parent=11 // pred_check_branch
          %585 = sbr.rel (%p583) target = $region68
        $region67: #{ndp_cnn_forward.1} parent=11 // pred_region
          _
        $region68: #{ndp_cnn_forward.1} parent=11 // pred_fallthru
          _
        // Predicated region
        $region69: #{ndp_cnn_forward.1} parent=11 // pred_check
          %p586 = pneg %p398
        $region70: #{ndp_cnn_forward.1} parent=11 // pred_check_branch
          %588 = sbr.rel (%p586) target = $region72
        $region71: #{ndp_cnn_forward.1} parent=11 // pred_region
          _
        $region72: #{ndp_cnn_forward.1} parent=11 // pred_fallthru
          _
        // Predicated region
        $region73: #{ndp_cnn_forward.1} parent=11 // pred_check
          %p589 = pneg %p419
        $region74: #{ndp_cnn_forward.1} parent=11 // pred_check_branch
          %591 = sbr.rel (%p589) target = $region76
        $region75: #{ndp_cnn_forward.1} parent=11 // pred_region
          _
        $region76: #{ndp_cnn_forward.1} parent=11 // pred_fallthru
          _
        // Predicated region
        $region77: #{ndp_cnn_forward.1} parent=11 // pred_check
          %p592 = pneg %p440
        $region78: #{ndp_cnn_forward.1} parent=11 // pred_check_branch
          %594 = sbr.rel (%p592) target = $region80
        $region79: #{ndp_cnn_forward.1} parent=11 // pred_region
          _
        $region80: #{ndp_cnn_forward.1} parent=11 // pred_fallthru
          _
        // Predicated region
        $region81: #{ndp_cnn_forward.1} parent=11 // pred_check
          %p595 = pneg %p461
        $region82: #{ndp_cnn_forward.1} parent=11 // pred_check_branch
          %597 = sbr.rel (%p595) target = $region84
        $region83: #{ndp_cnn_forward.1} parent=11 // pred_region
          _
        $region84: #{ndp_cnn_forward.1} parent=11 // pred_fallthru
          _
        // Predicated region
        $region85: #{ndp_cnn_forward.1} parent=11 // pred_check
          %p598 = pneg %p482
        $region86: #{ndp_cnn_forward.1} parent=11 // pred_check_branch
          %600 = sbr.rel (%p598) target = $region88
        $region87: #{ndp_cnn_forward.1} parent=11 // pred_region
          _
        $region88: #{ndp_cnn_forward.1} parent=11 // pred_fallthru
          _
        // Predicated region
        $region89: #{ndp_cnn_forward.1} parent=11 // pred_check
          %p601 = pneg %p503
        $region90: #{ndp_cnn_forward.1} parent=11 // pred_check_branch
          %603 = sbr.rel (%p601) target = $region92
        $region91: #{ndp_cnn_forward.1} parent=11 // pred_region
          _
        $region92: #{ndp_cnn_forward.1} parent=11 // pred_fallthru
          _
      $region12: #{ndp_cnn_forward.1} parent=5 // pred_fallthru
        _
      %p604 = scmp.lt.s32.totalorder %s31, 2
      // Predicated region
      $region93: #{ndp_cnn_forward.1} parent=5 // pred_check
        %p605 = pneg %p604
      $region94: #{ndp_cnn_forward.1} parent=5 // pred_check_branch
        %607 = sbr.rel (%p605) target = $region96
      $region95: #{ndp_cnn_forward.1} parent=5 // pred_region
        // Predicated region
        $region97: #{ndp_cnn_forward.1} parent=95 // pred_check
          %p608 = pneg %p51
        $region98: #{ndp_cnn_forward.1} parent=95 // pred_check_branch
          %610 = sbr.rel (%p608) target = $region100
        $region99: #{ndp_cnn_forward.1} parent=95 // pred_region
          %p611 = scmp.lt.s32.totalorder %s31, 1
          %s612 = scalar_select %p611, %s31, 1
          %s613 = smul.addr %s612, 4
          %s614 = smul.addr %s613, 8
          %s615 = scalar_lea.vmem %s0, %s614
        $region100: #{ndp_cnn_forward.1} parent=95 // pred_fallthru
          _
        // Predicated region
        $region101: #{ndp_cnn_forward.1} parent=95 // pred_check
          %p616 = pneg %p77
        $region102: #{ndp_cnn_forward.1} parent=95 // pred_check_branch
          %618 = sbr.rel (%p616) target = $region104
        $region103: #{ndp_cnn_forward.1} parent=95 // pred_region
          %p619 = scmp.lt.s32.totalorder %s31, 1
          %s620 = scalar_select %p619, %s31, 1
          %s621 = scalar_lea.vmem %s1, %s620
        $region104: #{ndp_cnn_forward.1} parent=95 // pred_fallthru
          _
      $region96: #{ndp_cnn_forward.1} parent=5 // pred_fallthru
        _
      %p622 = scmp.le.s32.totalorder 1, %s31
      %p623 = scmp.lt.s32.totalorder %s31, 3
      %p624 = pnand %p622, %p623
      %p625 = pneg %p624
      // Predicated region
      $region105: #{ndp_cnn_forward.1} parent=5 // pred_check
        _
      $region106: #{ndp_cnn_forward.1} parent=5 // pred_check_branch
        %627 = sbr.rel (%p624) target = $region108
      $region107: #{ndp_cnn_forward.1} parent=5 // pred_region
        %s628 = ssub.s32 %s31, 1
        %p629 = scmp.lt.s32.totalorder %s36, 1
        %s630 = scalar_select %p629, %s36, 1
        %s631 = smul.addr %s630, 4
        %s632 = smul.addr %s631, 8
        %s633 = scalar_lea.vmem %s0, %s632
        %p634 = pneg %p57
        %p635 = pneg %p54
        %p636 = scmp.lt.s32.totalorder %s36, 1
        %s637 = scalar_select %p636, %s36, 1
        %s638 = scalar_lea.vmem %s1, %s637
        %p639 = pneg %p83
        %p640 = pneg %p80
        %p641 = pneg %p104
        %p642 = pneg %p101
        %p643 = pneg %p125
        %p644 = pneg %p122
        %p645 = pneg %p146
        %p646 = pneg %p143
        %p647 = pneg %p167
        %p648 = pneg %p164
        %p649 = pneg %p188
        %p650 = pneg %p185
        %p651 = pneg %p209
        %p652 = pneg %p206
        %p653 = pneg %p230
        %p654 = pneg %p227
        %p655 = pneg %p251
        %p656 = pneg %p248
        %p657 = pneg %p272
        %p658 = pneg %p269
        %p659 = pneg %p293
        %p660 = pneg %p290
        %p661 = pneg %p314
        %p662 = pneg %p311
        %p663 = pneg %p335
        %p664 = pneg %p332
        %p665 = pneg %p356
        %p666 = pneg %p353
        %p667 = pneg %p377
        %p668 = pneg %p374
        %p669 = pneg %p398
        %p670 = pneg %p395
        %p671 = pneg %p419
        %p672 = pneg %p416
        %p673 = pneg %p440
        %p674 = pneg %p437
        %p675 = pneg %p461
        %p676 = pneg %p458
        %p677 = pneg %p482
        %p678 = pneg %p479
        %p679 = pneg %p503
        %p680 = pneg %p500
        %p681 = pneg %p529
        %p682 = pneg %p526
        %s683 = sand.u32 %s516, 1
        %s684 = scalar_lea.sflag [#allocation3], %s683
        %s685 = sand.u32 %s516, 1
        %s686 = scalar_lea.vmem [#allocation2], %s685
        %p687 = scmp.lt.s32.totalorder %s36, 1
        %s688 = scalar_select %p687, %s36, 1
        %s689 = smul.addr %s688, 4
        %s690 = smul.addr %s689, 8
        %s691 = scalar_lea.vmem %s0, %s690
        %p692 = scmp.lt.s32.totalorder %s36, 1
        %s693 = scalar_select %p692, %s36, 1
        %s694 = scalar_lea.vmem %s1, %s693
        %v696 = vld [vmem:[%s691] sm:$0xff]
        %v697 = vld [vmem:[%s691 + $0x8] sm:$0xf]
        %v698 = vpack.c.bf16 %v697, %v696
        %v699 = vld [vmem:[%s2] sm:$0xff]
        %v700 = vld [vmem:[%s2 + $0x8] sm:$0xff]
        %v701 = vld [vmem:[%s2 + $0x10] sm:$0xff]
        %v702 = vld [vmem:[%s2 + $0x18] sm:$0x33]
        %s703 = scalar_lea.vmem %s691, 16
        %v704 = vld [vmem:[%s703] sm:$0xff]
        %v705 = vld [vmem:[%s703 + $0x8] sm:$0xf]
        %v706 = vpack.c.bf16 %v705, %v704
        %s707 = scalar_lea.vmem %s2, 32
        %v708 = vld [vmem:[%s707] sm:$0xff]
        %v709 = vld [vmem:[%s707 + $0x8] sm:$0xff]
        %v710 = vld [vmem:[%s707 + $0x10] sm:$0xff]
        %v711 = vld [vmem:[%s707 + $0x18] sm:$0x33]
        %v716 = vunpack.c.l.b16 %v708
        %v717 = vunpack.c.h.b16 %v708
        %v718 = vunpack.c.l.b16 %v709
        %v719 = vunpack.c.h.b16 %v709
        %v720 = vunpack.c.l.b16 %v710
        %v721 = vunpack.c.h.b16 %v710
        %v722 = vunpack.c.l.b16 %v711
        %v723 = vunpack.c.h.b16 %v711
        %v724 = vpack.c.b16 %v718, %v716
        %v725 = vpack.c.b16 %v719, %v717
        %v726 = vpack.c.b16 %v722, %v720
        %v727 = vpack.c.b16 %v723, %v721
        %vm730 = vcmask 228352
        %v732 = vsel %vm730, %v706, 0
        %vm734 = vcmask 1045504
        %v736 = vsel %vm734, %v726, 0
        %v739 = vsel %vm734, %v727, 0
        %741 = vmatprep.subr.bf16.mxu0 %v725
        %742 = vmatpush1.bf16.msra.mxu0 %v724
        %743 = vmatprep.subr.bf16.mxu0 %v739
        %744 = vmatpush1.bf16.msra.mxu0 %v736
        %745 = vmatprep.subr.bf16.mxu0 0
        %746 = vmatpush1.bf16.msra.mxu0 0
        %747 = vmatprep.subr.bf16.mxu0 0
        %748 = vmatpush1.bf16.msra.mxu0 0
        %749 = vmatprep.subr.bf16.mxu0 0
        %750 = vmatpush1.bf16.msra.mxu0 0
        %751 = vmatprep.subr.bf16.mxu0 0
        %752 = vmatpush1.bf16.msra.mxu0 0
        %753 = vmatprep.subr.bf16.mxu0 0
        %754 = vmatpush1.bf16.msra.mxu0 0
        %755 = vmatprep.subr.bf16.mxu0 0
        %756 = vmatpush1.bf16.msra.mxu0 0
        %757 = vmatprep.subr.bf16.mxu0 0
        %758 = vmatpush1.bf16.msra.mxu0 0
        %759 = vmatprep.subr.bf16.mxu0 0
        %760 = vmatpush1.bf16.msra.mxu0 0
        %761 = vmatprep.subr.bf16.mxu0 0
        %762 = vmatpush1.bf16.msra.mxu0 0
        %763 = vmatprep.subr.bf16.mxu0 0
        %764 = vmatpush1.bf16.msra.mxu0 0
        %765 = vmatprep.subr.bf16.mxu0 0
        %766 = vmatpush1.bf16.msra.mxu0 0
        %767 = vmatprep.subr.bf16.mxu0 0
        %768 = vmatpush1.bf16.msra.mxu0 0
        %769 = vmatprep.subr.bf16.mxu0 0
        %770 = vmatpush1.bf16.msra.mxu0 0
        %771 = vmatprep.subr.bf16.mxu0 0
        %772 = vmatpush1.bf16.msra.mxu0 0
        %773 = vmatprep.mubr.bf16.mxu0 0
        %774 = vmatmul.mubr.bf16.gmra.mrb[0].mxu0 %v732
        %v775 = vpop.f32.mrb[0].mxu0
        %v776 = vadd.f32 0.0, %v775
        %v777 = vpop.f32.mrb[0].mxu0
        %v778 = vadd.f32 0.0, %v777
        %v779 = vpop.f32.mrb[0].mxu0
        %v780 = vadd.f32 0.0, %v779
        %v781 = vpop.f32.mrb[0].mxu0
        %v782 = vadd.f32 0.0, %v781
        %783 = vdwg.mxu0
        %v788 = vunpack.c.l.b16 %v699
        %v789 = vunpack.c.h.b16 %v699
        %v790 = vunpack.c.l.b16 %v700
        %v791 = vunpack.c.h.b16 %v700
        %v792 = vunpack.c.l.b16 %v701
        %v793 = vunpack.c.h.b16 %v701
        %v794 = vunpack.c.l.b16 %v702
        %v795 = vunpack.c.h.b16 %v702
        %v796 = vpack.c.b16 %v790, %v788
        %v797 = vpack.c.b16 %v791, %v789
        %v798 = vpack.c.b16 %v794, %v792
        %v799 = vpack.c.b16 %v795, %v793
        %v803 = vsel %vm730, %v698, 0
        %v806 = vsel %vm734, %v798, 0
        %v809 = vsel %vm734, %v799, 0
        %811 = vmatprep.subr.bf16.mxu0 %v797
        %812 = vmatpush1.bf16.msra.mxu0 %v796
        %813 = vmatprep.subr.bf16.mxu0 %v809
        %814 = vmatpush1.bf16.msra.mxu0 %v806
        %815 = vmatprep.subr.bf16.mxu0 0
        %816 = vmatpush1.bf16.msra.mxu0 0
        %817 = vmatprep.subr.bf16.mxu0 0
        %818 = vmatpush1.bf16.msra.mxu0 0
        %819 = vmatprep.subr.bf16.mxu0 0
        %820 = vmatpush1.bf16.msra.mxu0 0
        %821 = vmatprep.subr.bf16.mxu0 0
        %822 = vmatpush1.bf16.msra.mxu0 0
        %823 = vmatprep.subr.bf16.mxu0 0
        %824 = vmatpush1.bf16.msra.mxu0 0
        %825 = vmatprep.subr.bf16.mxu0 0
        %826 = vmatpush1.bf16.msra.mxu0 0
        %827 = vmatprep.subr.bf16.mxu0 0
        %828 = vmatpush1.bf16.msra.mxu0 0
        %829 = vmatprep.subr.bf16.mxu0 0
        %830 = vmatpush1.bf16.msra.mxu0 0
        %831 = vmatprep.subr.bf16.mxu0 0
        %832 = vmatpush1.bf16.msra.mxu0 0
        %833 = vmatprep.subr.bf16.mxu0 0
        %834 = vmatpush1.bf16.msra.mxu0 0
        %835 = vmatprep.subr.bf16.mxu0 0
        %836 = vmatpush1.bf16.msra.mxu0 0
        %837 = vmatprep.subr.bf16.mxu0 0
        %838 = vmatpush1.bf16.msra.mxu0 0
        %839 = vmatprep.subr.bf16.mxu0 0
        %840 = vmatpush1.bf16.msra.mxu0 0
        %841 = vmatprep.subr.bf16.mxu0 0
        %842 = vmatpush1.bf16.msra.mxu0 0
        %843 = vmatprep.mubr.bf16.mxu0 0
        %844 = vmatmul.mubr.bf16.gmra.mrb[0].mxu0 %v803
        %v845 = vpop.f32.mrb[0].mxu0
        %v846 = vadd.f32 %v776, %v845
        %v847 = vpop.f32.mrb[0].mxu0
        %v848 = vadd.f32 %v778, %v847
        %v849 = vpop.f32.mrb[0].mxu0
        %v850 = vadd.f32 %v780, %v849
        %v851 = vpop.f32.mrb[0].mxu0
        %v852 = vadd.f32 %v782, %v851
        %853 = vdwg.mxu0
        %v854 = vld [vmem:[%s691 + $0x1] sm:$0xff]
        %v855 = vld [vmem:[%s691 + $0x9] sm:$0xf]
        %v856 = vpack.c.bf16 %v855, %v854
        %s857 = scalar_lea.vmem %s2, 64
        %v858 = vld [vmem:[%s857] sm:$0xff]
        %v859 = vld [vmem:[%s857 + $0x8] sm:$0xff]
        %v860 = vld [vmem:[%s857 + $0x10] sm:$0xff]
        %v861 = vld [vmem:[%s857 + $0x18] sm:$0x33]
        %v866 = vunpack.c.l.b16 %v858
        %v867 = vunpack.c.h.b16 %v858
        %v868 = vunpack.c.l.b16 %v859
        %v869 = vunpack.c.h.b16 %v859
        %v870 = vunpack.c.l.b16 %v860
        %v871 = vunpack.c.h.b16 %v860
        %v872 = vunpack.c.l.b16 %v861
        %v873 = vunpack.c.h.b16 %v861
        %v874 = vpack.c.b16 %v868, %v866
        %v875 = vpack.c.b16 %v869, %v867
        %v876 = vpack.c.b16 %v872, %v870
        %v877 = vpack.c.b16 %v873, %v871
        %v881 = vsel %vm730, %v856, 0
        %v884 = vsel %vm734, %v876, 0
        %v887 = vsel %vm734, %v877, 0
        %889 = vmatprep.subr.bf16.mxu0 %v875
        %890 = vmatpush1.bf16.msra.mxu0 %v874
        %891 = vmatprep.subr.bf16.mxu0 %v887
        %892 = vmatpush1.bf16.msra.mxu0 %v884
        %893 = vmatprep.subr.bf16.mxu0 0
        %894 = vmatpush1.bf16.msra.mxu0 0
        %895 = vmatprep.subr.bf16.mxu0 0
        %896 = vmatpush1.bf16.msra.mxu0 0
        %897 = vmatprep.subr.bf16.mxu0 0
        %898 = vmatpush1.bf16.msra.mxu0 0
        %899 = vmatprep.subr.bf16.mxu0 0
        %900 = vmatpush1.bf16.msra.mxu0 0
        %901 = vmatprep.subr.bf16.mxu0 0
        %902 = vmatpush1.bf16.msra.mxu0 0
        %903 = vmatprep.subr.bf16.mxu0 0
        %904 = vmatpush1.bf16.msra.mxu0 0
        %905 = vmatprep.subr.bf16.mxu0 0
        %906 = vmatpush1.bf16.msra.mxu0 0
        %907 = vmatprep.subr.bf16.mxu0 0
        %908 = vmatpush1.bf16.msra.mxu0 0
        %909 = vmatprep.subr.bf16.mxu0 0
        %910 = vmatpush1.bf16.msra.mxu0 0
        %911 = vmatprep.subr.bf16.mxu0 0
        %912 = vmatpush1.bf16.msra.mxu0 0
        %913 = vmatprep.subr.bf16.mxu0 0
        %914 = vmatpush1.bf16.msra.mxu0 0
        %915 = vmatprep.subr.bf16.mxu0 0
        %916 = vmatpush1.bf16.msra.mxu0 0
        %917 = vmatprep.subr.bf16.mxu0 0
        %918 = vmatpush1.bf16.msra.mxu0 0
        %919 = vmatprep.subr.bf16.mxu0 0
        %920 = vmatpush1.bf16.msra.mxu0 0
        %921 = vmatprep.mubr.bf16.mxu0 0
        %922 = vmatmul.mubr.bf16.gmra.mrb[0].mxu0 %v881
        %v923 = vpop.f32.mrb[0].mxu0
        %v924 = vadd.f32 0.0, %v923
        %v925 = vpop.f32.mrb[0].mxu0
        %v926 = vadd.f32 0.0, %v925
        %v927 = vpop.f32.mrb[0].mxu0
        %v928 = vadd.f32 0.0, %v927
        %v929 = vpop.f32.mrb[0].mxu0
        %v930 = vadd.f32 0.0, %v929
        %931 = vdwg.mxu0
        %v932 = vadd.f32 %v846, %v924
        %v933 = vadd.f32 %v848, %v926
        %v934 = vadd.f32 %v850, %v928
        %v935 = vadd.f32 %v852, %v930
        %v936 = vld [vmem:[%s703 + $0x1] sm:$0xff]
        %v937 = vld [vmem:[%s703 + $0x9] sm:$0xf]
        %v938 = vpack.c.bf16 %v937, %v936
        %s939 = scalar_lea.vmem %s2, 96
        %v940 = vld [vmem:[%s939] sm:$0xff]
        %v941 = vld [vmem:[%s939 + $0x8] sm:$0xff]
        %v942 = vld [vmem:[%s939 + $0x10] sm:$0xff]
        %v943 = vld [vmem:[%s939 + $0x18] sm:$0x33]
        %v948 = vunpack.c.l.b16 %v940
        %v949 = vunpack.c.h.b16 %v940
        %v950 = vunpack.c.l.b16 %v941
        %v951 = vunpack.c.h.b16 %v941
        %v952 = vunpack.c.l.b16 %v942
        %v953 = vunpack.c.h.b16 %v942
        %v954 = vunpack.c.l.b16 %v943
        %v955 = vunpack.c.h.b16 %v943
        %v956 = vpack.c.b16 %v950, %v948
        %v957 = vpack.c.b16 %v951, %v949
        %v958 = vpack.c.b16 %v954, %v952
        %v959 = vpack.c.b16 %v955, %v953
        %v963 = vsel %vm730, %v938, 0
        %v966 = vsel %vm734, %v958, 0
        %v969 = vsel %vm734, %v959, 0
        %971 = vmatprep.subr.bf16.mxu0 %v957
        %972 = vmatpush1.bf16.msra.mxu0 %v956
        %973 = vmatprep.subr.bf16.mxu0 %v969
        %974 = vmatpush1.bf16.msra.mxu0 %v966
        %975 = vmatprep.subr.bf16.mxu0 0
        %976 = vmatpush1.bf16.msra.mxu0 0
        %977 = vmatprep.subr.bf16.mxu0 0
        %978 = vmatpush1.bf16.msra.mxu0 0
        %979 = vmatprep.subr.bf16.mxu0 0
        %980 = vmatpush1.bf16.msra.mxu0 0
        %981 = vmatprep.subr.bf16.mxu0 0
        %982 = vmatpush1.bf16.msra.mxu0 0
        %983 = vmatprep.subr.bf16.mxu0 0
        %984 = vmatpush1.bf16.msra.mxu0 0
        %985 = vmatprep.subr.bf16.mxu0 0
        %986 = vmatpush1.bf16.msra.mxu0 0
        %987 = vmatprep.subr.bf16.mxu0 0
        %988 = vmatpush1.bf16.msra.mxu0 0
        %989 = vmatprep.subr.bf16.mxu0 0
        %990 = vmatpush1.bf16.msra.mxu0 0
        %991 = vmatprep.subr.bf16.mxu0 0
        %992 = vmatpush1.bf16.msra.mxu0 0
        %993 = vmatprep.subr.bf16.mxu0 0
        %994 = vmatpush1.bf16.msra.mxu0 0
        %995 = vmatprep.subr.bf16.mxu0 0
        %996 = vmatpush1.bf16.msra.mxu0 0
        %997 = vmatprep.subr.bf16.mxu0 0
        %998 = vmatpush1.bf16.msra.mxu0 0
        %999 = vmatprep.subr.bf16.mxu0 0
        %1000 = vmatpush1.bf16.msra.mxu0 0
        %1001 = vmatprep.subr.bf16.mxu0 0
        %1002 = vmatpush1.bf16.msra.mxu0 0
        %1003 = vmatprep.mubr.bf16.mxu0 0
        %1004 = vmatmul.mubr.bf16.gmra.mrb[0].mxu0 %v963
        %v1005 = vpop.f32.mrb[0].mxu0
        %v1006 = vadd.f32 0.0, %v1005
        %v1007 = vpop.f32.mrb[0].mxu0
        %v1008 = vadd.f32 0.0, %v1007
        %v1009 = vpop.f32.mrb[0].mxu0
        %v1010 = vadd.f32 0.0, %v1009
        %v1011 = vpop.f32.mrb[0].mxu0
        %v1012 = vadd.f32 0.0, %v1011
        %1013 = vdwg.mxu0
        %v1014 = vadd.f32 %v932, %v1006
        %v1015 = vadd.f32 %v933, %v1008
        %v1016 = vadd.f32 %v934, %v1010
        %v1017 = vadd.f32 %v935, %v1012
        %v1018 = vld [vmem:[%s691 + $0x2] sm:$0xff]
        %v1019 = vld [vmem:[%s691 + $0xa] sm:$0xf]
        %v1020 = vpack.c.bf16 %v1019, %v1018
        %s1021 = scalar_lea.vmem %s2, 128
        %v1022 = vld [vmem:[%s1021] sm:$0xff]
        %v1023 = vld [vmem:[%s1021 + $0x8] sm:$0xff]
        %v1024 = vld [vmem:[%s1021 + $0x10] sm:$0xff]
        %v1025 = vld [vmem:[%s1021 + $0x18] sm:$0x33]
        %v1030 = vunpack.c.l.b16 %v1022
        %v1031 = vunpack.c.h.b16 %v1022
        %v1032 = vunpack.c.l.b16 %v1023
        %v1033 = vunpack.c.h.b16 %v1023
        %v1034 = vunpack.c.l.b16 %v1024
        %v1035 = vunpack.c.h.b16 %v1024
        %v1036 = vunpack.c.l.b16 %v1025
        %v1037 = vunpack.c.h.b16 %v1025
        %v1038 = vpack.c.b16 %v1032, %v1030
        %v1039 = vpack.c.b16 %v1033, %v1031
        %v1040 = vpack.c.b16 %v1036, %v1034
        %v1041 = vpack.c.b16 %v1037, %v1035
        %v1045 = vsel %vm730, %v1020, 0
        %v1048 = vsel %vm734, %v1040, 0
        %v1051 = vsel %vm734, %v1041, 0
        %1053 = vmatprep.subr.bf16.mxu0 %v1039
        %1054 = vmatpush1.bf16.msra.mxu0 %v1038
        %1055 = vmatprep.subr.bf16.mxu0 %v1051
        %1056 = vmatpush1.bf16.msra.mxu0 %v1048
        %1057 = vmatprep.subr.bf16.mxu0 0
        %1058 = vmatpush1.bf16.msra.mxu0 0
        %1059 = vmatprep.subr.bf16.mxu0 0
        %1060 = vmatpush1.bf16.msra.mxu0 0
        %1061 = vmatprep.subr.bf16.mxu0 0
        %1062 = vmatpush1.bf16.msra.mxu0 0
        %1063 = vmatprep.subr.bf16.mxu0 0
        %1064 = vmatpush1.bf16.msra.mxu0 0
        %1065 = vmatprep.subr.bf16.mxu0 0
        %1066 = vmatpush1.bf16.msra.mxu0 0
        %1067 = vmatprep.subr.bf16.mxu0 0
        %1068 = vmatpush1.bf16.msra.mxu0 0
        %1069 = vmatprep.subr.bf16.mxu0 0
        %1070 = vmatpush1.bf16.msra.mxu0 0
        %1071 = vmatprep.subr.bf16.mxu0 0
        %1072 = vmatpush1.bf16.msra.mxu0 0
        %1073 = vmatprep.subr.bf16.mxu0 0
        %1074 = vmatpush1.bf16.msra.mxu0 0
        %1075 = vmatprep.subr.bf16.mxu0 0
        %1076 = vmatpush1.bf16.msra.mxu0 0
        %1077 = vmatprep.subr.bf16.mxu0 0
        %1078 = vmatpush1.bf16.msra.mxu0 0
        %1079 = vmatprep.subr.bf16.mxu0 0
        %1080 = vmatpush1.bf16.msra.mxu0 0
        %1081 = vmatprep.subr.bf16.mxu0 0
        %1082 = vmatpush1.bf16.msra.mxu0 0
        %1083 = vmatprep.subr.bf16.mxu0 0
        %1084 = vmatpush1.bf16.msra.mxu0 0
        %1085 = vmatprep.mubr.bf16.mxu0 0
        %1086 = vmatmul.mubr.bf16.gmra.mrb[0].mxu0 %v1045
        %v1087 = vpop.f32.mrb[0].mxu0
        %v1088 = vadd.f32 0.0, %v1087
        %v1089 = vpop.f32.mrb[0].mxu0
        %v1090 = vadd.f32 0.0, %v1089
        %v1091 = vpop.f32.mrb[0].mxu0
        %v1092 = vadd.f32 0.0, %v1091
        %v1093 = vpop.f32.mrb[0].mxu0
        %v1094 = vadd.f32 0.0, %v1093
        %1095 = vdwg.mxu0
        %v1096 = vadd.f32 %v1014, %v1088
        %v1097 = vadd.f32 %v1015, %v1090
        %v1098 = vadd.f32 %v1016, %v1092
        %v1099 = vadd.f32 %v1017, %v1094
        %s1100 = scalar_lea.vmem %s2, 160
        %v1101 = vld [vmem:[%s1100] sm:$0xff]
        %v1102 = vld [vmem:[%s1100 + $0x8] sm:$0xff]
        %v1103 = vld [vmem:[%s1100 + $0x10] sm:$0xff]
        %v1104 = vld [vmem:[%s1100 + $0x18] sm:$0x33]
        %s1105 = scalar_lea.vmem %s2, 192
        %v1106 = vld [vmem:[%s1105] sm:$0xff]
        %v1107 = vld [vmem:[%s1105 + $0x8] sm:$0xff]
        %v1108 = vld [vmem:[%s1105 + $0x10] sm:$0xff]
        %v1109 = vld [vmem:[%s1105 + $0x18] sm:$0x33]
        %v1114 = vunpack.c.l.b16 %v1106
        %v1115 = vunpack.c.h.b16 %v1106
        %v1116 = vunpack.c.l.b16 %v1107
        %v1117 = vunpack.c.h.b16 %v1107
        %v1118 = vunpack.c.l.b16 %v1108
        %v1119 = vunpack.c.h.b16 %v1108
        %v1120 = vunpack.c.l.b16 %v1109
        %v1121 = vunpack.c.h.b16 %v1109
        %v1122 = vpack.c.b16 %v1116, %v1114
        %v1123 = vpack.c.b16 %v1117, %v1115
        %v1124 = vpack.c.b16 %v1120, %v1118
        %v1125 = vpack.c.b16 %v1121, %v1119
        %v1129 = vsel %vm734, %v1124, 0
        %v1132 = vsel %vm734, %v1125, 0
        %1134 = vmatprep.subr.bf16.mxu0 %v1123
        %1135 = vmatpush1.bf16.msra.mxu0 %v1122
        %1136 = vmatprep.subr.bf16.mxu0 %v1132
        %1137 = vmatpush1.bf16.msra.mxu0 %v1129
        %1138 = vmatprep.subr.bf16.mxu0 0
        %1139 = vmatpush1.bf16.msra.mxu0 0
        %1140 = vmatprep.subr.bf16.mxu0 0
        %1141 = vmatpush1.bf16.msra.mxu0 0
        %1142 = vmatprep.subr.bf16.mxu0 0
        %1143 = vmatpush1.bf16.msra.mxu0 0
        %1144 = vmatprep.subr.bf16.mxu0 0
        %1145 = vmatpush1.bf16.msra.mxu0 0
        %1146 = vmatprep.subr.bf16.mxu0 0
        %1147 = vmatpush1.bf16.msra.mxu0 0
        %1148 = vmatprep.subr.bf16.mxu0 0
        %1149 = vmatpush1.bf16.msra.mxu0 0
        %1150 = vmatprep.subr.bf16.mxu0 0
        %1151 = vmatpush1.bf16.msra.mxu0 0
        %1152 = vmatprep.subr.bf16.mxu0 0
        %1153 = vmatpush1.bf16.msra.mxu0 0
        %1154 = vmatprep.subr.bf16.mxu0 0
        %1155 = vmatpush1.bf16.msra.mxu0 0
        %1156 = vmatprep.subr.bf16.mxu0 0
        %1157 = vmatpush1.bf16.msra.mxu0 0
        %1158 = vmatprep.subr.bf16.mxu0 0
        %1159 = vmatpush1.bf16.msra.mxu0 0
        %1160 = vmatprep.subr.bf16.mxu0 0
        %1161 = vmatpush1.bf16.msra.mxu0 0
        %1162 = vmatprep.subr.bf16.mxu0 0
        %1163 = vmatpush1.bf16.msra.mxu0 0
        %1164 = vmatprep.subr.bf16.mxu0 0
        %1165 = vmatpush1.bf16.msra.mxu0 0
        %1166 = vmatprep.mubr.bf16.mxu0 0
        %1167 = vmatmul.mubr.bf16.gmra.mrb[0].mxu0 %v732
        %v1168 = vpop.f32.mrb[0].mxu0
        %v1169 = vadd.f32 0.0, %v1168
        %v1170 = vpop.f32.mrb[0].mxu0
        %v1171 = vadd.f32 0.0, %v1170
        %v1172 = vpop.f32.mrb[0].mxu0
        %v1173 = vadd.f32 0.0, %v1172
        %v1174 = vpop.f32.mrb[0].mxu0
        %v1175 = vadd.f32 0.0, %v1174
        %1176 = vdwg.mxu0
        %v1181 = vunpack.c.l.b16 %v1101
        %v1182 = vunpack.c.h.b16 %v1101
        %v1183 = vunpack.c.l.b16 %v1102
        %v1184 = vunpack.c.h.b16 %v1102
        %v1185 = vunpack.c.l.b16 %v1103
        %v1186 = vunpack.c.h.b16 %v1103
        %v1187 = vunpack.c.l.b16 %v1104
        %v1188 = vunpack.c.h.b16 %v1104
        %v1189 = vpack.c.b16 %v1183, %v1181
        %v1190 = vpack.c.b16 %v1184, %v1182
        %v1191 = vpack.c.b16 %v1187, %v1185
        %v1192 = vpack.c.b16 %v1188, %v1186
        %v1196 = vsel %vm734, %v1191, 0
        %v1199 = vsel %vm734, %v1192, 0
        %1201 = vmatprep.subr.bf16.mxu0 %v1190
        %1202 = vmatpush1.bf16.msra.mxu0 %v1189
        %1203 = vmatprep.subr.bf16.mxu0 %v1199
        %1204 = vmatpush1.bf16.msra.mxu0 %v1196
        %1205 = vmatprep.subr.bf16.mxu0 0
        %1206 = vmatpush1.bf16.msra.mxu0 0
        %1207 = vmatprep.subr.bf16.mxu0 0
        %1208 = vmatpush1.bf16.msra.mxu0 0
        %1209 = vmatprep.subr.bf16.mxu0 0
        %1210 = vmatpush1.bf16.msra.mxu0 0
        %1211 = vmatprep.subr.bf16.mxu0 0
        %1212 = vmatpush1.bf16.msra.mxu0 0
        %1213 = vmatprep.subr.bf16.mxu0 0
        %1214 = vmatpush1.bf16.msra.mxu0 0
        %1215 = vmatprep.subr.bf16.mxu0 0
        %1216 = vmatpush1.bf16.msra.mxu0 0
        %1217 = vmatprep.subr.bf16.mxu0 0
        %1218 = vmatpush1.bf16.msra.mxu0 0
        %1219 = vmatprep.subr.bf16.mxu0 0
        %1220 = vmatpush1.bf16.msra.mxu0 0
        %1221 = vmatprep.subr.bf16.mxu0 0
        %1222 = vmatpush1.bf16.msra.mxu0 0
        %1223 = vmatprep.subr.bf16.mxu0 0
        %1224 = vmatpush1.bf16.msra.mxu0 0
        %1225 = vmatprep.subr.bf16.mxu0 0
        %1226 = vmatpush1.bf16.msra.mxu0 0
        %1227 = vmatprep.subr.bf16.mxu0 0
        %1228 = vmatpush1.bf16.msra.mxu0 0
        %1229 = vmatprep.subr.bf16.mxu0 0
        %1230 = vmatpush1.bf16.msra.mxu0 0
        %1231 = vmatprep.subr.bf16.mxu0 0
        %1232 = vmatpush1.bf16.msra.mxu0 0
        %1233 = vmatprep.mubr.bf16.mxu0 0
        %1234 = vmatmul.mubr.bf16.gmra.mrb[0].mxu0 %v803
        %v1235 = vpop.f32.mrb[0].mxu0
        %v1236 = vadd.f32 %v1169, %v1235
        %v1237 = vpop.f32.mrb[0].mxu0
        %v1238 = vadd.f32 %v1171, %v1237
        %v1239 = vpop.f32.mrb[0].mxu0
        %v1240 = vadd.f32 %v1173, %v1239
        %v1241 = vpop.f32.mrb[0].mxu0
        %v1242 = vadd.f32 %v1175, %v1241
        %1243 = vdwg.mxu0
        %s1244 = scalar_lea.vmem %s2, 224
        %v1245 = vld [vmem:[%s1244] sm:$0xff]
        %v1246 = vld [vmem:[%s1244 + $0x8] sm:$0xff]
        %v1247 = vld [vmem:[%s1244 + $0x10] sm:$0xff]
        %v1248 = vld [vmem:[%s1244 + $0x18] sm:$0x33]
        %v1253 = vunpack.c.l.b16 %v1245
        %v1254 = vunpack.c.h.b16 %v1245
        %v1255 = vunpack.c.l.b16 %v1246
        %v1256 = vunpack.c.h.b16 %v1246
        %v1257 = vunpack.c.l.b16 %v1247
        %v1258 = vunpack.c.h.b16 %v1247
        %v1259 = vunpack.c.l.b16 %v1248
        %v1260 = vunpack.c.h.b16 %v1248
        %v1261 = vpack.c.b16 %v1255, %v1253
        %v1262 = vpack.c.b16 %v1256, %v1254
        %v1263 = vpack.c.b16 %v1259, %v1257
        %v1264 = vpack.c.b16 %v1260, %v1258
        %v1268 = vsel %vm734, %v1263, 0
        %v1271 = vsel %vm734, %v1264, 0
        %1273 = vmatprep.subr.bf16.mxu0 %v1262
        %1274 = vmatpush1.bf16.msra.mxu0 %v1261
        %1275 = vmatprep.subr.bf16.mxu0 %v1271
        %1276 = vmatpush1.bf16.msra.mxu0 %v1268
        %1277 = vmatprep.subr.bf16.mxu0 0
        %1278 = vmatpush1.bf16.msra.mxu0 0
        %1279 = vmatprep.subr.bf16.mxu0 0
        %1280 = vmatpush1.bf16.msra.mxu0 0
        %1281 = vmatprep.subr.bf16.mxu0 0
        %1282 = vmatpush1.bf16.msra.mxu0 0
        %1283 = vmatprep.subr.bf16.mxu0 0
        %1284 = vmatpush1.bf16.msra.mxu0 0
        %1285 = vmatprep.subr.bf16.mxu0 0
        %1286 = vmatpush1.bf16.msra.mxu0 0
        %1287 = vmatprep.subr.bf16.mxu0 0
        %1288 = vmatpush1.bf16.msra.mxu0 0
        %1289 = vmatprep.subr.bf16.mxu0 0
        %1290 = vmatpush1.bf16.msra.mxu0 0
        %1291 = vmatprep.subr.bf16.mxu0 0
        %1292 = vmatpush1.bf16.msra.mxu0 0
        %1293 = vmatprep.subr.bf16.mxu0 0
        %1294 = vmatpush1.bf16.msra.mxu0 0
        %1295 = vmatprep.subr.bf16.mxu0 0
        %1296 = vmatpush1.bf16.msra.mxu0 0
        %1297 = vmatprep.subr.bf16.mxu0 0
        %1298 = vmatpush1.bf16.msra.mxu0 0
        %1299 = vmatprep.subr.bf16.mxu0 0
        %1300 = vmatpush1.bf16.msra.mxu0 0
        %1301 = vmatprep.subr.bf16.mxu0 0
        %1302 = vmatpush1.bf16.msra.mxu0 0
        %1303 = vmatprep.subr.bf16.mxu0 0
        %1304 = vmatpush1.bf16.msra.mxu0 0
        %1305 = vmatprep.mubr.bf16.mxu0 0
        %1306 = vmatmul.mubr.bf16.gmra.mrb[0].mxu0 %v881
        %v1307 = vpop.f32.mrb[0].mxu0
        %v1308 = vadd.f32 0.0, %v1307
        %v1309 = vpop.f32.mrb[0].mxu0
        %v1310 = vadd.f32 0.0, %v1309
        %v1311 = vpop.f32.mrb[0].mxu0
        %v1312 = vadd.f32 0.0, %v1311
        %v1313 = vpop.f32.mrb[0].mxu0
        %v1314 = vadd.f32 0.0, %v1313
        %1315 = vdwg.mxu0
        %v1316 = vadd.f32 %v1236, %v1308
        %v1317 = vadd.f32 %v1238, %v1310
        %v1318 = vadd.f32 %v1240, %v1312
        %v1319 = vadd.f32 %v1242, %v1314
        %s1320 = scalar_lea.vmem %s2, 256
        %v1321 = vld [vmem:[%s1320] sm:$0xff]
        %v1322 = vld [vmem:[%s1320 + $0x8] sm:$0xff]
        %v1323 = vld [vmem:[%s1320 + $0x10] sm:$0xff]
        %v1324 = vld [vmem:[%s1320 + $0x18] sm:$0x33]
        %v1329 = vunpack.c.l.b16 %v1321
        %v1330 = vunpack.c.h.b16 %v1321
        %v1331 = vunpack.c.l.b16 %v1322
        %v1332 = vunpack.c.h.b16 %v1322
        %v1333 = vunpack.c.l.b16 %v1323
        %v1334 = vunpack.c.h.b16 %v1323
        %v1335 = vunpack.c.l.b16 %v1324
        %v1336 = vunpack.c.h.b16 %v1324
        %v1337 = vpack.c.b16 %v1331, %v1329
        %v1338 = vpack.c.b16 %v1332, %v1330
        %v1339 = vpack.c.b16 %v1335, %v1333
        %v1340 = vpack.c.b16 %v1336, %v1334
        %v1344 = vsel %vm734, %v1339, 0
        %v1347 = vsel %vm734, %v1340, 0
        %1349 = vmatprep.subr.bf16.mxu0 %v1338
        %1350 = vmatpush1.bf16.msra.mxu0 %v1337
        %1351 = vmatprep.subr.bf16.mxu0 %v1347
        %1352 = vmatpush1.bf16.msra.mxu0 %v1344
        %1353 = vmatprep.subr.bf16.mxu0 0
        %1354 = vmatpush1.bf16.msra.mxu0 0
        %1355 = vmatprep.subr.bf16.mxu0 0
        %1356 = vmatpush1.bf16.msra.mxu0 0
        %1357 = vmatprep.subr.bf16.mxu0 0
        %1358 = vmatpush1.bf16.msra.mxu0 0
        %1359 = vmatprep.subr.bf16.mxu0 0
        %1360 = vmatpush1.bf16.msra.mxu0 0
        %1361 = vmatprep.subr.bf16.mxu0 0
        %1362 = vmatpush1.bf16.msra.mxu0 0
        %1363 = vmatprep.subr.bf16.mxu0 0
        %1364 = vmatpush1.bf16.msra.mxu0 0
        %1365 = vmatprep.subr.bf16.mxu0 0
        %1366 = vmatpush1.bf16.msra.mxu0 0
        %1367 = vmatprep.subr.bf16.mxu0 0
        %1368 = vmatpush1.bf16.msra.mxu0 0
        %1369 = vmatprep.subr.bf16.mxu0 0
        %1370 = vmatpush1.bf16.msra.mxu0 0
        %1371 = vmatprep.subr.bf16.mxu0 0
        %1372 = vmatpush1.bf16.msra.mxu0 0
        %1373 = vmatprep.subr.bf16.mxu0 0
        %1374 = vmatpush1.bf16.msra.mxu0 0
        %1375 = vmatprep.subr.bf16.mxu0 0
        %1376 = vmatpush1.bf16.msra.mxu0 0
        %1377 = vmatprep.subr.bf16.mxu0 0
        %1378 = vmatpush1.bf16.msra.mxu0 0
        %1379 = vmatprep.subr.bf16.mxu0 0
        %1380 = vmatpush1.bf16.msra.mxu0 0
        %1381 = vmatprep.mubr.bf16.mxu0 0
        %1382 = vmatmul.mubr.bf16.gmra.mrb[0].mxu0 %v963
        %v1383 = vpop.f32.mrb[0].mxu0
        %v1384 = vadd.f32 0.0, %v1383
        %v1385 = vpop.f32.mrb[0].mxu0
        %v1386 = vadd.f32 0.0, %v1385
        %v1387 = vpop.f32.mrb[0].mxu0
        %v1388 = vadd.f32 0.0, %v1387
        %v1389 = vpop.f32.mrb[0].mxu0
        %v1390 = vadd.f32 0.0, %v1389
        %1391 = vdwg.mxu0
        %v1392 = vadd.f32 %v1316, %v1384
        %v1393 = vadd.f32 %v1317, %v1386
        %v1394 = vadd.f32 %v1318, %v1388
        %v1395 = vadd.f32 %v1319, %v1390
        %s1396 = scalar_lea.vmem %s2, 288
        %v1397 = vld [vmem:[%s1396] sm:$0xff]
        %v1398 = vld [vmem:[%s1396 + $0x8] sm:$0xff]
        %v1399 = vld [vmem:[%s1396 + $0x10] sm:$0xff]
        %v1400 = vld [vmem:[%s1396 + $0x18] sm:$0x33]
        %v1405 = vunpack.c.l.b16 %v1397
        %v1406 = vunpack.c.h.b16 %v1397
        %v1407 = vunpack.c.l.b16 %v1398
        %v1408 = vunpack.c.h.b16 %v1398
        %v1409 = vunpack.c.l.b16 %v1399
        %v1410 = vunpack.c.h.b16 %v1399
        %v1411 = vunpack.c.l.b16 %v1400
        %v1412 = vunpack.c.h.b16 %v1400
        %v1413 = vpack.c.b16 %v1407, %v1405
        %v1414 = vpack.c.b16 %v1408, %v1406
        %v1415 = vpack.c.b16 %v1411, %v1409
        %v1416 = vpack.c.b16 %v1412, %v1410
        %v1420 = vsel %vm734, %v1415, 0
        %v1423 = vsel %vm734, %v1416, 0
        %1425 = vmatprep.subr.bf16.mxu0 %v1414
        %1426 = vmatpush1.bf16.msra.mxu0 %v1413
        %1427 = vmatprep.subr.bf16.mxu0 %v1423
        %1428 = vmatpush1.bf16.msra.mxu0 %v1420
        %1429 = vmatprep.subr.bf16.mxu0 0
        %1430 = vmatpush1.bf16.msra.mxu0 0
        %1431 = vmatprep.subr.bf16.mxu0 0
        %1432 = vmatpush1.bf16.msra.mxu0 0
        %1433 = vmatprep.subr.bf16.mxu0 0
        %1434 = vmatpush1.bf16.msra.mxu0 0
        %1435 = vmatprep.subr.bf16.mxu0 0
        %1436 = vmatpush1.bf16.msra.mxu0 0
        %1437 = vmatprep.subr.bf16.mxu0 0
        %1438 = vmatpush1.bf16.msra.mxu0 0
        %1439 = vmatprep.subr.bf16.mxu0 0
        %1440 = vmatpush1.bf16.msra.mxu0 0
        %1441 = vmatprep.subr.bf16.mxu0 0
        %1442 = vmatpush1.bf16.msra.mxu0 0
        %1443 = vmatprep.subr.bf16.mxu0 0
        %1444 = vmatpush1.bf16.msra.mxu0 0
        %1445 = vmatprep.subr.bf16.mxu0 0
        %1446 = vmatpush1.bf16.msra.mxu0 0
        %1447 = vmatprep.subr.bf16.mxu0 0
        %1448 = vmatpush1.bf16.msra.mxu0 0
        %1449 = vmatprep.subr.bf16.mxu0 0
        %1450 = vmatpush1.bf16.msra.mxu0 0
        %1451 = vmatprep.subr.bf16.mxu0 0
        %1452 = vmatpush1.bf16.msra.mxu0 0
        %1453 = vmatprep.subr.bf16.mxu0 0
        %1454 = vmatpush1.bf16.msra.mxu0 0
        %1455 = vmatprep.subr.bf16.mxu0 0
        %1456 = vmatpush1.bf16.msra.mxu0 0
        %1457 = vmatprep.mubr.bf16.mxu0 0
        %1458 = vmatmul.mubr.bf16.gmra.mrb[0].mxu0 %v1045
        %v1459 = vpop.f32.mrb[0].mxu0
        %v1460 = vadd.f32 0.0, %v1459
        %v1461 = vpop.f32.mrb[0].mxu0
        %v1462 = vadd.f32 0.0, %v1461
        %v1463 = vpop.f32.mrb[0].mxu0
        %v1464 = vadd.f32 0.0, %v1463
        %v1465 = vpop.f32.mrb[0].mxu0
        %v1466 = vadd.f32 0.0, %v1465
        %1467 = vdwg.mxu0
        %v1468 = vadd.f32 %v1392, %v1460
        %v1469 = vadd.f32 %v1393, %v1462
        %v1470 = vadd.f32 %v1394, %v1464
        %v1471 = vadd.f32 %v1395, %v1466
        %v1472 = vmax.f32 %v1096, %v1468
        %v1473 = vmax.f32 %v1097, %v1469
        %v1474 = vmax.f32 %v1098, %v1470
        %v1475 = vmax.f32 %v1099, %v1471
        %1476 = vmatprep.subr.bf16.mxu0 %v725
        %1477 = vmatpush1.bf16.msra.mxu0 %v724
        %1478 = vmatprep.subr.bf16.mxu0 %v739
        %1479 = vmatpush1.bf16.msra.mxu0 %v736
        %1480 = vmatprep.subr.bf16.mxu0 0
        %1481 = vmatpush1.bf16.msra.mxu0 0
        %1482 = vmatprep.subr.bf16.mxu0 0
        %1483 = vmatpush1.bf16.msra.mxu0 0
        %1484 = vmatprep.subr.bf16.mxu0 0
        %1485 = vmatpush1.bf16.msra.mxu0 0
        %1486 = vmatprep.subr.bf16.mxu0 0
        %1487 = vmatpush1.bf16.msra.mxu0 0
        %1488 = vmatprep.subr.bf16.mxu0 0
        %1489 = vmatpush1.bf16.msra.mxu0 0
        %1490 = vmatprep.subr.bf16.mxu0 0
        %1491 = vmatpush1.bf16.msra.mxu0 0
        %1492 = vmatprep.subr.bf16.mxu0 0
        %1493 = vmatpush1.bf16.msra.mxu0 0
        %1494 = vmatprep.subr.bf16.mxu0 0
        %1495 = vmatpush1.bf16.msra.mxu0 0
        %1496 = vmatprep.subr.bf16.mxu0 0
        %1497 = vmatpush1.bf16.msra.mxu0 0
        %1498 = vmatprep.subr.bf16.mxu0 0
        %1499 = vmatpush1.bf16.msra.mxu0 0
        %1500 = vmatprep.subr.bf16.mxu0 0
        %1501 = vmatpush1.bf16.msra.mxu0 0
        %1502 = vmatprep.subr.bf16.mxu0 0
        %1503 = vmatpush1.bf16.msra.mxu0 0
        %1504 = vmatprep.subr.bf16.mxu0 0
        %1505 = vmatpush1.bf16.msra.mxu0 0
        %1506 = vmatprep.subr.bf16.mxu0 0
        %1507 = vmatpush1.bf16.msra.mxu0 0
        %1508 = vmatprep.mubr.bf16.mxu0 0
        %1509 = vmatmul.mubr.bf16.gmra.mrb[0].mxu0 %v881
        %v1510 = vpop.f32.mrb[0].mxu0
        %v1511 = vadd.f32 0.0, %v1510
        %v1512 = vpop.f32.mrb[0].mxu0
        %v1513 = vadd.f32 0.0, %v1512
        %v1514 = vpop.f32.mrb[0].mxu0
        %v1515 = vadd.f32 0.0, %v1514
        %v1516 = vpop.f32.mrb[0].mxu0
        %v1517 = vadd.f32 0.0, %v1516
        %1518 = vdwg.mxu0
        %1519 = vmatprep.subr.bf16.mxu0 %v797
        %1520 = vmatpush1.bf16.msra.mxu0 %v796
        %1521 = vmatprep.subr.bf16.mxu0 %v809
        %1522 = vmatpush1.bf16.msra.mxu0 %v806
        %1523 = vmatprep.subr.bf16.mxu0 0
        %1524 = vmatpush1.bf16.msra.mxu0 0
        %1525 = vmatprep.subr.bf16.mxu0 0
        %1526 = vmatpush1.bf16.msra.mxu0 0
        %1527 = vmatprep.subr.bf16.mxu0 0
        %1528 = vmatpush1.bf16.msra.mxu0 0
        %1529 = vmatprep.subr.bf16.mxu0 0
        %1530 = vmatpush1.bf16.msra.mxu0 0
        %1531 = vmatprep.subr.bf16.mxu0 0
        %1532 = vmatpush1.bf16.msra.mxu0 0
        %1533 = vmatprep.subr.bf16.mxu0 0
        %1534 = vmatpush1.bf16.msra.mxu0 0
        %1535 = vmatprep.subr.bf16.mxu0 0
        %1536 = vmatpush1.bf16.msra.mxu0 0
        %1537 = vmatprep.subr.bf16.mxu0 0
        %1538 = vmatpush1.bf16.msra.mxu0 0
        %1539 = vmatprep.subr.bf16.mxu0 0
        %1540 = vmatpush1.bf16.msra.mxu0 0
        %1541 = vmatprep.subr.bf16.mxu0 0
        %1542 = vmatpush1.bf16.msra.mxu0 0
        %1543 = vmatprep.subr.bf16.mxu0 0
        %1544 = vmatpush1.bf16.msra.mxu0 0
        %1545 = vmatprep.subr.bf16.mxu0 0
        %1546 = vmatpush1.bf16.msra.mxu0 0
        %1547 = vmatprep.subr.bf16.mxu0 0
        %1548 = vmatpush1.bf16.msra.mxu0 0
        %1549 = vmatprep.subr.bf16.mxu0 0
        %1550 = vmatpush1.bf16.msra.mxu0 0
        %1551 = vmatprep.mubr.bf16.mxu0 0
        %1552 = vmatmul.mubr.bf16.gmra.mrb[0].mxu0 %v732
        %v1553 = vpop.f32.mrb[0].mxu0
        %v1554 = vadd.f32 %v1511, %v1553
        %v1555 = vpop.f32.mrb[0].mxu0
        %v1556 = vadd.f32 %v1513, %v1555
        %v1557 = vpop.f32.mrb[0].mxu0
        %v1558 = vadd.f32 %v1515, %v1557
        %v1559 = vpop.f32.mrb[0].mxu0
        %v1560 = vadd.f32 %v1517, %v1559
        %1561 = vdwg.mxu0
        %1562 = vmatprep.subr.bf16.mxu0 %v875
        %1563 = vmatpush1.bf16.msra.mxu0 %v874
        %1564 = vmatprep.subr.bf16.mxu0 %v887
        %1565 = vmatpush1.bf16.msra.mxu0 %v884
        %1566 = vmatprep.subr.bf16.mxu0 0
        %1567 = vmatpush1.bf16.msra.mxu0 0
        %1568 = vmatprep.subr.bf16.mxu0 0
        %1569 = vmatpush1.bf16.msra.mxu0 0
        %1570 = vmatprep.subr.bf16.mxu0 0
        %1571 = vmatpush1.bf16.msra.mxu0 0
        %1572 = vmatprep.subr.bf16.mxu0 0
        %1573 = vmatpush1.bf16.msra.mxu0 0
        %1574 = vmatprep.subr.bf16.mxu0 0
        %1575 = vmatpush1.bf16.msra.mxu0 0
        %1576 = vmatprep.subr.bf16.mxu0 0
        %1577 = vmatpush1.bf16.msra.mxu0 0
        %1578 = vmatprep.subr.bf16.mxu0 0
        %1579 = vmatpush1.bf16.msra.mxu0 0
        %1580 = vmatprep.subr.bf16.mxu0 0
        %1581 = vmatpush1.bf16.msra.mxu0 0
        %1582 = vmatprep.subr.bf16.mxu0 0
        %1583 = vmatpush1.bf16.msra.mxu0 0
        %1584 = vmatprep.subr.bf16.mxu0 0
        %1585 = vmatpush1.bf16.msra.mxu0 0
        %1586 = vmatprep.subr.bf16.mxu0 0
        %1587 = vmatpush1.bf16.msra.mxu0 0
        %1588 = vmatprep.subr.bf16.mxu0 0
        %1589 = vmatpush1.bf16.msra.mxu0 0
        %1590 = vmatprep.subr.bf16.mxu0 0
        %1591 = vmatpush1.bf16.msra.mxu0 0
        %1592 = vmatprep.subr.bf16.mxu0 0
        %1593 = vmatpush1.bf16.msra.mxu0 0
        %1594 = vmatprep.mubr.bf16.mxu0 0
        %1595 = vmatmul.mubr.bf16.gmra.mrb[0].mxu0 %v963
        %v1596 = vpop.f32.mrb[0].mxu0
        %v1597 = vadd.f32 0.0, %v1596
        %v1598 = vpop.f32.mrb[0].mxu0
        %v1599 = vadd.f32 0.0, %v1598
        %v1600 = vpop.f32.mrb[0].mxu0
        %v1601 = vadd.f32 0.0, %v1600
        %v1602 = vpop.f32.mrb[0].mxu0
        %v1603 = vadd.f32 0.0, %v1602
        %1604 = vdwg.mxu0
        %v1605 = vadd.f32 %v1554, %v1597
        %v1606 = vadd.f32 %v1556, %v1599
        %v1607 = vadd.f32 %v1558, %v1601
        %v1608 = vadd.f32 %v1560, %v1603
        %1609 = vmatprep.subr.bf16.mxu0 %v957
        %1610 = vmatpush1.bf16.msra.mxu0 %v956
        %1611 = vmatprep.subr.bf16.mxu0 %v969
        %1612 = vmatpush1.bf16.msra.mxu0 %v966
        %1613 = vmatprep.subr.bf16.mxu0 0
        %1614 = vmatpush1.bf16.msra.mxu0 0
        %1615 = vmatprep.subr.bf16.mxu0 0
        %1616 = vmatpush1.bf16.msra.mxu0 0
        %1617 = vmatprep.subr.bf16.mxu0 0
        %1618 = vmatpush1.bf16.msra.mxu0 0
        %1619 = vmatprep.subr.bf16.mxu0 0
        %1620 = vmatpush1.bf16.msra.mxu0 0
        %1621 = vmatprep.subr.bf16.mxu0 0
        %1622 = vmatpush1.bf16.msra.mxu0 0
        %1623 = vmatprep.subr.bf16.mxu0 0
        %1624 = vmatpush1.bf16.msra.mxu0 0
        %1625 = vmatprep.subr.bf16.mxu0 0
        %1626 = vmatpush1.bf16.msra.mxu0 0
        %1627 = vmatprep.subr.bf16.mxu0 0
        %1628 = vmatpush1.bf16.msra.mxu0 0
        %1629 = vmatprep.subr.bf16.mxu0 0
        %1630 = vmatpush1.bf16.msra.mxu0 0
        %1631 = vmatprep.subr.bf16.mxu0 0
        %1632 = vmatpush1.bf16.msra.mxu0 0
        %1633 = vmatprep.subr.bf16.mxu0 0
        %1634 = vmatpush1.bf16.msra.mxu0 0
        %1635 = vmatprep.subr.bf16.mxu0 0
        %1636 = vmatpush1.bf16.msra.mxu0 0
        %1637 = vmatprep.subr.bf16.mxu0 0
        %1638 = vmatpush1.bf16.msra.mxu0 0
        %1639 = vmatprep.subr.bf16.mxu0 0
        %1640 = vmatpush1.bf16.msra.mxu0 0
        %1641 = vmatprep.mubr.bf16.mxu0 0
        %1642 = vmatmul.mubr.bf16.gmra.mrb[0].mxu0 %v1045
        %v1643 = vpop.f32.mrb[0].mxu0
        %v1644 = vadd.f32 0.0, %v1643
        %v1645 = vpop.f32.mrb[0].mxu0
        %v1646 = vadd.f32 0.0, %v1645
        %v1647 = vpop.f32.mrb[0].mxu0
        %v1648 = vadd.f32 0.0, %v1647
        %v1649 = vpop.f32.mrb[0].mxu0
        %v1650 = vadd.f32 0.0, %v1649
        %1651 = vdwg.mxu0
        %v1652 = vadd.f32 %v1605, %v1644
        %v1653 = vadd.f32 %v1606, %v1646
        %v1654 = vadd.f32 %v1607, %v1648
        %v1655 = vadd.f32 %v1608, %v1650
        %v1656 = vld [vmem:[%s703 + $0x2] sm:$0xff]
        %v1657 = vld [vmem:[%s703 + $0xa] sm:$0xf]
        %v1658 = vpack.c.bf16 %v1657, %v1656
        %v1660 = vsel %vm730, %v1658, 0
        %1662 = vmatprep.subr.bf16.mxu0 %v1039
        %1663 = vmatpush1.bf16.msra.mxu0 %v1038
        %1664 = vmatprep.subr.bf16.mxu0 %v1051
        %1665 = vmatpush1.bf16.msra.mxu0 %v1048
        %1666 = vmatprep.subr.bf16.mxu0 0
        %1667 = vmatpush1.bf16.msra.mxu0 0
        %1668 = vmatprep.subr.bf16.mxu0 0
        %1669 = vmatpush1.bf16.msra.mxu0 0
        %1670 = vmatprep.subr.bf16.mxu0 0
        %1671 = vmatpush1.bf16.msra.mxu0 0
        %1672 = vmatprep.subr.bf16.mxu0 0
        %1673 = vmatpush1.bf16.msra.mxu0 0
        %1674 = vmatprep.subr.bf16.mxu0 0
        %1675 = vmatpush1.bf16.msra.mxu0 0
        %1676 = vmatprep.subr.bf16.mxu0 0
        %1677 = vmatpush1.bf16.msra.mxu0 0
        %1678 = vmatprep.subr.bf16.mxu0 0
        %1679 = vmatpush1.bf16.msra.mxu0 0
        %1680 = vmatprep.subr.bf16.mxu0 0
        %1681 = vmatpush1.bf16.msra.mxu0 0
        %1682 = vmatprep.subr.bf16.mxu0 0
        %1683 = vmatpush1.bf16.msra.mxu0 0
        %1684 = vmatprep.subr.bf16.mxu0 0
        %1685 = vmatpush1.bf16.msra.mxu0 0
        %1686 = vmatprep.subr.bf16.mxu0 0
        %1687 = vmatpush1.bf16.msra.mxu0 0
        %1688 = vmatprep.subr.bf16.mxu0 0
        %1689 = vmatpush1.bf16.msra.mxu0 0
        %1690 = vmatprep.subr.bf16.mxu0 0
        %1691 = vmatpush1.bf16.msra.mxu0 0
        %1692 = vmatprep.subr.bf16.mxu0 0
        %1693 = vmatpush1.bf16.msra.mxu0 0
        %1694 = vmatprep.mubr.bf16.mxu0 0
        %1695 = vmatmul.mubr.bf16.gmra.mrb[0].mxu0 %v1660
        %v1696 = vpop.f32.mrb[0].mxu0
        %v1697 = vadd.f32 0.0, %v1696
        %v1698 = vpop.f32.mrb[0].mxu0
        %v1699 = vadd.f32 0.0, %v1698
        %v1700 = vpop.f32.mrb[0].mxu0
        %v1701 = vadd.f32 0.0, %v1700
        %v1702 = vpop.f32.mrb[0].mxu0
        %v1703 = vadd.f32 0.0, %v1702
        %1704 = vdwg.mxu0
        %v1705 = vadd.f32 %v1652, %v1697
        %v1706 = vadd.f32 %v1653, %v1699
        %v1707 = vadd.f32 %v1654, %v1701
        %v1708 = vadd.f32 %v1655, %v1703
        %v1709 = vmax.f32 %v1472, %v1705
        %v1710 = vmax.f32 %v1473, %v1706
        %v1711 = vmax.f32 %v1474, %v1707
        %v1712 = vmax.f32 %v1475, %v1708
        %1713 = vmatprep.subr.bf16.mxu0 %v1123
        %1714 = vmatpush1.bf16.msra.mxu0 %v1122
        %1715 = vmatprep.subr.bf16.mxu0 %v1132
        %1716 = vmatpush1.bf16.msra.mxu0 %v1129
        %1717 = vmatprep.subr.bf16.mxu0 0
        %1718 = vmatpush1.bf16.msra.mxu0 0
        %1719 = vmatprep.subr.bf16.mxu0 0
        %1720 = vmatpush1.bf16.msra.mxu0 0
        %1721 = vmatprep.subr.bf16.mxu0 0
        %1722 = vmatpush1.bf16.msra.mxu0 0
        %1723 = vmatprep.subr.bf16.mxu0 0
        %1724 = vmatpush1.bf16.msra.mxu0 0
        %1725 = vmatprep.subr.bf16.mxu0 0
        %1726 = vmatpush1.bf16.msra.mxu0 0
        %1727 = vmatprep.subr.bf16.mxu0 0
        %1728 = vmatpush1.bf16.msra.mxu0 0
        %1729 = vmatprep.subr.bf16.mxu0 0
        %1730 = vmatpush1.bf16.msra.mxu0 0
        %1731 = vmatprep.subr.bf16.mxu0 0
        %1732 = vmatpush1.bf16.msra.mxu0 0
        %1733 = vmatprep.subr.bf16.mxu0 0
        %1734 = vmatpush1.bf16.msra.mxu0 0
        %1735 = vmatprep.subr.bf16.mxu0 0
        %1736 = vmatpush1.bf16.msra.mxu0 0
        %1737 = vmatprep.subr.bf16.mxu0 0
        %1738 = vmatpush1.bf16.msra.mxu0 0
        %1739 = vmatprep.subr.bf16.mxu0 0
        %1740 = vmatpush1.bf16.msra.mxu0 0
        %1741 = vmatprep.subr.bf16.mxu0 0
        %1742 = vmatpush1.bf16.msra.mxu0 0
        %1743 = vmatprep.subr.bf16.mxu0 0
        %1744 = vmatpush1.bf16.msra.mxu0 0
        %1745 = vmatprep.mubr.bf16.mxu0 0
        %1746 = vmatmul.mubr.bf16.gmra.mrb[0].mxu0 %v881
        %v1747 = vpop.f32.mrb[0].mxu0
        %v1748 = vadd.f32 0.0, %v1747
        %v1749 = vpop.f32.mrb[0].mxu0
        %v1750 = vadd.f32 0.0, %v1749
        %v1751 = vpop.f32.mrb[0].mxu0
        %v1752 = vadd.f32 0.0, %v1751
        %v1753 = vpop.f32.mrb[0].mxu0
        %v1754 = vadd.f32 0.0, %v1753
        %1755 = vdwg.mxu0
        %1756 = vmatprep.subr.bf16.mxu0 %v1190
        %1757 = vmatpush1.bf16.msra.mxu0 %v1189
        %1758 = vmatprep.subr.bf16.mxu0 %v1199
        %1759 = vmatpush1.bf16.msra.mxu0 %v1196
        %1760 = vmatprep.subr.bf16.mxu0 0
        %1761 = vmatpush1.bf16.msra.mxu0 0
        %1762 = vmatprep.subr.bf16.mxu0 0
        %1763 = vmatpush1.bf16.msra.mxu0 0
        %1764 = vmatprep.subr.bf16.mxu0 0
        %1765 = vmatpush1.bf16.msra.mxu0 0
        %1766 = vmatprep.subr.bf16.mxu0 0
        %1767 = vmatpush1.bf16.msra.mxu0 0
        %1768 = vmatprep.subr.bf16.mxu0 0
        %1769 = vmatpush1.bf16.msra.mxu0 0
        %1770 = vmatprep.subr.bf16.mxu0 0
        %1771 = vmatpush1.bf16.msra.mxu0 0
        %1772 = vmatprep.subr.bf16.mxu0 0
        %1773 = vmatpush1.bf16.msra.mxu0 0
        %1774 = vmatprep.subr.bf16.mxu0 0
        %1775 = vmatpush1.bf16.msra.mxu0 0
        %1776 = vmatprep.subr.bf16.mxu0 0
        %1777 = vmatpush1.bf16.msra.mxu0 0
        %1778 = vmatprep.subr.bf16.mxu0 0
        %1779 = vmatpush1.bf16.msra.mxu0 0
        %1780 = vmatprep.subr.bf16.mxu0 0
        %1781 = vmatpush1.bf16.msra.mxu0 0
        %1782 = vmatprep.subr.bf16.mxu0 0
        %1783 = vmatpush1.bf16.msra.mxu0 0
        %1784 = vmatprep.subr.bf16.mxu0 0
        %1785 = vmatpush1.bf16.msra.mxu0 0
        %1786 = vmatprep.subr.bf16.mxu0 0
        %1787 = vmatpush1.bf16.msra.mxu0 0
        %1788 = vmatprep.mubr.bf16.mxu0 0
        %1789 = vmatmul.mubr.bf16.gmra.mrb[0].mxu0 %v732
        %v1790 = vpop.f32.mrb[0].mxu0
        %v1791 = vadd.f32 %v1748, %v1790
        %v1792 = vpop.f32.mrb[0].mxu0
        %v1793 = vadd.f32 %v1750, %v1792
        %v1794 = vpop.f32.mrb[0].mxu0
        %v1795 = vadd.f32 %v1752, %v1794
        %v1796 = vpop.f32.mrb[0].mxu0
        %v1797 = vadd.f32 %v1754, %v1796
        %1798 = vdwg.mxu0
        %1799 = vmatprep.subr.bf16.mxu0 %v1262
        %1800 = vmatpush1.bf16.msra.mxu0 %v1261
        %1801 = vmatprep.subr.bf16.mxu0 %v1271
        %1802 = vmatpush1.bf16.msra.mxu0 %v1268
        %1803 = vmatprep.subr.bf16.mxu0 0
        %1804 = vmatpush1.bf16.msra.mxu0 0
        %1805 = vmatprep.subr.bf16.mxu0 0
        %1806 = vmatpush1.bf16.msra.mxu0 0
        %1807 = vmatprep.subr.bf16.mxu0 0
        %1808 = vmatpush1.bf16.msra.mxu0 0
        %1809 = vmatprep.subr.bf16.mxu0 0
        %1810 = vmatpush1.bf16.msra.mxu0 0
        %1811 = vmatprep.subr.bf16.mxu0 0
        %1812 = vmatpush1.bf16.msra.mxu0 0
        %1813 = vmatprep.subr.bf16.mxu0 0
        %1814 = vmatpush1.bf16.msra.mxu0 0
        %1815 = vmatprep.subr.bf16.mxu0 0
        %1816 = vmatpush1.bf16.msra.mxu0 0
        %1817 = vmatprep.subr.bf16.mxu0 0
        %1818 = vmatpush1.bf16.msra.mxu0 0
        %1819 = vmatprep.subr.bf16.mxu0 0
        %1820 = vmatpush1.bf16.msra.mxu0 0
        %1821 = vmatprep.subr.bf16.mxu0 0
        %1822 = vmatpush1.bf16.msra.mxu0 0
        %1823 = vmatprep.subr.bf16.mxu0 0
        %1824 = vmatpush1.bf16.msra.mxu0 0
        %1825 = vmatprep.subr.bf16.mxu0 0
        %1826 = vmatpush1.bf16.msra.mxu0 0
        %1827 = vmatprep.subr.bf16.mxu0 0
        %1828 = vmatpush1.bf16.msra.mxu0 0
        %1829 = vmatprep.subr.bf16.mxu0 0
        %1830 = vmatpush1.bf16.msra.mxu0 0
        %1831 = vmatprep.mubr.bf16.mxu0 0
        %1832 = vmatmul.mubr.bf16.gmra.mrb[0].mxu0 %v963
        %v1833 = vpop.f32.mrb[0].mxu0
        %v1834 = vadd.f32 0.0, %v1833
        %v1835 = vpop.f32.mrb[0].mxu0
        %v1836 = vadd.f32 0.0, %v1835
        %v1837 = vpop.f32.mrb[0].mxu0
        %v1838 = vadd.f32 0.0, %v1837
        %v1839 = vpop.f32.mrb[0].mxu0
        %v1840 = vadd.f32 0.0, %v1839
        %1841 = vdwg.mxu0
        %v1842 = vadd.f32 %v1791, %v1834
        %v1843 = vadd.f32 %v1793, %v1836
        %v1844 = vadd.f32 %v1795, %v1838
        %v1845 = vadd.f32 %v1797, %v1840
        %1846 = vmatprep.subr.bf16.mxu0 %v1338
        %1847 = vmatpush1.bf16.msra.mxu0 %v1337
        %1848 = vmatprep.subr.bf16.mxu0 %v1347
        %1849 = vmatpush1.bf16.msra.mxu0 %v1344
        %1850 = vmatprep.subr.bf16.mxu0 0
        %1851 = vmatpush1.bf16.msra.mxu0 0
        %1852 = vmatprep.subr.bf16.mxu0 0
        %1853 = vmatpush1.bf16.msra.mxu0 0
        %1854 = vmatprep.subr.bf16.mxu0 0
        %1855 = vmatpush1.bf16.msra.mxu0 0
        %1856 = vmatprep.subr.bf16.mxu0 0
        %1857 = vmatpush1.bf16.msra.mxu0 0
        %1858 = vmatprep.subr.bf16.mxu0 0
        %1859 = vmatpush1.bf16.msra.mxu0 0
        %1860 = vmatprep.subr.bf16.mxu0 0
        %1861 = vmatpush1.bf16.msra.mxu0 0
        %1862 = vmatprep.subr.bf16.mxu0 0
        %1863 = vmatpush1.bf16.msra.mxu0 0
        %1864 = vmatprep.subr.bf16.mxu0 0
        %1865 = vmatpush1.bf16.msra.mxu0 0
        %1866 = vmatprep.subr.bf16.mxu0 0
        %1867 = vmatpush1.bf16.msra.mxu0 0
        %1868 = vmatprep.subr.bf16.mxu0 0
        %1869 = vmatpush1.bf16.msra.mxu0 0
        %1870 = vmatprep.subr.bf16.mxu0 0
        %1871 = vmatpush1.bf16.msra.mxu0 0
        %1872 = vmatprep.subr.bf16.mxu0 0
        %1873 = vmatpush1.bf16.msra.mxu0 0
        %1874 = vmatprep.subr.bf16.mxu0 0
        %1875 = vmatpush1.bf16.msra.mxu0 0
        %1876 = vmatprep.subr.bf16.mxu0 0
        %1877 = vmatpush1.bf16.msra.mxu0 0
        %1878 = vmatprep.mubr.bf16.mxu0 0
        %1879 = vmatmul.mubr.bf16.gmra.mrb[0].mxu0 %v1045
        %v1880 = vpop.f32.mrb[0].mxu0
        %v1881 = vadd.f32 0.0, %v1880
        %v1882 = vpop.f32.mrb[0].mxu0
        %v1883 = vadd.f32 0.0, %v1882
        %v1884 = vpop.f32.mrb[0].mxu0
        %v1885 = vadd.f32 0.0, %v1884
        %v1886 = vpop.f32.mrb[0].mxu0
        %v1887 = vadd.f32 0.0, %v1886
        %1888 = vdwg.mxu0
        %v1889 = vadd.f32 %v1842, %v1881
        %v1890 = vadd.f32 %v1843, %v1883
        %v1891 = vadd.f32 %v1844, %v1885
        %v1892 = vadd.f32 %v1845, %v1887
        %1893 = vmatprep.subr.bf16.mxu0 %v1414
        %1894 = vmatpush1.bf16.msra.mxu0 %v1413
        %1895 = vmatprep.subr.bf16.mxu0 %v1423
        %1896 = vmatpush1.bf16.msra.mxu0 %v1420
        %1897 = vmatprep.subr.bf16.mxu0 0
        %1898 = vmatpush1.bf16.msra.mxu0 0
        %1899 = vmatprep.subr.bf16.mxu0 0
        %1900 = vmatpush1.bf16.msra.mxu0 0
        %1901 = vmatprep.subr.bf16.mxu0 0
        %1902 = vmatpush1.bf16.msra.mxu0 0
        %1903 = vmatprep.subr.bf16.mxu0 0
        %1904 = vmatpush1.bf16.msra.mxu0 0
        %1905 = vmatprep.subr.bf16.mxu0 0
        %1906 = vmatpush1.bf16.msra.mxu0 0
        %1907 = vmatprep.subr.bf16.mxu0 0
        %1908 = vmatpush1.bf16.msra.mxu0 0
        %1909 = vmatprep.subr.bf16.mxu0 0
        %1910 = vmatpush1.bf16.msra.mxu0 0
        %1911 = vmatprep.subr.bf16.mxu0 0
        %1912 = vmatpush1.bf16.msra.mxu0 0
        %1913 = vmatprep.subr.bf16.mxu0 0
        %1914 = vmatpush1.bf16.msra.mxu0 0
        %1915 = vmatprep.subr.bf16.mxu0 0
        %1916 = vmatpush1.bf16.msra.mxu0 0
        %1917 = vmatprep.subr.bf16.mxu0 0
        %1918 = vmatpush1.bf16.msra.mxu0 0
        %1919 = vmatprep.subr.bf16.mxu0 0
        %1920 = vmatpush1.bf16.msra.mxu0 0
        %1921 = vmatprep.subr.bf16.mxu0 0
        %1922 = vmatpush1.bf16.msra.mxu0 0
        %1923 = vmatprep.subr.bf16.mxu0 0
        %1924 = vmatpush1.bf16.msra.mxu0 0
        %1925 = vmatprep.mubr.bf16.mxu0 0
        %1926 = vmatmul.mubr.bf16.gmra.mrb[0].mxu0 %v1660
        %v1927 = vpop.f32.mrb[0].mxu0
        %v1928 = vadd.f32 0.0, %v1927
        %v1929 = vpop.f32.mrb[0].mxu0
        %v1930 = vadd.f32 0.0, %v1929
        %v1931 = vpop.f32.mrb[0].mxu0
        %v1932 = vadd.f32 0.0, %v1931
        %v1933 = vpop.f32.mrb[0].mxu0
        %v1934 = vadd.f32 0.0, %v1933
        %1935 = vdwg.mxu0
        %v1936 = vadd.f32 %v1889, %v1928
        %v1937 = vadd.f32 %v1890, %v1930
        %v1938 = vadd.f32 %v1891, %v1932
        %v1939 = vadd.f32 %v1892, %v1934
        %v1940 = vmax.f32 %v1709, %v1936
        %v1941 = vmax.f32 %v1710, %v1937
        %v1942 = vmax.f32 %v1711, %v1938
        %v1943 = vmax.f32 %v1712, %v1939
        %v1944 = vld [vmem:[%s3] sm:$0x3]
        %v1946 = vlaneseq
        %v1947 = vshrl.u32 %v1946, 7
        %v1948 = vsub.s32 0, %v1947
        %v1949 = vrot.slane %v1944, %v1948
        %v1950 = vlaneseq
        %v1951 = vshrl.u32 %v1950, 7
        %v1952 = vsub.s32 1, %v1951
        %v1953 = vrot.slane %v1944, %v1952
        %v1956 = vadd.f32 %v1940, %v1949
        %v1957 = vadd.f32 %v1941, %v1953
        %v1958 = vadd.f32 %v1942, %v1949
        %v1959 = vadd.f32 %v1943, %v1953
        %v1960 = vmax.f32 %v1956, 0.0
        %v1961 = vmax.f32 %v1957, 0.0
        %v1962 = vmax.f32 %v1958, 0.0
        %v1963 = vmax.f32 %v1959, 0.0
        %v1964 = vpack.c.bf16 %v1960, %v1960
        %v1965 = vpack.c.bf16 %v1961, %v1961
        %v1966 = vld [vmem:[%s4] sm:$0xff]
        %v1967 = vld [vmem:[%s4 + $0x8] sm:$0xff]
        %v1968 = vld [vmem:[%s4 + $0x10] sm:$0xff]
        %v1969 = vld [vmem:[%s4 + $0x18] sm:$0xff]
        %v1970 = vld [vmem:[%s4 + $0x20] sm:$0xff]
        %v1971 = vld [vmem:[%s4 + $0x28] sm:$0xff]
        %v1972 = vld [vmem:[%s4 + $0x30] sm:$0xff]
        %v1973 = vld [vmem:[%s4 + $0x38] sm:$0xff]
        %v1974 = vld [vmem:[%s4 + $0x40] sm:$0xff]
        %v1975 = vld [vmem:[%s4 + $0x48] sm:$0xff]
        %v1976 = vld [vmem:[%s4 + $0x50] sm:$0xff]
        %v1977 = vld [vmem:[%s4 + $0x58] sm:$0xff]
        %v1978 = vld [vmem:[%s4 + $0x60] sm:$0xff]
        %v1979 = vld [vmem:[%s4 + $0x68] sm:$0xff]
        %v1980 = vld [vmem:[%s4 + $0x70] sm:$0xff]
        %v1981 = vld [vmem:[%s4 + $0x78] sm:$0xff]
        %v1982 = vld [vmem:[%s4 + $0x80] sm:$0xff]
        %v1983 = vld [vmem:[%s4 + $0x88] sm:$0xff]
        %v1984 = vld [vmem:[%s4 + $0x90] sm:$0xff]
        %v1985 = vld [vmem:[%s4 + $0x98] sm:$0xff]
        %v1986 = vld [vmem:[%s4 + $0xa0] sm:$0xff]
        %v1987 = vld [vmem:[%s4 + $0xa8] sm:$0xff]
        %v1988 = vld [vmem:[%s4 + $0xb0] sm:$0xff]
        %v1989 = vld [vmem:[%s4 + $0xb8] sm:$0xff]
        %v1990 = vld [vmem:[%s4 + $0xc0] sm:$0xff]
        %v1991 = vld [vmem:[%s4 + $0xc8] sm:$0xff]
        %v1992 = vld [vmem:[%s4 + $0xd0] sm:$0xff]
        %v1993 = vld [vmem:[%s4 + $0xd8] sm:$0xff]
        %v1994 = vld [vmem:[%s4 + $0xe0] sm:$0xff]
        %v1995 = vld [vmem:[%s4 + $0xe8] sm:$0xff]
        %v1996 = vpack.c.bf16 %v1962, %v1960
        %v1997 = vpack.c.bf16 %v1963, %v1961
        %s1998 = scalar_lea.vmem %s4, 240
        %v1999 = vld [vmem:[%s1998] sm:$0xff]
        %v2000 = vld [vmem:[%s1998 + $0x8] sm:$0xff]
        %v2001 = vld [vmem:[%s1998 + $0x10] sm:$0xff]
        %v2002 = vld [vmem:[%s1998 + $0x18] sm:$0xff]
        %v2003 = vld [vmem:[%s1998 + $0x20] sm:$0xff]
        %v2004 = vld [vmem:[%s1998 + $0x28] sm:$0xff]
        %v2005 = vld [vmem:[%s1998 + $0x30] sm:$0xff]
        %v2006 = vld [vmem:[%s1998 + $0x38] sm:$0xff]
        %v2007 = vld [vmem:[%s1998 + $0x40] sm:$0xff]
        %v2008 = vld [vmem:[%s1998 + $0x48] sm:$0xff]
        %v2009 = vld [vmem:[%s1998 + $0x50] sm:$0xff]
        %v2010 = vld [vmem:[%s1998 + $0x58] sm:$0xff]
        %v2011 = vld [vmem:[%s1998 + $0x60] sm:$0xff]
        %v2012 = vld [vmem:[%s1998 + $0x68] sm:$0xff]
        %v2013 = vld [vmem:[%s1998 + $0x70] sm:$0xff]
        %v2014 = vld [vmem:[%s1998 + $0x78] sm:$0xff]
        %v2015 = vld [vmem:[%s1998 + $0x80] sm:$0xff]
        %v2016 = vld [vmem:[%s1998 + $0x88] sm:$0xff]
        %v2017 = vld [vmem:[%s1998 + $0x90] sm:$0xff]
        %v2018 = vld [vmem:[%s1998 + $0x98] sm:$0xff]
        %v2019 = vld [vmem:[%s1998 + $0xa0] sm:$0xff]
        %v2020 = vld [vmem:[%s1998 + $0xa8] sm:$0xff]
        %v2021 = vld [vmem:[%s1998 + $0xb0] sm:$0xff]
        %v2022 = vld [vmem:[%s1998 + $0xb8] sm:$0xff]
        %v2023 = vld [vmem:[%s1998 + $0xc0] sm:$0xff]
        %v2024 = vld [vmem:[%s1998 + $0xc8] sm:$0xff]
        %v2025 = vld [vmem:[%s1998 + $0xd0] sm:$0xff]
        %v2026 = vld [vmem:[%s1998 + $0xd8] sm:$0xff]
        %v2027 = vld [vmem:[%s1998 + $0xe0] sm:$0xff]
        %v2028 = vld [vmem:[%s1998 + $0xe8] sm:$0xff]
        %v2030 = vshrl.u32 %v1996, 16
        %v2032 = vshll.u32 %v1996, 16
        %v2034 = vrot.slane %v2032, 1
        %v2035 = vor.u32 %v2030, %v2034
        %v2037 = vshrl.u32 %v1997, 16
        %v2039 = vshll.u32 %v1997, 16
        %v2041 = vrot.slane %v2039, 1
        %v2042 = vor.u32 %v2037, %v2041
        %v2074 = vunpack.c.l.b16 %v1999
        %v2075 = vunpack.c.h.b16 %v1999
        %v2076 = vunpack.c.l.b16 %v2000
        %v2077 = vunpack.c.h.b16 %v2000
        %v2078 = vunpack.c.l.b16 %v2001
        %v2079 = vunpack.c.h.b16 %v2001
        %v2080 = vunpack.c.l.b16 %v2002
        %v2081 = vunpack.c.h.b16 %v2002
        %v2082 = vunpack.c.l.b16 %v2003
        %v2083 = vunpack.c.h.b16 %v2003
        %v2084 = vunpack.c.l.b16 %v2004
        %v2085 = vunpack.c.h.b16 %v2004
        %v2086 = vunpack.c.l.b16 %v2005
        %v2087 = vunpack.c.h.b16 %v2005
        %v2088 = vunpack.c.l.b16 %v2006
        %v2089 = vunpack.c.h.b16 %v2006
        %v2090 = vunpack.c.l.b16 %v2007
        %v2091 = vunpack.c.h.b16 %v2007
        %v2092 = vunpack.c.l.b16 %v2008
        %v2093 = vunpack.c.h.b16 %v2008
        %v2094 = vunpack.c.l.b16 %v2009
        %v2095 = vunpack.c.h.b16 %v2009
        %v2096 = vunpack.c.l.b16 %v2010
        %v2097 = vunpack.c.h.b16 %v2010
        %v2098 = vunpack.c.l.b16 %v2011
        %v2099 = vunpack.c.h.b16 %v2011
        %v2100 = vunpack.c.l.b16 %v2012
        %v2101 = vunpack.c.h.b16 %v2012
        %v2102 = vunpack.c.l.b16 %v2013
        %v2103 = vunpack.c.h.b16 %v2013
        %v2104 = vunpack.c.l.b16 %v2014
        %v2105 = vunpack.c.h.b16 %v2014
        %v2106 = vunpack.c.l.b16 %v2015
        %v2107 = vunpack.c.h.b16 %v2015
        %v2108 = vunpack.c.l.b16 %v2016
        %v2109 = vunpack.c.h.b16 %v2016
        %v2110 = vunpack.c.l.b16 %v2017
        %v2111 = vunpack.c.h.b16 %v2017
        %v2112 = vunpack.c.l.b16 %v2018
        %v2113 = vunpack.c.h.b16 %v2018
        %v2114 = vunpack.c.l.b16 %v2019
        %v2115 = vunpack.c.h.b16 %v2019
        %v2116 = vunpack.c.l.b16 %v2020
        %v2117 = vunpack.c.h.b16 %v2020
        %v2118 = vunpack.c.l.b16 %v2021
        %v2119 = vunpack.c.h.b16 %v2021
        %v2120 = vunpack.c.l.b16 %v2022
        %v2121 = vunpack.c.h.b16 %v2022
        %v2122 = vunpack.c.l.b16 %v2023
        %v2123 = vunpack.c.h.b16 %v2023
        %v2124 = vunpack.c.l.b16 %v2024
        %v2125 = vunpack.c.h.b16 %v2024
        %v2126 = vunpack.c.l.b16 %v2025
        %v2127 = vunpack.c.h.b16 %v2025
        %v2128 = vunpack.c.l.b16 %v2026
        %v2129 = vunpack.c.h.b16 %v2026
        %v2130 = vunpack.c.l.b16 %v2027
        %v2131 = vunpack.c.h.b16 %v2027
        %v2132 = vunpack.c.l.b16 %v2028
        %v2133 = vunpack.c.h.b16 %v2028
        %v2134 = vpack.c.b16 %v2076, %v2074
        %v2135 = vpack.c.b16 %v2077, %v2075
        %v2136 = vpack.c.b16 %v2080, %v2078
        %v2137 = vpack.c.b16 %v2081, %v2079
        %v2138 = vpack.c.b16 %v2084, %v2082
        %v2139 = vpack.c.b16 %v2085, %v2083
        %v2140 = vpack.c.b16 %v2088, %v2086
        %v2141 = vpack.c.b16 %v2089, %v2087
        %v2142 = vpack.c.b16 %v2092, %v2090
        %v2143 = vpack.c.b16 %v2093, %v2091
        %v2144 = vpack.c.b16 %v2096, %v2094
        %v2145 = vpack.c.b16 %v2097, %v2095
        %v2146 = vpack.c.b16 %v2100, %v2098
        %v2147 = vpack.c.b16 %v2101, %v2099
        %v2148 = vpack.c.b16 %v2104, %v2102
        %v2149 = vpack.c.b16 %v2105, %v2103
        %v2150 = vpack.c.b16 %v2108, %v2106
        %v2151 = vpack.c.b16 %v2109, %v2107
        %v2152 = vpack.c.b16 %v2112, %v2110
        %v2153 = vpack.c.b16 %v2113, %v2111
        %v2154 = vpack.c.b16 %v2116, %v2114
        %v2155 = vpack.c.b16 %v2117, %v2115
        %v2156 = vpack.c.b16 %v2120, %v2118
        %v2157 = vpack.c.b16 %v2121, %v2119
        %v2158 = vpack.c.b16 %v2124, %v2122
        %v2159 = vpack.c.b16 %v2125, %v2123
        %v2160 = vpack.c.b16 %v2128, %v2126
        %v2161 = vpack.c.b16 %v2129, %v2127
        %v2162 = vpack.c.b16 %v2132, %v2130
        %v2163 = vpack.c.b16 %v2133, %v2131
        %vm2194 = vcmask 916480
        %v2196 = vsel %vm2194, %v2042, 0
        %2198 = vmatprep.subr.bf16.mxu0 %v2135
        %2199 = vmatpush1.bf16.msra.mxu0 %v2134
        %2200 = vmatprep.subr.bf16.mxu0 %v2137
        %2201 = vmatpush1.bf16.msra.mxu0 %v2136
        %2202 = vmatprep.subr.bf16.mxu0 %v2139
        %2203 = vmatpush1.bf16.msra.mxu0 %v2138
        %2204 = vmatprep.subr.bf16.mxu0 %v2141
        %2205 = vmatpush1.bf16.msra.mxu0 %v2140
        %2206 = vmatprep.subr.bf16.mxu0 %v2143
        %2207 = vmatpush1.bf16.msra.mxu0 %v2142
        %2208 = vmatprep.subr.bf16.mxu0 %v2145
        %2209 = vmatpush1.bf16.msra.mxu0 %v2144
        %2210 = vmatprep.subr.bf16.mxu0 %v2147
        %2211 = vmatpush1.bf16.msra.mxu0 %v2146
        %2212 = vmatprep.subr.bf16.mxu0 %v2149
        %2213 = vmatpush1.bf16.msra.mxu0 %v2148
        %2214 = vmatprep.subr.bf16.mxu0 %v2151
        %2215 = vmatpush1.bf16.msra.mxu0 %v2150
        %2216 = vmatprep.subr.bf16.mxu0 %v2153
        %2217 = vmatpush1.bf16.msra.mxu0 %v2152
        %2218 = vmatprep.subr.bf16.mxu0 %v2155
        %2219 = vmatpush1.bf16.msra.mxu0 %v2154
        %2220 = vmatprep.subr.bf16.mxu0 %v2157
        %2221 = vmatpush1.bf16.msra.mxu0 %v2156
        %2222 = vmatprep.subr.bf16.mxu0 %v2159
        %2223 = vmatpush1.bf16.msra.mxu0 %v2158
        %2224 = vmatprep.subr.bf16.mxu0 %v2161
        %2225 = vmatpush1.bf16.msra.mxu0 %v2160
        %2226 = vmatprep.subr.bf16.mxu0 %v2163
        %2227 = vmatpush1.bf16.msra.mxu0 %v2162
        %2228 = vmatprep.subr.bf16.mxu0 0
        %2229 = vmatpush1.bf16.msra.mxu0 0
        %2230 = vmatprep.mubr.bf16.mxu0 %v2196
        %2231 = vmatmul.mubr.bf16.gmra.mrb[0].mxu0 %v2035
        %v2232 = vpop.f32.mrb[0].mxu0
        %v2233 = vadd.f32 0.0, %v2232
        %v2234 = vpop.f32.mrb[0].mxu0
        %v2235 = vadd.f32 0.0, %v2234
        %v2236 = vpop.f32.mrb[0].mxu0
        %v2237 = vpop.f32.mrb[0].mxu0
        %2238 = vdwg.mxu0
        %v2269 = vunpack.c.l.b16 %v1966
        %v2270 = vunpack.c.h.b16 %v1966
        %v2271 = vunpack.c.l.b16 %v1967
        %v2272 = vunpack.c.h.b16 %v1967
        %v2273 = vunpack.c.l.b16 %v1968
        %v2274 = vunpack.c.h.b16 %v1968
        %v2275 = vunpack.c.l.b16 %v1969
        %v2276 = vunpack.c.h.b16 %v1969
        %v2277 = vunpack.c.l.b16 %v1970
        %v2278 = vunpack.c.h.b16 %v1970
        %v2279 = vunpack.c.l.b16 %v1971
        %v2280 = vunpack.c.h.b16 %v1971
        %v2281 = vunpack.c.l.b16 %v1972
        %v2282 = vunpack.c.h.b16 %v1972
        %v2283 = vunpack.c.l.b16 %v1973
        %v2284 = vunpack.c.h.b16 %v1973
        %v2285 = vunpack.c.l.b16 %v1974
        %v2286 = vunpack.c.h.b16 %v1974
        %v2287 = vunpack.c.l.b16 %v1975
        %v2288 = vunpack.c.h.b16 %v1975
        %v2289 = vunpack.c.l.b16 %v1976
        %v2290 = vunpack.c.h.b16 %v1976
        %v2291 = vunpack.c.l.b16 %v1977
        %v2292 = vunpack.c.h.b16 %v1977
        %v2293 = vunpack.c.l.b16 %v1978
        %v2294 = vunpack.c.h.b16 %v1978
        %v2295 = vunpack.c.l.b16 %v1979
        %v2296 = vunpack.c.h.b16 %v1979
        %v2297 = vunpack.c.l.b16 %v1980
        %v2298 = vunpack.c.h.b16 %v1980
        %v2299 = vunpack.c.l.b16 %v1981
        %v2300 = vunpack.c.h.b16 %v1981
        %v2301 = vunpack.c.l.b16 %v1982
        %v2302 = vunpack.c.h.b16 %v1982
        %v2303 = vunpack.c.l.b16 %v1983
        %v2304 = vunpack.c.h.b16 %v1983
        %v2305 = vunpack.c.l.b16 %v1984
        %v2306 = vunpack.c.h.b16 %v1984
        %v2307 = vunpack.c.l.b16 %v1985
        %v2308 = vunpack.c.h.b16 %v1985
        %v2309 = vunpack.c.l.b16 %v1986
        %v2310 = vunpack.c.h.b16 %v1986
        %v2311 = vunpack.c.l.b16 %v1987
        %v2312 = vunpack.c.h.b16 %v1987
        %v2313 = vunpack.c.l.b16 %v1988
        %v2314 = vunpack.c.h.b16 %v1988
        %v2315 = vunpack.c.l.b16 %v1989
        %v2316 = vunpack.c.h.b16 %v1989
        %v2317 = vunpack.c.l.b16 %v1990
        %v2318 = vunpack.c.h.b16 %v1990
        %v2319 = vunpack.c.l.b16 %v1991
        %v2320 = vunpack.c.h.b16 %v1991
        %v2321 = vunpack.c.l.b16 %v1992
        %v2322 = vunpack.c.h.b16 %v1992
        %v2323 = vunpack.c.l.b16 %v1993
        %v2324 = vunpack.c.h.b16 %v1993
        %v2325 = vunpack.c.l.b16 %v1994
        %v2326 = vunpack.c.h.b16 %v1994
        %v2327 = vunpack.c.l.b16 %v1995
        %v2328 = vunpack.c.h.b16 %v1995
        %v2329 = vpack.c.b16 %v2271, %v2269
        %v2330 = vpack.c.b16 %v2272, %v2270
        %v2331 = vpack.c.b16 %v2275, %v2273
        %v2332 = vpack.c.b16 %v2276, %v2274
        %v2333 = vpack.c.b16 %v2279, %v2277
        %v2334 = vpack.c.b16 %v2280, %v2278
        %v2335 = vpack.c.b16 %v2283, %v2281
        %v2336 = vpack.c.b16 %v2284, %v2282
        %v2337 = vpack.c.b16 %v2287, %v2285
        %v2338 = vpack.c.b16 %v2288, %v2286
        %v2339 = vpack.c.b16 %v2291, %v2289
        %v2340 = vpack.c.b16 %v2292, %v2290
        %v2341 = vpack.c.b16 %v2295, %v2293
        %v2342 = vpack.c.b16 %v2296, %v2294
        %v2343 = vpack.c.b16 %v2299, %v2297
        %v2344 = vpack.c.b16 %v2300, %v2298
        %v2345 = vpack.c.b16 %v2303, %v2301
        %v2346 = vpack.c.b16 %v2304, %v2302
        %v2347 = vpack.c.b16 %v2307, %v2305
        %v2348 = vpack.c.b16 %v2308, %v2306
        %v2349 = vpack.c.b16 %v2311, %v2309
        %v2350 = vpack.c.b16 %v2312, %v2310
        %v2351 = vpack.c.b16 %v2315, %v2313
        %v2352 = vpack.c.b16 %v2316, %v2314
        %v2353 = vpack.c.b16 %v2319, %v2317
        %v2354 = vpack.c.b16 %v2320, %v2318
        %v2355 = vpack.c.b16 %v2323, %v2321
        %v2356 = vpack.c.b16 %v2324, %v2322
        %v2357 = vpack.c.b16 %v2327, %v2325
        %v2358 = vpack.c.b16 %v2328, %v2326
        %v2390 = vsel %vm2194, %v1965, 0
        %2392 = vmatprep.subr.bf16.mxu0 %v2330
        %2393 = vmatpush1.bf16.msra.mxu0 %v2329
        %2394 = vmatprep.subr.bf16.mxu0 %v2332
        %2395 = vmatpush1.bf16.msra.mxu0 %v2331
        %2396 = vmatprep.subr.bf16.mxu0 %v2334
        %2397 = vmatpush1.bf16.msra.mxu0 %v2333
        %2398 = vmatprep.subr.bf16.mxu0 %v2336
        %2399 = vmatpush1.bf16.msra.mxu0 %v2335
        %2400 = vmatprep.subr.bf16.mxu0 %v2338
        %2401 = vmatpush1.bf16.msra.mxu0 %v2337
        %2402 = vmatprep.subr.bf16.mxu0 %v2340
        %2403 = vmatpush1.bf16.msra.mxu0 %v2339
        %2404 = vmatprep.subr.bf16.mxu0 %v2342
        %2405 = vmatpush1.bf16.msra.mxu0 %v2341
        %2406 = vmatprep.subr.bf16.mxu0 %v2344
        %2407 = vmatpush1.bf16.msra.mxu0 %v2343
        %2408 = vmatprep.subr.bf16.mxu0 %v2346
        %2409 = vmatpush1.bf16.msra.mxu0 %v2345
        %2410 = vmatprep.subr.bf16.mxu0 %v2348
        %2411 = vmatpush1.bf16.msra.mxu0 %v2347
        %2412 = vmatprep.subr.bf16.mxu0 %v2350
        %2413 = vmatpush1.bf16.msra.mxu0 %v2349
        %2414 = vmatprep.subr.bf16.mxu0 %v2352
        %2415 = vmatpush1.bf16.msra.mxu0 %v2351
        %2416 = vmatprep.subr.bf16.mxu0 %v2354
        %2417 = vmatpush1.bf16.msra.mxu0 %v2353
        %2418 = vmatprep.subr.bf16.mxu0 %v2356
        %2419 = vmatpush1.bf16.msra.mxu0 %v2355
        %2420 = vmatprep.subr.bf16.mxu0 %v2358
        %2421 = vmatpush1.bf16.msra.mxu0 %v2357
        %2422 = vmatprep.subr.bf16.mxu0 0
        %2423 = vmatpush1.bf16.msra.mxu0 0
        %2424 = vmatprep.mubr.bf16.mxu0 %v2390
        %2425 = vmatmul.mubr.bf16.gmra.mrb[0].mxu0 %v1964
        %v2426 = vpop.f32.mrb[0].mxu0
        %v2427 = vadd.f32 %v2233, %v2426
        %v2428 = vpop.f32.mrb[0].mxu0
        %v2429 = vadd.f32 %v2235, %v2428
        %v2430 = vpop.f32.mrb[0].mxu0
        %v2431 = vpop.f32.mrb[0].mxu0
        %2432 = vdwg.mxu0
        %s2433 = scalar_lea.vmem %s4, 480
        %v2434 = vld [vmem:[%s2433] sm:$0xff]
        %v2435 = vld [vmem:[%s2433 + $0x8] sm:$0xff]
        %v2436 = vld [vmem:[%s2433 + $0x10] sm:$0xff]
        %v2437 = vld [vmem:[%s2433 + $0x18] sm:$0xff]
        %v2438 = vld [vmem:[%s2433 + $0x20] sm:$0xff]
        %v2439 = vld [vmem:[%s2433 + $0x28] sm:$0xff]
        %v2440 = vld [vmem:[%s2433 + $0x30] sm:$0xff]
        %v2441 = vld [vmem:[%s2433 + $0x38] sm:$0xff]
        %v2442 = vld [vmem:[%s2433 + $0x40] sm:$0xff]
        %v2443 = vld [vmem:[%s2433 + $0x48] sm:$0xff]
        %v2444 = vld [vmem:[%s2433 + $0x50] sm:$0xff]
        %v2445 = vld [vmem:[%s2433 + $0x58] sm:$0xff]
        %v2446 = vld [vmem:[%s2433 + $0x60] sm:$0xff]
        %v2447 = vld [vmem:[%s2433 + $0x68] sm:$0xff]
        %v2448 = vld [vmem:[%s2433 + $0x70] sm:$0xff]
        %v2449 = vld [vmem:[%s2433 + $0x78] sm:$0xff]
        %v2450 = vld [vmem:[%s2433 + $0x80] sm:$0xff]
        %v2451 = vld [vmem:[%s2433 + $0x88] sm:$0xff]
        %v2452 = vld [vmem:[%s2433 + $0x90] sm:$0xff]
        %v2453 = vld [vmem:[%s2433 + $0x98] sm:$0xff]
        %v2454 = vld [vmem:[%s2433 + $0xa0] sm:$0xff]
        %v2455 = vld [vmem:[%s2433 + $0xa8] sm:$0xff]
        %v2456 = vld [vmem:[%s2433 + $0xb0] sm:$0xff]
        %v2457 = vld [vmem:[%s2433 + $0xb8] sm:$0xff]
        %v2458 = vld [vmem:[%s2433 + $0xc0] sm:$0xff]
        %v2459 = vld [vmem:[%s2433 + $0xc8] sm:$0xff]
        %v2460 = vld [vmem:[%s2433 + $0xd0] sm:$0xff]
        %v2461 = vld [vmem:[%s2433 + $0xd8] sm:$0xff]
        %v2462 = vld [vmem:[%s2433 + $0xe0] sm:$0xff]
        %v2463 = vld [vmem:[%s2433 + $0xe8] sm:$0xff]
        %v2466 = vrot.slane %v1996, 1
        %v2467 = vrot.slane %v1997, 1
        %v2499 = vunpack.c.l.b16 %v2434
        %v2500 = vunpack.c.h.b16 %v2434
        %v2501 = vunpack.c.l.b16 %v2435
        %v2502 = vunpack.c.h.b16 %v2435
        %v2503 = vunpack.c.l.b16 %v2436
        %v2504 = vunpack.c.h.b16 %v2436
        %v2505 = vunpack.c.l.b16 %v2437
        %v2506 = vunpack.c.h.b16 %v2437
        %v2507 = vunpack.c.l.b16 %v2438
        %v2508 = vunpack.c.h.b16 %v2438
        %v2509 = vunpack.c.l.b16 %v2439
        %v2510 = vunpack.c.h.b16 %v2439
        %v2511 = vunpack.c.l.b16 %v2440
        %v2512 = vunpack.c.h.b16 %v2440
        %v2513 = vunpack.c.l.b16 %v2441
        %v2514 = vunpack.c.h.b16 %v2441
        %v2515 = vunpack.c.l.b16 %v2442
        %v2516 = vunpack.c.h.b16 %v2442
        %v2517 = vunpack.c.l.b16 %v2443
        %v2518 = vunpack.c.h.b16 %v2443
        %v2519 = vunpack.c.l.b16 %v2444
        %v2520 = vunpack.c.h.b16 %v2444
        %v2521 = vunpack.c.l.b16 %v2445
        %v2522 = vunpack.c.h.b16 %v2445
        %v2523 = vunpack.c.l.b16 %v2446
        %v2524 = vunpack.c.h.b16 %v2446
        %v2525 = vunpack.c.l.b16 %v2447
        %v2526 = vunpack.c.h.b16 %v2447
        %v2527 = vunpack.c.l.b16 %v2448
        %v2528 = vunpack.c.h.b16 %v2448
        %v2529 = vunpack.c.l.b16 %v2449
        %v2530 = vunpack.c.h.b16 %v2449
        %v2531 = vunpack.c.l.b16 %v2450
        %v2532 = vunpack.c.h.b16 %v2450
        %v2533 = vunpack.c.l.b16 %v2451
        %v2534 = vunpack.c.h.b16 %v2451
        %v2535 = vunpack.c.l.b16 %v2452
        %v2536 = vunpack.c.h.b16 %v2452
        %v2537 = vunpack.c.l.b16 %v2453
        %v2538 = vunpack.c.h.b16 %v2453
        %v2539 = vunpack.c.l.b16 %v2454
        %v2540 = vunpack.c.h.b16 %v2454
        %v2541 = vunpack.c.l.b16 %v2455
        %v2542 = vunpack.c.h.b16 %v2455
        %v2543 = vunpack.c.l.b16 %v2456
        %v2544 = vunpack.c.h.b16 %v2456
        %v2545 = vunpack.c.l.b16 %v2457
        %v2546 = vunpack.c.h.b16 %v2457
        %v2547 = vunpack.c.l.b16 %v2458
        %v2548 = vunpack.c.h.b16 %v2458
        %v2549 = vunpack.c.l.b16 %v2459
        %v2550 = vunpack.c.h.b16 %v2459
        %v2551 = vunpack.c.l.b16 %v2460
        %v2552 = vunpack.c.h.b16 %v2460
        %v2553 = vunpack.c.l.b16 %v2461
        %v2554 = vunpack.c.h.b16 %v2461
        %v2555 = vunpack.c.l.b16 %v2462
        %v2556 = vunpack.c.h.b16 %v2462
        %v2557 = vunpack.c.l.b16 %v2463
        %v2558 = vunpack.c.h.b16 %v2463
        %v2559 = vpack.c.b16 %v2501, %v2499
        %v2560 = vpack.c.b16 %v2502, %v2500
        %v2561 = vpack.c.b16 %v2505, %v2503
        %v2562 = vpack.c.b16 %v2506, %v2504
        %v2563 = vpack.c.b16 %v2509, %v2507
        %v2564 = vpack.c.b16 %v2510, %v2508
        %v2565 = vpack.c.b16 %v2513, %v2511
        %v2566 = vpack.c.b16 %v2514, %v2512
        %v2567 = vpack.c.b16 %v2517, %v2515
        %v2568 = vpack.c.b16 %v2518, %v2516
        %v2569 = vpack.c.b16 %v2521, %v2519
        %v2570 = vpack.c.b16 %v2522, %v2520
        %v2571 = vpack.c.b16 %v2525, %v2523
        %v2572 = vpack.c.b16 %v2526, %v2524
        %v2573 = vpack.c.b16 %v2529, %v2527
        %v2574 = vpack.c.b16 %v2530, %v2528
        %v2575 = vpack.c.b16 %v2533, %v2531
        %v2576 = vpack.c.b16 %v2534, %v2532
        %v2577 = vpack.c.b16 %v2537, %v2535
        %v2578 = vpack.c.b16 %v2538, %v2536
        %v2579 = vpack.c.b16 %v2541, %v2539
        %v2580 = vpack.c.b16 %v2542, %v2540
        %v2581 = vpack.c.b16 %v2545, %v2543
        %v2582 = vpack.c.b16 %v2546, %v2544
        %v2583 = vpack.c.b16 %v2549, %v2547
        %v2584 = vpack.c.b16 %v2550, %v2548
        %v2585 = vpack.c.b16 %v2553, %v2551
        %v2586 = vpack.c.b16 %v2554, %v2552
        %v2587 = vpack.c.b16 %v2557, %v2555
        %v2588 = vpack.c.b16 %v2558, %v2556
        %v2620 = vsel %vm2194, %v2467, 0
        %2622 = vmatprep.subr.bf16.mxu0 %v2560
        %2623 = vmatpush1.bf16.msra.mxu0 %v2559
        %2624 = vmatprep.subr.bf16.mxu0 %v2562
        %2625 = vmatpush1.bf16.msra.mxu0 %v2561
        %2626 = vmatprep.subr.bf16.mxu0 %v2564
        %2627 = vmatpush1.bf16.msra.mxu0 %v2563
        %2628 = vmatprep.subr.bf16.mxu0 %v2566
        %2629 = vmatpush1.bf16.msra.mxu0 %v2565
        %2630 = vmatprep.subr.bf16.mxu0 %v2568
        %2631 = vmatpush1.bf16.msra.mxu0 %v2567
        %2632 = vmatprep.subr.bf16.mxu0 %v2570
        %2633 = vmatpush1.bf16.msra.mxu0 %v2569
        %2634 = vmatprep.subr.bf16.mxu0 %v2572
        %2635 = vmatpush1.bf16.msra.mxu0 %v2571
        %2636 = vmatprep.subr.bf16.mxu0 %v2574
        %2637 = vmatpush1.bf16.msra.mxu0 %v2573
        %2638 = vmatprep.subr.bf16.mxu0 %v2576
        %2639 = vmatpush1.bf16.msra.mxu0 %v2575
        %2640 = vmatprep.subr.bf16.mxu0 %v2578
        %2641 = vmatpush1.bf16.msra.mxu0 %v2577
        %2642 = vmatprep.subr.bf16.mxu0 %v2580
        %2643 = vmatpush1.bf16.msra.mxu0 %v2579
        %2644 = vmatprep.subr.bf16.mxu0 %v2582
        %2645 = vmatpush1.bf16.msra.mxu0 %v2581
        %2646 = vmatprep.subr.bf16.mxu0 %v2584
        %2647 = vmatpush1.bf16.msra.mxu0 %v2583
        %2648 = vmatprep.subr.bf16.mxu0 %v2586
        %2649 = vmatpush1.bf16.msra.mxu0 %v2585
        %2650 = vmatprep.subr.bf16.mxu0 %v2588
        %2651 = vmatpush1.bf16.msra.mxu0 %v2587
        %2652 = vmatprep.subr.bf16.mxu0 0
        %2653 = vmatpush1.bf16.msra.mxu0 0
        %2654 = vmatprep.mubr.bf16.mxu0 %v2620
        %2655 = vmatmul.mubr.bf16.gmra.mrb[0].mxu0 %v2466
        %v2656 = vpop.f32.mrb[0].mxu0
        %v2657 = vadd.f32 0.0, %v2656
        %v2658 = vpop.f32.mrb[0].mxu0
        %v2659 = vadd.f32 0.0, %v2658
        %v2660 = vpop.f32.mrb[0].mxu0
        %v2661 = vpop.f32.mrb[0].mxu0
        %2662 = vdwg.mxu0
        %v2663 = vadd.f32 %v2427, %v2657
        %v2664 = vadd.f32 %v2429, %v2659
        %s2665 = scalar_lea.vmem %s4, 720
        %v2666 = vld [vmem:[%s2665] sm:$0xff]
        %v2667 = vld [vmem:[%s2665 + $0x8] sm:$0xff]
        %v2668 = vld [vmem:[%s2665 + $0x10] sm:$0xff]
        %v2669 = vld [vmem:[%s2665 + $0x18] sm:$0xff]
        %v2670 = vld [vmem:[%s2665 + $0x20] sm:$0xff]
        %v2671 = vld [vmem:[%s2665 + $0x28] sm:$0xff]
        %v2672 = vld [vmem:[%s2665 + $0x30] sm:$0xff]
        %v2673 = vld [vmem:[%s2665 + $0x38] sm:$0xff]
        %v2674 = vld [vmem:[%s2665 + $0x40] sm:$0xff]
        %v2675 = vld [vmem:[%s2665 + $0x48] sm:$0xff]
        %v2676 = vld [vmem:[%s2665 + $0x50] sm:$0xff]
        %v2677 = vld [vmem:[%s2665 + $0x58] sm:$0xff]
        %v2678 = vld [vmem:[%s2665 + $0x60] sm:$0xff]
        %v2679 = vld [vmem:[%s2665 + $0x68] sm:$0xff]
        %v2680 = vld [vmem:[%s2665 + $0x70] sm:$0xff]
        %v2681 = vld [vmem:[%s2665 + $0x78] sm:$0xff]
        %v2682 = vld [vmem:[%s2665 + $0x80] sm:$0xff]
        %v2683 = vld [vmem:[%s2665 + $0x88] sm:$0xff]
        %v2684 = vld [vmem:[%s2665 + $0x90] sm:$0xff]
        %v2685 = vld [vmem:[%s2665 + $0x98] sm:$0xff]
        %v2686 = vld [vmem:[%s2665 + $0xa0] sm:$0xff]
        %v2687 = vld [vmem:[%s2665 + $0xa8] sm:$0xff]
        %v2688 = vld [vmem:[%s2665 + $0xb0] sm:$0xff]
        %v2689 = vld [vmem:[%s2665 + $0xb8] sm:$0xff]
        %v2690 = vld [vmem:[%s2665 + $0xc0] sm:$0xff]
        %v2691 = vld [vmem:[%s2665 + $0xc8] sm:$0xff]
        %v2692 = vld [vmem:[%s2665 + $0xd0] sm:$0xff]
        %v2693 = vld [vmem:[%s2665 + $0xd8] sm:$0xff]
        %v2694 = vld [vmem:[%s2665 + $0xe0] sm:$0xff]
        %v2695 = vld [vmem:[%s2665 + $0xe8] sm:$0xff]
        %v2696 = vrot.slane %v2030, 1
        %v2697 = vrot.slane %v2032, 2
        %v2698 = vor.u32 %v2696, %v2697
        %v2699 = vrot.slane %v2037, 1
        %v2700 = vrot.slane %v2039, 2
        %v2701 = vor.u32 %v2699, %v2700
        %v2733 = vunpack.c.l.b16 %v2666
        %v2734 = vunpack.c.h.b16 %v2666
        %v2735 = vunpack.c.l.b16 %v2667
        %v2736 = vunpack.c.h.b16 %v2667
        %v2737 = vunpack.c.l.b16 %v2668
        %v2738 = vunpack.c.h.b16 %v2668
        %v2739 = vunpack.c.l.b16 %v2669
        %v2740 = vunpack.c.h.b16 %v2669
        %v2741 = vunpack.c.l.b16 %v2670
        %v2742 = vunpack.c.h.b16 %v2670
        %v2743 = vunpack.c.l.b16 %v2671
        %v2744 = vunpack.c.h.b16 %v2671
        %v2745 = vunpack.c.l.b16 %v2672
        %v2746 = vunpack.c.h.b16 %v2672
        %v2747 = vunpack.c.l.b16 %v2673
        %v2748 = vunpack.c.h.b16 %v2673
        %v2749 = vunpack.c.l.b16 %v2674
        %v2750 = vunpack.c.h.b16 %v2674
        %v2751 = vunpack.c.l.b16 %v2675
        %v2752 = vunpack.c.h.b16 %v2675
        %v2753 = vunpack.c.l.b16 %v2676
        %v2754 = vunpack.c.h.b16 %v2676
        %v2755 = vunpack.c.l.b16 %v2677
        %v2756 = vunpack.c.h.b16 %v2677
        %v2757 = vunpack.c.l.b16 %v2678
        %v2758 = vunpack.c.h.b16 %v2678
        %v2759 = vunpack.c.l.b16 %v2679
        %v2760 = vunpack.c.h.b16 %v2679
        %v2761 = vunpack.c.l.b16 %v2680
        %v2762 = vunpack.c.h.b16 %v2680
        %v2763 = vunpack.c.l.b16 %v2681
        %v2764 = vunpack.c.h.b16 %v2681
        %v2765 = vunpack.c.l.b16 %v2682
        %v2766 = vunpack.c.h.b16 %v2682
        %v2767 = vunpack.c.l.b16 %v2683
        %v2768 = vunpack.c.h.b16 %v2683
        %v2769 = vunpack.c.l.b16 %v2684
        %v2770 = vunpack.c.h.b16 %v2684
        %v2771 = vunpack.c.l.b16 %v2685
        %v2772 = vunpack.c.h.b16 %v2685
        %v2773 = vunpack.c.l.b16 %v2686
        %v2774 = vunpack.c.h.b16 %v2686
        %v2775 = vunpack.c.l.b16 %v2687
        %v2776 = vunpack.c.h.b16 %v2687
        %v2777 = vunpack.c.l.b16 %v2688
        %v2778 = vunpack.c.h.b16 %v2688
        %v2779 = vunpack.c.l.b16 %v2689
        %v2780 = vunpack.c.h.b16 %v2689
        %v2781 = vunpack.c.l.b16 %v2690
        %v2782 = vunpack.c.h.b16 %v2690
        %v2783 = vunpack.c.l.b16 %v2691
        %v2784 = vunpack.c.h.b16 %v2691
        %v2785 = vunpack.c.l.b16 %v2692
        %v2786 = vunpack.c.h.b16 %v2692
        %v2787 = vunpack.c.l.b16 %v2693
        %v2788 = vunpack.c.h.b16 %v2693
        %v2789 = vunpack.c.l.b16 %v2694
        %v2790 = vunpack.c.h.b16 %v2694
        %v2791 = vunpack.c.l.b16 %v2695
        %v2792 = vunpack.c.h.b16 %v2695
        %v2793 = vpack.c.b16 %v2735, %v2733
        %v2794 = vpack.c.b16 %v2736, %v2734
        %v2795 = vpack.c.b16 %v2739, %v2737
        %v2796 = vpack.c.b16 %v2740, %v2738
        %v2797 = vpack.c.b16 %v2743, %v2741
        %v2798 = vpack.c.b16 %v2744, %v2742
        %v2799 = vpack.c.b16 %v2747, %v2745
        %v2800 = vpack.c.b16 %v2748, %v2746
        %v2801 = vpack.c.b16 %v2751, %v2749
        %v2802 = vpack.c.b16 %v2752, %v2750
        %v2803 = vpack.c.b16 %v2755, %v2753
        %v2804 = vpack.c.b16 %v2756, %v2754
        %v2805 = vpack.c.b16 %v2759, %v2757
        %v2806 = vpack.c.b16 %v2760, %v2758
        %v2807 = vpack.c.b16 %v2763, %v2761
        %v2808 = vpack.c.b16 %v2764, %v2762
        %v2809 = vpack.c.b16 %v2767, %v2765
        %v2810 = vpack.c.b16 %v2768, %v2766
        %v2811 = vpack.c.b16 %v2771, %v2769
        %v2812 = vpack.c.b16 %v2772, %v2770
        %v2813 = vpack.c.b16 %v2775, %v2773
        %v2814 = vpack.c.b16 %v2776, %v2774
        %v2815 = vpack.c.b16 %v2779, %v2777
        %v2816 = vpack.c.b16 %v2780, %v2778
        %v2817 = vpack.c.b16 %v2783, %v2781
        %v2818 = vpack.c.b16 %v2784, %v2782
        %v2819 = vpack.c.b16 %v2787, %v2785
        %v2820 = vpack.c.b16 %v2788, %v2786
        %v2821 = vpack.c.b16 %v2791, %v2789
        %v2822 = vpack.c.b16 %v2792, %v2790
        %v2854 = vsel %vm2194, %v2701, 0
        %2856 = vmatprep.subr.bf16.mxu0 %v2794
        %2857 = vmatpush1.bf16.msra.mxu0 %v2793
        %2858 = vmatprep.subr.bf16.mxu0 %v2796
        %2859 = vmatpush1.bf16.msra.mxu0 %v2795
        %2860 = vmatprep.subr.bf16.mxu0 %v2798
        %2861 = vmatpush1.bf16.msra.mxu0 %v2797
        %2862 = vmatprep.subr.bf16.mxu0 %v2800
        %2863 = vmatpush1.bf16.msra.mxu0 %v2799
        %2864 = vmatprep.subr.bf16.mxu0 %v2802
        %2865 = vmatpush1.bf16.msra.mxu0 %v2801
        %2866 = vmatprep.subr.bf16.mxu0 %v2804
        %2867 = vmatpush1.bf16.msra.mxu0 %v2803
        %2868 = vmatprep.subr.bf16.mxu0 %v2806
        %2869 = vmatpush1.bf16.msra.mxu0 %v2805
        %2870 = vmatprep.subr.bf16.mxu0 %v2808
        %2871 = vmatpush1.bf16.msra.mxu0 %v2807
        %2872 = vmatprep.subr.bf16.mxu0 %v2810
        %2873 = vmatpush1.bf16.msra.mxu0 %v2809
        %2874 = vmatprep.subr.bf16.mxu0 %v2812
        %2875 = vmatpush1.bf16.msra.mxu0 %v2811
        %2876 = vmatprep.subr.bf16.mxu0 %v2814
        %2877 = vmatpush1.bf16.msra.mxu0 %v2813
        %2878 = vmatprep.subr.bf16.mxu0 %v2816
        %2879 = vmatpush1.bf16.msra.mxu0 %v2815
        %2880 = vmatprep.subr.bf16.mxu0 %v2818
        %2881 = vmatpush1.bf16.msra.mxu0 %v2817
        %2882 = vmatprep.subr.bf16.mxu0 %v2820
        %2883 = vmatpush1.bf16.msra.mxu0 %v2819
        %2884 = vmatprep.subr.bf16.mxu0 %v2822
        %2885 = vmatpush1.bf16.msra.mxu0 %v2821
        %2886 = vmatprep.subr.bf16.mxu0 0
        %2887 = vmatpush1.bf16.msra.mxu0 0
        %2888 = vmatprep.mubr.bf16.mxu0 %v2854
        %2889 = vmatmul.mubr.bf16.gmra.mrb[0].mxu0 %v2698
        %v2890 = vpop.f32.mrb[0].mxu0
        %v2891 = vadd.f32 0.0, %v2890
        %v2892 = vpop.f32.mrb[0].mxu0
        %v2893 = vadd.f32 0.0, %v2892
        %v2894 = vpop.f32.mrb[0].mxu0
        %v2895 = vpop.f32.mrb[0].mxu0
        %2896 = vdwg.mxu0
        %v2897 = vadd.f32 %v2663, %v2891
        %v2898 = vadd.f32 %v2664, %v2893
        %s2899 = scalar_lea.vmem %s4, 960
        %v2900 = vld [vmem:[%s2899] sm:$0xff]
        %v2901 = vld [vmem:[%s2899 + $0x8] sm:$0xff]
        %v2902 = vld [vmem:[%s2899 + $0x10] sm:$0xff]
        %v2903 = vld [vmem:[%s2899 + $0x18] sm:$0xff]
        %v2904 = vld [vmem:[%s2899 + $0x20] sm:$0xff]
        %v2905 = vld [vmem:[%s2899 + $0x28] sm:$0xff]
        %v2906 = vld [vmem:[%s2899 + $0x30] sm:$0xff]
        %v2907 = vld [vmem:[%s2899 + $0x38] sm:$0xff]
        %v2908 = vld [vmem:[%s2899 + $0x40] sm:$0xff]
        %v2909 = vld [vmem:[%s2899 + $0x48] sm:$0xff]
        %v2910 = vld [vmem:[%s2899 + $0x50] sm:$0xff]
        %v2911 = vld [vmem:[%s2899 + $0x58] sm:$0xff]
        %v2912 = vld [vmem:[%s2899 + $0x60] sm:$0xff]
        %v2913 = vld [vmem:[%s2899 + $0x68] sm:$0xff]
        %v2914 = vld [vmem:[%s2899 + $0x70] sm:$0xff]
        %v2915 = vld [vmem:[%s2899 + $0x78] sm:$0xff]
        %v2916 = vld [vmem:[%s2899 + $0x80] sm:$0xff]
        %v2917 = vld [vmem:[%s2899 + $0x88] sm:$0xff]
        %v2918 = vld [vmem:[%s2899 + $0x90] sm:$0xff]
        %v2919 = vld [vmem:[%s2899 + $0x98] sm:$0xff]
        %v2920 = vld [vmem:[%s2899 + $0xa0] sm:$0xff]
        %v2921 = vld [vmem:[%s2899 + $0xa8] sm:$0xff]
        %v2922 = vld [vmem:[%s2899 + $0xb0] sm:$0xff]
        %v2923 = vld [vmem:[%s2899 + $0xb8] sm:$0xff]
        %v2924 = vld [vmem:[%s2899 + $0xc0] sm:$0xff]
        %v2925 = vld [vmem:[%s2899 + $0xc8] sm:$0xff]
        %v2926 = vld [vmem:[%s2899 + $0xd0] sm:$0xff]
        %v2927 = vld [vmem:[%s2899 + $0xd8] sm:$0xff]
        %v2928 = vld [vmem:[%s2899 + $0xe0] sm:$0xff]
        %v2929 = vld [vmem:[%s2899 + $0xe8] sm:$0xff]
        %v2930 = vrot.slane %v1996, 2
        %v2931 = vrot.slane %v1997, 2
        %v2963 = vunpack.c.l.b16 %v2900
        %v2964 = vunpack.c.h.b16 %v2900
        %v2965 = vunpack.c.l.b16 %v2901
        %v2966 = vunpack.c.h.b16 %v2901
        %v2967 = vunpack.c.l.b16 %v2902
        %v2968 = vunpack.c.h.b16 %v2902
        %v2969 = vunpack.c.l.b16 %v2903
        %v2970 = vunpack.c.h.b16 %v2903
        %v2971 = vunpack.c.l.b16 %v2904
        %v2972 = vunpack.c.h.b16 %v2904
        %v2973 = vunpack.c.l.b16 %v2905
        %v2974 = vunpack.c.h.b16 %v2905
        %v2975 = vunpack.c.l.b16 %v2906
        %v2976 = vunpack.c.h.b16 %v2906
        %v2977 = vunpack.c.l.b16 %v2907
        %v2978 = vunpack.c.h.b16 %v2907
        %v2979 = vunpack.c.l.b16 %v2908
        %v2980 = vunpack.c.h.b16 %v2908
        %v2981 = vunpack.c.l.b16 %v2909
        %v2982 = vunpack.c.h.b16 %v2909
        %v2983 = vunpack.c.l.b16 %v2910
        %v2984 = vunpack.c.h.b16 %v2910
        %v2985 = vunpack.c.l.b16 %v2911
        %v2986 = vunpack.c.h.b16 %v2911
        %v2987 = vunpack.c.l.b16 %v2912
        %v2988 = vunpack.c.h.b16 %v2912
        %v2989 = vunpack.c.l.b16 %v2913
        %v2990 = vunpack.c.h.b16 %v2913
        %v2991 = vunpack.c.l.b16 %v2914
        %v2992 = vunpack.c.h.b16 %v2914
        %v2993 = vunpack.c.l.b16 %v2915
        %v2994 = vunpack.c.h.b16 %v2915
        %v2995 = vunpack.c.l.b16 %v2916
        %v2996 = vunpack.c.h.b16 %v2916
        %v2997 = vunpack.c.l.b16 %v2917
        %v2998 = vunpack.c.h.b16 %v2917
        %v2999 = vunpack.c.l.b16 %v2918
        %v3000 = vunpack.c.h.b16 %v2918
        %v3001 = vunpack.c.l.b16 %v2919
        %v3002 = vunpack.c.h.b16 %v2919
        %v3003 = vunpack.c.l.b16 %v2920
        %v3004 = vunpack.c.h.b16 %v2920
        %v3005 = vunpack.c.l.b16 %v2921
        %v3006 = vunpack.c.h.b16 %v2921
        %v3007 = vunpack.c.l.b16 %v2922
        %v3008 = vunpack.c.h.b16 %v2922
        %v3009 = vunpack.c.l.b16 %v2923
        %v3010 = vunpack.c.h.b16 %v2923
        %v3011 = vunpack.c.l.b16 %v2924
        %v3012 = vunpack.c.h.b16 %v2924
        %v3013 = vunpack.c.l.b16 %v2925
        %v3014 = vunpack.c.h.b16 %v2925
        %v3015 = vunpack.c.l.b16 %v2926
        %v3016 = vunpack.c.h.b16 %v2926
        %v3017 = vunpack.c.l.b16 %v2927
        %v3018 = vunpack.c.h.b16 %v2927
        %v3019 = vunpack.c.l.b16 %v2928
        %v3020 = vunpack.c.h.b16 %v2928
        %v3021 = vunpack.c.l.b16 %v2929
        %v3022 = vunpack.c.h.b16 %v2929
        %v3023 = vpack.c.b16 %v2965, %v2963
        %v3024 = vpack.c.b16 %v2966, %v2964
        %v3025 = vpack.c.b16 %v2969, %v2967
        %v3026 = vpack.c.b16 %v2970, %v2968
        %v3027 = vpack.c.b16 %v2973, %v2971
        %v3028 = vpack.c.b16 %v2974, %v2972
        %v3029 = vpack.c.b16 %v2977, %v2975
        %v3030 = vpack.c.b16 %v2978, %v2976
        %v3031 = vpack.c.b16 %v2981, %v2979
        %v3032 = vpack.c.b16 %v2982, %v2980
        %v3033 = vpack.c.b16 %v2985, %v2983
        %v3034 = vpack.c.b16 %v2986, %v2984
        %v3035 = vpack.c.b16 %v2989, %v2987
        %v3036 = vpack.c.b16 %v2990, %v2988
        %v3037 = vpack.c.b16 %v2993, %v2991
        %v3038 = vpack.c.b16 %v2994, %v2992
        %v3039 = vpack.c.b16 %v2997, %v2995
        %v3040 = vpack.c.b16 %v2998, %v2996
        %v3041 = vpack.c.b16 %v3001, %v2999
        %v3042 = vpack.c.b16 %v3002, %v3000
        %v3043 = vpack.c.b16 %v3005, %v3003
        %v3044 = vpack.c.b16 %v3006, %v3004
        %v3045 = vpack.c.b16 %v3009, %v3007
        %v3046 = vpack.c.b16 %v3010, %v3008
        %v3047 = vpack.c.b16 %v3013, %v3011
        %v3048 = vpack.c.b16 %v3014, %v3012
        %v3049 = vpack.c.b16 %v3017, %v3015
        %v3050 = vpack.c.b16 %v3018, %v3016
        %v3051 = vpack.c.b16 %v3021, %v3019
        %v3052 = vpack.c.b16 %v3022, %v3020
        %v3084 = vsel %vm2194, %v2931, 0
        %3086 = vmatprep.subr.bf16.mxu0 %v3024
        %3087 = vmatpush1.bf16.msra.mxu0 %v3023
        %3088 = vmatprep.subr.bf16.mxu0 %v3026
        %3089 = vmatpush1.bf16.msra.mxu0 %v3025
        %3090 = vmatprep.subr.bf16.mxu0 %v3028
        %3091 = vmatpush1.bf16.msra.mxu0 %v3027
        %3092 = vmatprep.subr.bf16.mxu0 %v3030
        %3093 = vmatpush1.bf16.msra.mxu0 %v3029
        %3094 = vmatprep.subr.bf16.mxu0 %v3032
        %3095 = vmatpush1.bf16.msra.mxu0 %v3031
        %3096 = vmatprep.subr.bf16.mxu0 %v3034
        %3097 = vmatpush1.bf16.msra.mxu0 %v3033
        %3098 = vmatprep.subr.bf16.mxu0 %v3036
        %3099 = vmatpush1.bf16.msra.mxu0 %v3035
        %3100 = vmatprep.subr.bf16.mxu0 %v3038
        %3101 = vmatpush1.bf16.msra.mxu0 %v3037
        %3102 = vmatprep.subr.bf16.mxu0 %v3040
        %3103 = vmatpush1.bf16.msra.mxu0 %v3039
        %3104 = vmatprep.subr.bf16.mxu0 %v3042
        %3105 = vmatpush1.bf16.msra.mxu0 %v3041
        %3106 = vmatprep.subr.bf16.mxu0 %v3044
        %3107 = vmatpush1.bf16.msra.mxu0 %v3043
        %3108 = vmatprep.subr.bf16.mxu0 %v3046
        %3109 = vmatpush1.bf16.msra.mxu0 %v3045
        %3110 = vmatprep.subr.bf16.mxu0 %v3048
        %3111 = vmatpush1.bf16.msra.mxu0 %v3047
        %3112 = vmatprep.subr.bf16.mxu0 %v3050
        %3113 = vmatpush1.bf16.msra.mxu0 %v3049
        %3114 = vmatprep.subr.bf16.mxu0 %v3052
        %3115 = vmatpush1.bf16.msra.mxu0 %v3051
        %3116 = vmatprep.subr.bf16.mxu0 0
        %3117 = vmatpush1.bf16.msra.mxu0 0
        %3118 = vmatprep.mubr.bf16.mxu0 %v3084
        %3119 = vmatmul.mubr.bf16.gmra.mrb[0].mxu0 %v2930
        %v3120 = vpop.f32.mrb[0].mxu0
        %v3121 = vadd.f32 0.0, %v3120
        %v3122 = vpop.f32.mrb[0].mxu0
        %v3123 = vadd.f32 0.0, %v3122
        %v3124 = vpop.f32.mrb[0].mxu0
        %v3125 = vpop.f32.mrb[0].mxu0
        %3126 = vdwg.mxu0
        %v3127 = vadd.f32 %v2897, %v3121
        %v3128 = vadd.f32 %v2898, %v3123
        %s3129 = scalar_lea.vmem %s4, 1200
        %v3130 = vld [vmem:[%s3129] sm:$0xff]
        %v3131 = vld [vmem:[%s3129 + $0x8] sm:$0xff]
        %v3132 = vld [vmem:[%s3129 + $0x10] sm:$0xff]
        %v3133 = vld [vmem:[%s3129 + $0x18] sm:$0xff]
        %v3134 = vld [vmem:[%s3129 + $0x20] sm:$0xff]
        %v3135 = vld [vmem:[%s3129 + $0x28] sm:$0xff]
        %v3136 = vld [vmem:[%s3129 + $0x30] sm:$0xff]
        %v3137 = vld [vmem:[%s3129 + $0x38] sm:$0xff]
        %v3138 = vld [vmem:[%s3129 + $0x40] sm:$0xff]
        %v3139 = vld [vmem:[%s3129 + $0x48] sm:$0xff]
        %v3140 = vld [vmem:[%s3129 + $0x50] sm:$0xff]
        %v3141 = vld [vmem:[%s3129 + $0x58] sm:$0xff]
        %v3142 = vld [vmem:[%s3129 + $0x60] sm:$0xff]
        %v3143 = vld [vmem:[%s3129 + $0x68] sm:$0xff]
        %v3144 = vld [vmem:[%s3129 + $0x70] sm:$0xff]
        %v3145 = vld [vmem:[%s3129 + $0x78] sm:$0xff]
        %v3146 = vld [vmem:[%s3129 + $0x80] sm:$0xff]
        %v3147 = vld [vmem:[%s3129 + $0x88] sm:$0xff]
        %v3148 = vld [vmem:[%s3129 + $0x90] sm:$0xff]
        %v3149 = vld [vmem:[%s3129 + $0x98] sm:$0xff]
        %v3150 = vld [vmem:[%s3129 + $0xa0] sm:$0xff]
        %v3151 = vld [vmem:[%s3129 + $0xa8] sm:$0xff]
        %v3152 = vld [vmem:[%s3129 + $0xb0] sm:$0xff]
        %v3153 = vld [vmem:[%s3129 + $0xb8] sm:$0xff]
        %v3154 = vld [vmem:[%s3129 + $0xc0] sm:$0xff]
        %v3155 = vld [vmem:[%s3129 + $0xc8] sm:$0xff]
        %v3156 = vld [vmem:[%s3129 + $0xd0] sm:$0xff]
        %v3157 = vld [vmem:[%s3129 + $0xd8] sm:$0xff]
        %v3158 = vld [vmem:[%s3129 + $0xe0] sm:$0xff]
        %v3159 = vld [vmem:[%s3129 + $0xe8] sm:$0xff]
        %s3160 = scalar_lea.vmem %s4, 1440
        %v3161 = vld [vmem:[%s3160] sm:$0xff]
        %v3162 = vld [vmem:[%s3160 + $0x8] sm:$0xff]
        %v3163 = vld [vmem:[%s3160 + $0x10] sm:$0xff]
        %v3164 = vld [vmem:[%s3160 + $0x18] sm:$0xff]
        %v3165 = vld [vmem:[%s3160 + $0x20] sm:$0xff]
        %v3166 = vld [vmem:[%s3160 + $0x28] sm:$0xff]
        %v3167 = vld [vmem:[%s3160 + $0x30] sm:$0xff]
        %v3168 = vld [vmem:[%s3160 + $0x38] sm:$0xff]
        %v3169 = vld [vmem:[%s3160 + $0x40] sm:$0xff]
        %v3170 = vld [vmem:[%s3160 + $0x48] sm:$0xff]
        %v3171 = vld [vmem:[%s3160 + $0x50] sm:$0xff]
        %v3172 = vld [vmem:[%s3160 + $0x58] sm:$0xff]
        %v3173 = vld [vmem:[%s3160 + $0x60] sm:$0xff]
        %v3174 = vld [vmem:[%s3160 + $0x68] sm:$0xff]
        %v3175 = vld [vmem:[%s3160 + $0x70] sm:$0xff]
        %v3176 = vld [vmem:[%s3160 + $0x78] sm:$0xff]
        %v3177 = vld [vmem:[%s3160 + $0x80] sm:$0xff]
        %v3178 = vld [vmem:[%s3160 + $0x88] sm:$0xff]
        %v3179 = vld [vmem:[%s3160 + $0x90] sm:$0xff]
        %v3180 = vld [vmem:[%s3160 + $0x98] sm:$0xff]
        %v3181 = vld [vmem:[%s3160 + $0xa0] sm:$0xff]
        %v3182 = vld [vmem:[%s3160 + $0xa8] sm:$0xff]
        %v3183 = vld [vmem:[%s3160 + $0xb0] sm:$0xff]
        %v3184 = vld [vmem:[%s3160 + $0xb8] sm:$0xff]
        %v3185 = vld [vmem:[%s3160 + $0xc0] sm:$0xff]
        %v3186 = vld [vmem:[%s3160 + $0xc8] sm:$0xff]
        %v3187 = vld [vmem:[%s3160 + $0xd0] sm:$0xff]
        %v3188 = vld [vmem:[%s3160 + $0xd8] sm:$0xff]
        %v3189 = vld [vmem:[%s3160 + $0xe0] sm:$0xff]
        %v3190 = vld [vmem:[%s3160 + $0xe8] sm:$0xff]
        %v3221 = vunpack.c.l.b16 %v3161
        %v3222 = vunpack.c.h.b16 %v3161
        %v3223 = vunpack.c.l.b16 %v3162
        %v3224 = vunpack.c.h.b16 %v3162
        %v3225 = vunpack.c.l.b16 %v3163
        %v3226 = vunpack.c.h.b16 %v3163
        %v3227 = vunpack.c.l.b16 %v3164
        %v3228 = vunpack.c.h.b16 %v3164
        %v3229 = vunpack.c.l.b16 %v3165
        %v3230 = vunpack.c.h.b16 %v3165
        %v3231 = vunpack.c.l.b16 %v3166
        %v3232 = vunpack.c.h.b16 %v3166
        %v3233 = vunpack.c.l.b16 %v3167
        %v3234 = vunpack.c.h.b16 %v3167
        %v3235 = vunpack.c.l.b16 %v3168
        %v3236 = vunpack.c.h.b16 %v3168
        %v3237 = vunpack.c.l.b16 %v3169
        %v3238 = vunpack.c.h.b16 %v3169
        %v3239 = vunpack.c.l.b16 %v3170
        %v3240 = vunpack.c.h.b16 %v3170
        %v3241 = vunpack.c.l.b16 %v3171
        %v3242 = vunpack.c.h.b16 %v3171
        %v3243 = vunpack.c.l.b16 %v3172
        %v3244 = vunpack.c.h.b16 %v3172
        %v3245 = vunpack.c.l.b16 %v3173
        %v3246 = vunpack.c.h.b16 %v3173
        %v3247 = vunpack.c.l.b16 %v3174
        %v3248 = vunpack.c.h.b16 %v3174
        %v3249 = vunpack.c.l.b16 %v3175
        %v3250 = vunpack.c.h.b16 %v3175
        %v3251 = vunpack.c.l.b16 %v3176
        %v3252 = vunpack.c.h.b16 %v3176
        %v3253 = vunpack.c.l.b16 %v3177
        %v3254 = vunpack.c.h.b16 %v3177
        %v3255 = vunpack.c.l.b16 %v3178
        %v3256 = vunpack.c.h.b16 %v3178
        %v3257 = vunpack.c.l.b16 %v3179
        %v3258 = vunpack.c.h.b16 %v3179
        %v3259 = vunpack.c.l.b16 %v3180
        %v3260 = vunpack.c.h.b16 %v3180
        %v3261 = vunpack.c.l.b16 %v3181
        %v3262 = vunpack.c.h.b16 %v3181
        %v3263 = vunpack.c.l.b16 %v3182
        %v3264 = vunpack.c.h.b16 %v3182
        %v3265 = vunpack.c.l.b16 %v3183
        %v3266 = vunpack.c.h.b16 %v3183
        %v3267 = vunpack.c.l.b16 %v3184
        %v3268 = vunpack.c.h.b16 %v3184
        %v3269 = vunpack.c.l.b16 %v3185
        %v3270 = vunpack.c.h.b16 %v3185
        %v3271 = vunpack.c.l.b16 %v3186
        %v3272 = vunpack.c.h.b16 %v3186
        %v3273 = vunpack.c.l.b16 %v3187
        %v3274 = vunpack.c.h.b16 %v3187
        %v3275 = vunpack.c.l.b16 %v3188
        %v3276 = vunpack.c.h.b16 %v3188
        %v3277 = vunpack.c.l.b16 %v3189
        %v3278 = vunpack.c.h.b16 %v3189
        %v3279 = vunpack.c.l.b16 %v3190
        %v3280 = vunpack.c.h.b16 %v3190
        %v3281 = vpack.c.b16 %v3223, %v3221
        %v3282 = vpack.c.b16 %v3224, %v3222
        %v3283 = vpack.c.b16 %v3227, %v3225
        %v3284 = vpack.c.b16 %v3228, %v3226
        %v3285 = vpack.c.b16 %v3231, %v3229
        %v3286 = vpack.c.b16 %v3232, %v3230
        %v3287 = vpack.c.b16 %v3235, %v3233
        %v3288 = vpack.c.b16 %v3236, %v3234
        %v3289 = vpack.c.b16 %v3239, %v3237
        %v3290 = vpack.c.b16 %v3240, %v3238
        %v3291 = vpack.c.b16 %v3243, %v3241
        %v3292 = vpack.c.b16 %v3244, %v3242
        %v3293 = vpack.c.b16 %v3247, %v3245
        %v3294 = vpack.c.b16 %v3248, %v3246
        %v3295 = vpack.c.b16 %v3251, %v3249
        %v3296 = vpack.c.b16 %v3252, %v3250
        %v3297 = vpack.c.b16 %v3255, %v3253
        %v3298 = vpack.c.b16 %v3256, %v3254
        %v3299 = vpack.c.b16 %v3259, %v3257
        %v3300 = vpack.c.b16 %v3260, %v3258
        %v3301 = vpack.c.b16 %v3263, %v3261
        %v3302 = vpack.c.b16 %v3264, %v3262
        %v3303 = vpack.c.b16 %v3267, %v3265
        %v3304 = vpack.c.b16 %v3268, %v3266
        %v3305 = vpack.c.b16 %v3271, %v3269
        %v3306 = vpack.c.b16 %v3272, %v3270
        %v3307 = vpack.c.b16 %v3275, %v3273
        %v3308 = vpack.c.b16 %v3276, %v3274
        %v3309 = vpack.c.b16 %v3279, %v3277
        %v3310 = vpack.c.b16 %v3280, %v3278
        %3341 = vmatprep.subr.bf16.mxu0 %v3282
        %3342 = vmatpush1.bf16.msra.mxu0 %v3281
        %3343 = vmatprep.subr.bf16.mxu0 %v3284
        %3344 = vmatpush1.bf16.msra.mxu0 %v3283
        %3345 = vmatprep.subr.bf16.mxu0 %v3286
        %3346 = vmatpush1.bf16.msra.mxu0 %v3285
        %3347 = vmatprep.subr.bf16.mxu0 %v3288
        %3348 = vmatpush1.bf16.msra.mxu0 %v3287
        %3349 = vmatprep.subr.bf16.mxu0 %v3290
        %3350 = vmatpush1.bf16.msra.mxu0 %v3289
        %3351 = vmatprep.subr.bf16.mxu0 %v3292
        %3352 = vmatpush1.bf16.msra.mxu0 %v3291
        %3353 = vmatprep.subr.bf16.mxu0 %v3294
        %3354 = vmatpush1.bf16.msra.mxu0 %v3293
        %3355 = vmatprep.subr.bf16.mxu0 %v3296
        %3356 = vmatpush1.bf16.msra.mxu0 %v3295
        %3357 = vmatprep.subr.bf16.mxu0 %v3298
        %3358 = vmatpush1.bf16.msra.mxu0 %v3297
        %3359 = vmatprep.subr.bf16.mxu0 %v3300
        %3360 = vmatpush1.bf16.msra.mxu0 %v3299
        %3361 = vmatprep.subr.bf16.mxu0 %v3302
        %3362 = vmatpush1.bf16.msra.mxu0 %v3301
        %3363 = vmatprep.subr.bf16.mxu0 %v3304
        %3364 = vmatpush1.bf16.msra.mxu0 %v3303
        %3365 = vmatprep.subr.bf16.mxu0 %v3306
        %3366 = vmatpush1.bf16.msra.mxu0 %v3305
        %3367 = vmatprep.subr.bf16.mxu0 %v3308
        %3368 = vmatpush1.bf16.msra.mxu0 %v3307
        %3369 = vmatprep.subr.bf16.mxu0 %v3310
        %3370 = vmatpush1.bf16.msra.mxu0 %v3309
        %3371 = vmatprep.subr.bf16.mxu0 0
        %3372 = vmatpush1.bf16.msra.mxu0 0
        %3373 = vmatprep.mubr.bf16.mxu0 %v2196
        %3374 = vmatmul.mubr.bf16.gmra.mrb[0].mxu0 %v2035
        %v3375 = vpop.f32.mrb[0].mxu0
        %v3376 = vadd.f32 0.0, %v3375
        %v3377 = vpop.f32.mrb[0].mxu0
        %v3378 = vadd.f32 0.0, %v3377
        %v3379 = vpop.f32.mrb[0].mxu0
        %v3380 = vpop.f32.mrb[0].mxu0
        %3381 = vdwg.mxu0
        %v3412 = vunpack.c.l.b16 %v3130
        %v3413 = vunpack.c.h.b16 %v3130
        %v3414 = vunpack.c.l.b16 %v3131
        %v3415 = vunpack.c.h.b16 %v3131
        %v3416 = vunpack.c.l.b16 %v3132
        %v3417 = vunpack.c.h.b16 %v3132
        %v3418 = vunpack.c.l.b16 %v3133
        %v3419 = vunpack.c.h.b16 %v3133
        %v3420 = vunpack.c.l.b16 %v3134
        %v3421 = vunpack.c.h.b16 %v3134
        %v3422 = vunpack.c.l.b16 %v3135
        %v3423 = vunpack.c.h.b16 %v3135
        %v3424 = vunpack.c.l.b16 %v3136
        %v3425 = vunpack.c.h.b16 %v3136
        %v3426 = vunpack.c.l.b16 %v3137
        %v3427 = vunpack.c.h.b16 %v3137
        %v3428 = vunpack.c.l.b16 %v3138
        %v3429 = vunpack.c.h.b16 %v3138
        %v3430 = vunpack.c.l.b16 %v3139
        %v3431 = vunpack.c.h.b16 %v3139
        %v3432 = vunpack.c.l.b16 %v3140
        %v3433 = vunpack.c.h.b16 %v3140
        %v3434 = vunpack.c.l.b16 %v3141
        %v3435 = vunpack.c.h.b16 %v3141
        %v3436 = vunpack.c.l.b16 %v3142
        %v3437 = vunpack.c.h.b16 %v3142
        %v3438 = vunpack.c.l.b16 %v3143
        %v3439 = vunpack.c.h.b16 %v3143
        %v3440 = vunpack.c.l.b16 %v3144
        %v3441 = vunpack.c.h.b16 %v3144
        %v3442 = vunpack.c.l.b16 %v3145
        %v3443 = vunpack.c.h.b16 %v3145
        %v3444 = vunpack.c.l.b16 %v3146
        %v3445 = vunpack.c.h.b16 %v3146
        %v3446 = vunpack.c.l.b16 %v3147
        %v3447 = vunpack.c.h.b16 %v3147
        %v3448 = vunpack.c.l.b16 %v3148
        %v3449 = vunpack.c.h.b16 %v3148
        %v3450 = vunpack.c.l.b16 %v3149
        %v3451 = vunpack.c.h.b16 %v3149
        %v3452 = vunpack.c.l.b16 %v3150
        %v3453 = vunpack.c.h.b16 %v3150
        %v3454 = vunpack.c.l.b16 %v3151
        %v3455 = vunpack.c.h.b16 %v3151
        %v3456 = vunpack.c.l.b16 %v3152
        %v3457 = vunpack.c.h.b16 %v3152
        %v3458 = vunpack.c.l.b16 %v3153
        %v3459 = vunpack.c.h.b16 %v3153
        %v3460 = vunpack.c.l.b16 %v3154
        %v3461 = vunpack.c.h.b16 %v3154
        %v3462 = vunpack.c.l.b16 %v3155
        %v3463 = vunpack.c.h.b16 %v3155
        %v3464 = vunpack.c.l.b16 %v3156
        %v3465 = vunpack.c.h.b16 %v3156
        %v3466 = vunpack.c.l.b16 %v3157
        %v3467 = vunpack.c.h.b16 %v3157
        %v3468 = vunpack.c.l.b16 %v3158
        %v3469 = vunpack.c.h.b16 %v3158
        %v3470 = vunpack.c.l.b16 %v3159
        %v3471 = vunpack.c.h.b16 %v3159
        %v3472 = vpack.c.b16 %v3414, %v3412
        %v3473 = vpack.c.b16 %v3415, %v3413
        %v3474 = vpack.c.b16 %v3418, %v3416
        %v3475 = vpack.c.b16 %v3419, %v3417
        %v3476 = vpack.c.b16 %v3422, %v3420
        %v3477 = vpack.c.b16 %v3423, %v3421
        %v3478 = vpack.c.b16 %v3426, %v3424
        %v3479 = vpack.c.b16 %v3427, %v3425
        %v3480 = vpack.c.b16 %v3430, %v3428
        %v3481 = vpack.c.b16 %v3431, %v3429
        %v3482 = vpack.c.b16 %v3434, %v3432
        %v3483 = vpack.c.b16 %v3435, %v3433
        %v3484 = vpack.c.b16 %v3438, %v3436
        %v3485 = vpack.c.b16 %v3439, %v3437
        %v3486 = vpack.c.b16 %v3442, %v3440
        %v3487 = vpack.c.b16 %v3443, %v3441
        %v3488 = vpack.c.b16 %v3446, %v3444
        %v3489 = vpack.c.b16 %v3447, %v3445
        %v3490 = vpack.c.b16 %v3450, %v3448
        %v3491 = vpack.c.b16 %v3451, %v3449
        %v3492 = vpack.c.b16 %v3454, %v3452
        %v3493 = vpack.c.b16 %v3455, %v3453
        %v3494 = vpack.c.b16 %v3458, %v3456
        %v3495 = vpack.c.b16 %v3459, %v3457
        %v3496 = vpack.c.b16 %v3462, %v3460
        %v3497 = vpack.c.b16 %v3463, %v3461
        %v3498 = vpack.c.b16 %v3466, %v3464
        %v3499 = vpack.c.b16 %v3467, %v3465
        %v3500 = vpack.c.b16 %v3470, %v3468
        %v3501 = vpack.c.b16 %v3471, %v3469
        %3532 = vmatprep.subr.bf16.mxu0 %v3473
        %3533 = vmatpush1.bf16.msra.mxu0 %v3472
        %3534 = vmatprep.subr.bf16.mxu0 %v3475
        %3535 = vmatpush1.bf16.msra.mxu0 %v3474
        %3536 = vmatprep.subr.bf16.mxu0 %v3477
        %3537 = vmatpush1.bf16.msra.mxu0 %v3476
        %3538 = vmatprep.subr.bf16.mxu0 %v3479
        %3539 = vmatpush1.bf16.msra.mxu0 %v3478
        %3540 = vmatprep.subr.bf16.mxu0 %v3481
        %3541 = vmatpush1.bf16.msra.mxu0 %v3480
        %3542 = vmatprep.subr.bf16.mxu0 %v3483
        %3543 = vmatpush1.bf16.msra.mxu0 %v3482
        %3544 = vmatprep.subr.bf16.mxu0 %v3485
        %3545 = vmatpush1.bf16.msra.mxu0 %v3484
        %3546 = vmatprep.subr.bf16.mxu0 %v3487
        %3547 = vmatpush1.bf16.msra.mxu0 %v3486
        %3548 = vmatprep.subr.bf16.mxu0 %v3489
        %3549 = vmatpush1.bf16.msra.mxu0 %v3488
        %3550 = vmatprep.subr.bf16.mxu0 %v3491
        %3551 = vmatpush1.bf16.msra.mxu0 %v3490
        %3552 = vmatprep.subr.bf16.mxu0 %v3493
        %3553 = vmatpush1.bf16.msra.mxu0 %v3492
        %3554 = vmatprep.subr.bf16.mxu0 %v3495
        %3555 = vmatpush1.bf16.msra.mxu0 %v3494
        %3556 = vmatprep.subr.bf16.mxu0 %v3497
        %3557 = vmatpush1.bf16.msra.mxu0 %v3496
        %3558 = vmatprep.subr.bf16.mxu0 %v3499
        %3559 = vmatpush1.bf16.msra.mxu0 %v3498
        %3560 = vmatprep.subr.bf16.mxu0 %v3501
        %3561 = vmatpush1.bf16.msra.mxu0 %v3500
        %3562 = vmatprep.subr.bf16.mxu0 0
        %3563 = vmatpush1.bf16.msra.mxu0 0
        %3564 = vmatprep.mubr.bf16.mxu0 %v2390
        %3565 = vmatmul.mubr.bf16.gmra.mrb[0].mxu0 %v1964
        %v3566 = vpop.f32.mrb[0].mxu0
        %v3567 = vadd.f32 %v3376, %v3566
        %v3568 = vpop.f32.mrb[0].mxu0
        %v3569 = vadd.f32 %v3378, %v3568
        %v3570 = vpop.f32.mrb[0].mxu0
        %v3571 = vpop.f32.mrb[0].mxu0
        %3572 = vdwg.mxu0
        %s3573 = scalar_lea.vmem %s4, 1680
        %v3574 = vld [vmem:[%s3573] sm:$0xff]
        %v3575 = vld [vmem:[%s3573 + $0x8] sm:$0xff]
        %v3576 = vld [vmem:[%s3573 + $0x10] sm:$0xff]
        %v3577 = vld [vmem:[%s3573 + $0x18] sm:$0xff]
        %v3578 = vld [vmem:[%s3573 + $0x20] sm:$0xff]
        %v3579 = vld [vmem:[%s3573 + $0x28] sm:$0xff]
        %v3580 = vld [vmem:[%s3573 + $0x30] sm:$0xff]
        %v3581 = vld [vmem:[%s3573 + $0x38] sm:$0xff]
        %v3582 = vld [vmem:[%s3573 + $0x40] sm:$0xff]
        %v3583 = vld [vmem:[%s3573 + $0x48] sm:$0xff]
        %v3584 = vld [vmem:[%s3573 + $0x50] sm:$0xff]
        %v3585 = vld [vmem:[%s3573 + $0x58] sm:$0xff]
        %v3586 = vld [vmem:[%s3573 + $0x60] sm:$0xff]
        %v3587 = vld [vmem:[%s3573 + $0x68] sm:$0xff]
        %v3588 = vld [vmem:[%s3573 + $0x70] sm:$0xff]
        %v3589 = vld [vmem:[%s3573 + $0x78] sm:$0xff]
        %v3590 = vld [vmem:[%s3573 + $0x80] sm:$0xff]
        %v3591 = vld [vmem:[%s3573 + $0x88] sm:$0xff]
        %v3592 = vld [vmem:[%s3573 + $0x90] sm:$0xff]
        %v3593 = vld [vmem:[%s3573 + $0x98] sm:$0xff]
        %v3594 = vld [vmem:[%s3573 + $0xa0] sm:$0xff]
        %v3595 = vld [vmem:[%s3573 + $0xa8] sm:$0xff]
        %v3596 = vld [vmem:[%s3573 + $0xb0] sm:$0xff]
        %v3597 = vld [vmem:[%s3573 + $0xb8] sm:$0xff]
        %v3598 = vld [vmem:[%s3573 + $0xc0] sm:$0xff]
        %v3599 = vld [vmem:[%s3573 + $0xc8] sm:$0xff]
        %v3600 = vld [vmem:[%s3573 + $0xd0] sm:$0xff]
        %v3601 = vld [vmem:[%s3573 + $0xd8] sm:$0xff]
        %v3602 = vld [vmem:[%s3573 + $0xe0] sm:$0xff]
        %v3603 = vld [vmem:[%s3573 + $0xe8] sm:$0xff]
        %v3634 = vunpack.c.l.b16 %v3574
        %v3635 = vunpack.c.h.b16 %v3574
        %v3636 = vunpack.c.l.b16 %v3575
        %v3637 = vunpack.c.h.b16 %v3575
        %v3638 = vunpack.c.l.b16 %v3576
        %v3639 = vunpack.c.h.b16 %v3576
        %v3640 = vunpack.c.l.b16 %v3577
        %v3641 = vunpack.c.h.b16 %v3577
        %v3642 = vunpack.c.l.b16 %v3578
        %v3643 = vunpack.c.h.b16 %v3578
        %v3644 = vunpack.c.l.b16 %v3579
        %v3645 = vunpack.c.h.b16 %v3579
        %v3646 = vunpack.c.l.b16 %v3580
        %v3647 = vunpack.c.h.b16 %v3580
        %v3648 = vunpack.c.l.b16 %v3581
        %v3649 = vunpack.c.h.b16 %v3581
        %v3650 = vunpack.c.l.b16 %v3582
        %v3651 = vunpack.c.h.b16 %v3582
        %v3652 = vunpack.c.l.b16 %v3583
        %v3653 = vunpack.c.h.b16 %v3583
        %v3654 = vunpack.c.l.b16 %v3584
        %v3655 = vunpack.c.h.b16 %v3584
        %v3656 = vunpack.c.l.b16 %v3585
        %v3657 = vunpack.c.h.b16 %v3585
        %v3658 = vunpack.c.l.b16 %v3586
        %v3659 = vunpack.c.h.b16 %v3586
        %v3660 = vunpack.c.l.b16 %v3587
        %v3661 = vunpack.c.h.b16 %v3587
        %v3662 = vunpack.c.l.b16 %v3588
        %v3663 = vunpack.c.h.b16 %v3588
        %v3664 = vunpack.c.l.b16 %v3589
        %v3665 = vunpack.c.h.b16 %v3589
        %v3666 = vunpack.c.l.b16 %v3590
        %v3667 = vunpack.c.h.b16 %v3590
        %v3668 = vunpack.c.l.b16 %v3591
        %v3669 = vunpack.c.h.b16 %v3591
        %v3670 = vunpack.c.l.b16 %v3592
        %v3671 = vunpack.c.h.b16 %v3592
        %v3672 = vunpack.c.l.b16 %v3593
        %v3673 = vunpack.c.h.b16 %v3593
        %v3674 = vunpack.c.l.b16 %v3594
        %v3675 = vunpack.c.h.b16 %v3594
        %v3676 = vunpack.c.l.b16 %v3595
        %v3677 = vunpack.c.h.b16 %v3595
        %v3678 = vunpack.c.l.b16 %v3596
        %v3679 = vunpack.c.h.b16 %v3596
        %v3680 = vunpack.c.l.b16 %v3597
        %v3681 = vunpack.c.h.b16 %v3597
        %v3682 = vunpack.c.l.b16 %v3598
        %v3683 = vunpack.c.h.b16 %v3598
        %v3684 = vunpack.c.l.b16 %v3599
        %v3685 = vunpack.c.h.b16 %v3599
        %v3686 = vunpack.c.l.b16 %v3600
        %v3687 = vunpack.c.h.b16 %v3600
        %v3688 = vunpack.c.l.b16 %v3601
        %v3689 = vunpack.c.h.b16 %v3601
        %v3690 = vunpack.c.l.b16 %v3602
        %v3691 = vunpack.c.h.b16 %v3602
        %v3692 = vunpack.c.l.b16 %v3603
        %v3693 = vunpack.c.h.b16 %v3603
        %v3694 = vpack.c.b16 %v3636, %v3634
        %v3695 = vpack.c.b16 %v3637, %v3635
        %v3696 = vpack.c.b16 %v3640, %v3638
        %v3697 = vpack.c.b16 %v3641, %v3639
        %v3698 = vpack.c.b16 %v3644, %v3642
        %v3699 = vpack.c.b16 %v3645, %v3643
        %v3700 = vpack.c.b16 %v3648, %v3646
        %v3701 = vpack.c.b16 %v3649, %v3647
        %v3702 = vpack.c.b16 %v3652, %v3650
        %v3703 = vpack.c.b16 %v3653, %v3651
        %v3704 = vpack.c.b16 %v3656, %v3654
        %v3705 = vpack.c.b16 %v3657, %v3655
        %v3706 = vpack.c.b16 %v3660, %v3658
        %v3707 = vpack.c.b16 %v3661, %v3659
        %v3708 = vpack.c.b16 %v3664, %v3662
        %v3709 = vpack.c.b16 %v3665, %v3663
        %v3710 = vpack.c.b16 %v3668, %v3666
        %v3711 = vpack.c.b16 %v3669, %v3667
        %v3712 = vpack.c.b16 %v3672, %v3670
        %v3713 = vpack.c.b16 %v3673, %v3671
        %v3714 = vpack.c.b16 %v3676, %v3674
        %v3715 = vpack.c.b16 %v3677, %v3675
        %v3716 = vpack.c.b16 %v3680, %v3678
        %v3717 = vpack.c.b16 %v3681, %v3679
        %v3718 = vpack.c.b16 %v3684, %v3682
        %v3719 = vpack.c.b16 %v3685, %v3683
        %v3720 = vpack.c.b16 %v3688, %v3686
        %v3721 = vpack.c.b16 %v3689, %v3687
        %v3722 = vpack.c.b16 %v3692, %v3690
        %v3723 = vpack.c.b16 %v3693, %v3691
        %3754 = vmatprep.subr.bf16.mxu0 %v3695
        %3755 = vmatpush1.bf16.msra.mxu0 %v3694
        %3756 = vmatprep.subr.bf16.mxu0 %v3697
        %3757 = vmatpush1.bf16.msra.mxu0 %v3696
        %3758 = vmatprep.subr.bf16.mxu0 %v3699
        %3759 = vmatpush1.bf16.msra.mxu0 %v3698
        %3760 = vmatprep.subr.bf16.mxu0 %v3701
        %3761 = vmatpush1.bf16.msra.mxu0 %v3700
        %3762 = vmatprep.subr.bf16.mxu0 %v3703
        %3763 = vmatpush1.bf16.msra.mxu0 %v3702
        %3764 = vmatprep.subr.bf16.mxu0 %v3705
        %3765 = vmatpush1.bf16.msra.mxu0 %v3704
        %3766 = vmatprep.subr.bf16.mxu0 %v3707
        %3767 = vmatpush1.bf16.msra.mxu0 %v3706
        %3768 = vmatprep.subr.bf16.mxu0 %v3709
        %3769 = vmatpush1.bf16.msra.mxu0 %v3708
        %3770 = vmatprep.subr.bf16.mxu0 %v3711
        %3771 = vmatpush1.bf16.msra.mxu0 %v3710
        %3772 = vmatprep.subr.bf16.mxu0 %v3713
        %3773 = vmatpush1.bf16.msra.mxu0 %v3712
        %3774 = vmatprep.subr.bf16.mxu0 %v3715
        %3775 = vmatpush1.bf16.msra.mxu0 %v3714
        %3776 = vmatprep.subr.bf16.mxu0 %v3717
        %3777 = vmatpush1.bf16.msra.mxu0 %v3716
        %3778 = vmatprep.subr.bf16.mxu0 %v3719
        %3779 = vmatpush1.bf16.msra.mxu0 %v3718
        %3780 = vmatprep.subr.bf16.mxu0 %v3721
        %3781 = vmatpush1.bf16.msra.mxu0 %v3720
        %3782 = vmatprep.subr.bf16.mxu0 %v3723
        %3783 = vmatpush1.bf16.msra.mxu0 %v3722
        %3784 = vmatprep.subr.bf16.mxu0 0
        %3785 = vmatpush1.bf16.msra.mxu0 0
        %3786 = vmatprep.mubr.bf16.mxu0 %v2620
        %3787 = vmatmul.mubr.bf16.gmra.mrb[0].mxu0 %v2466
        %v3788 = vpop.f32.mrb[0].mxu0
        %v3789 = vadd.f32 0.0, %v3788
        %v3790 = vpop.f32.mrb[0].mxu0
        %v3791 = vadd.f32 0.0, %v3790
        %v3792 = vpop.f32.mrb[0].mxu0
        %v3793 = vpop.f32.mrb[0].mxu0
        %3794 = vdwg.mxu0
        %v3795 = vadd.f32 %v3567, %v3789
        %v3796 = vadd.f32 %v3569, %v3791
        %s3797 = scalar_lea.vmem %s4, 1920
        %v3798 = vld [vmem:[%s3797] sm:$0xff]
        %v3799 = vld [vmem:[%s3797 + $0x8] sm:$0xff]
        %v3800 = vld [vmem:[%s3797 + $0x10] sm:$0xff]
        %v3801 = vld [vmem:[%s3797 + $0x18] sm:$0xff]
        %v3802 = vld [vmem:[%s3797 + $0x20] sm:$0xff]
        %v3803 = vld [vmem:[%s3797 + $0x28] sm:$0xff]
        %v3804 = vld [vmem:[%s3797 + $0x30] sm:$0xff]
        %v3805 = vld [vmem:[%s3797 + $0x38] sm:$0xff]
        %v3806 = vld [vmem:[%s3797 + $0x40] sm:$0xff]
        %v3807 = vld [vmem:[%s3797 + $0x48] sm:$0xff]
        %v3808 = vld [vmem:[%s3797 + $0x50] sm:$0xff]
        %v3809 = vld [vmem:[%s3797 + $0x58] sm:$0xff]
        %v3810 = vld [vmem:[%s3797 + $0x60] sm:$0xff]
        %v3811 = vld [vmem:[%s3797 + $0x68] sm:$0xff]
        %v3812 = vld [vmem:[%s3797 + $0x70] sm:$0xff]
        %v3813 = vld [vmem:[%s3797 + $0x78] sm:$0xff]
        %v3814 = vld [vmem:[%s3797 + $0x80] sm:$0xff]
        %v3815 = vld [vmem:[%s3797 + $0x88] sm:$0xff]
        %v3816 = vld [vmem:[%s3797 + $0x90] sm:$0xff]
        %v3817 = vld [vmem:[%s3797 + $0x98] sm:$0xff]
        %v3818 = vld [vmem:[%s3797 + $0xa0] sm:$0xff]
        %v3819 = vld [vmem:[%s3797 + $0xa8] sm:$0xff]
        %v3820 = vld [vmem:[%s3797 + $0xb0] sm:$0xff]
        %v3821 = vld [vmem:[%s3797 + $0xb8] sm:$0xff]
        %v3822 = vld [vmem:[%s3797 + $0xc0] sm:$0xff]
        %v3823 = vld [vmem:[%s3797 + $0xc8] sm:$0xff]
        %v3824 = vld [vmem:[%s3797 + $0xd0] sm:$0xff]
        %v3825 = vld [vmem:[%s3797 + $0xd8] sm:$0xff]
        %v3826 = vld [vmem:[%s3797 + $0xe0] sm:$0xff]
        %v3827 = vld [vmem:[%s3797 + $0xe8] sm:$0xff]
        %v3858 = vunpack.c.l.b16 %v3798
        %v3859 = vunpack.c.h.b16 %v3798
        %v3860 = vunpack.c.l.b16 %v3799
        %v3861 = vunpack.c.h.b16 %v3799
        %v3862 = vunpack.c.l.b16 %v3800
        %v3863 = vunpack.c.h.b16 %v3800
        %v3864 = vunpack.c.l.b16 %v3801
        %v3865 = vunpack.c.h.b16 %v3801
        %v3866 = vunpack.c.l.b16 %v3802
        %v3867 = vunpack.c.h.b16 %v3802
        %v3868 = vunpack.c.l.b16 %v3803
        %v3869 = vunpack.c.h.b16 %v3803
        %v3870 = vunpack.c.l.b16 %v3804
        %v3871 = vunpack.c.h.b16 %v3804
        %v3872 = vunpack.c.l.b16 %v3805
        %v3873 = vunpack.c.h.b16 %v3805
        %v3874 = vunpack.c.l.b16 %v3806
        %v3875 = vunpack.c.h.b16 %v3806
        %v3876 = vunpack.c.l.b16 %v3807
        %v3877 = vunpack.c.h.b16 %v3807
        %v3878 = vunpack.c.l.b16 %v3808
        %v3879 = vunpack.c.h.b16 %v3808
        %v3880 = vunpack.c.l.b16 %v3809
        %v3881 = vunpack.c.h.b16 %v3809
        %v3882 = vunpack.c.l.b16 %v3810
        %v3883 = vunpack.c.h.b16 %v3810
        %v3884 = vunpack.c.l.b16 %v3811
        %v3885 = vunpack.c.h.b16 %v3811
        %v3886 = vunpack.c.l.b16 %v3812
        %v3887 = vunpack.c.h.b16 %v3812
        %v3888 = vunpack.c.l.b16 %v3813
        %v3889 = vunpack.c.h.b16 %v3813
        %v3890 = vunpack.c.l.b16 %v3814
        %v3891 = vunpack.c.h.b16 %v3814
        %v3892 = vunpack.c.l.b16 %v3815
        %v3893 = vunpack.c.h.b16 %v3815
        %v3894 = vunpack.c.l.b16 %v3816
        %v3895 = vunpack.c.h.b16 %v3816
        %v3896 = vunpack.c.l.b16 %v3817
        %v3897 = vunpack.c.h.b16 %v3817
        %v3898 = vunpack.c.l.b16 %v3818
        %v3899 = vunpack.c.h.b16 %v3818
        %v3900 = vunpack.c.l.b16 %v3819
        %v3901 = vunpack.c.h.b16 %v3819
        %v3902 = vunpack.c.l.b16 %v3820
        %v3903 = vunpack.c.h.b16 %v3820
        %v3904 = vunpack.c.l.b16 %v3821
        %v3905 = vunpack.c.h.b16 %v3821
        %v3906 = vunpack.c.l.b16 %v3822
        %v3907 = vunpack.c.h.b16 %v3822
        %v3908 = vunpack.c.l.b16 %v3823
        %v3909 = vunpack.c.h.b16 %v3823
        %v3910 = vunpack.c.l.b16 %v3824
        %v3911 = vunpack.c.h.b16 %v3824
        %v3912 = vunpack.c.l.b16 %v3825
        %v3913 = vunpack.c.h.b16 %v3825
        %v3914 = vunpack.c.l.b16 %v3826
        %v3915 = vunpack.c.h.b16 %v3826
        %v3916 = vunpack.c.l.b16 %v3827
        %v3917 = vunpack.c.h.b16 %v3827
        %v3918 = vpack.c.b16 %v3860, %v3858
        %v3919 = vpack.c.b16 %v3861, %v3859
        %v3920 = vpack.c.b16 %v3864, %v3862
        %v3921 = vpack.c.b16 %v3865, %v3863
        %v3922 = vpack.c.b16 %v3868, %v3866
        %v3923 = vpack.c.b16 %v3869, %v3867
        %v3924 = vpack.c.b16 %v3872, %v3870
        %v3925 = vpack.c.b16 %v3873, %v3871
        %v3926 = vpack.c.b16 %v3876, %v3874
        %v3927 = vpack.c.b16 %v3877, %v3875
        %v3928 = vpack.c.b16 %v3880, %v3878
        %v3929 = vpack.c.b16 %v3881, %v3879
        %v3930 = vpack.c.b16 %v3884, %v3882
        %v3931 = vpack.c.b16 %v3885, %v3883
        %v3932 = vpack.c.b16 %v3888, %v3886
        %v3933 = vpack.c.b16 %v3889, %v3887
        %v3934 = vpack.c.b16 %v3892, %v3890
        %v3935 = vpack.c.b16 %v3893, %v3891
        %v3936 = vpack.c.b16 %v3896, %v3894
        %v3937 = vpack.c.b16 %v3897, %v3895
        %v3938 = vpack.c.b16 %v3900, %v3898
        %v3939 = vpack.c.b16 %v3901, %v3899
        %v3940 = vpack.c.b16 %v3904, %v3902
        %v3941 = vpack.c.b16 %v3905, %v3903
        %v3942 = vpack.c.b16 %v3908, %v3906
        %v3943 = vpack.c.b16 %v3909, %v3907
        %v3944 = vpack.c.b16 %v3912, %v3910
        %v3945 = vpack.c.b16 %v3913, %v3911
        %v3946 = vpack.c.b16 %v3916, %v3914
        %v3947 = vpack.c.b16 %v3917, %v3915
        %3978 = vmatprep.subr.bf16.mxu0 %v3919
        %3979 = vmatpush1.bf16.msra.mxu0 %v3918
        %3980 = vmatprep.subr.bf16.mxu0 %v3921
        %3981 = vmatpush1.bf16.msra.mxu0 %v3920
        %3982 = vmatprep.subr.bf16.mxu0 %v3923
        %3983 = vmatpush1.bf16.msra.mxu0 %v3922
        %3984 = vmatprep.subr.bf16.mxu0 %v3925
        %3985 = vmatpush1.bf16.msra.mxu0 %v3924
        %3986 = vmatprep.subr.bf16.mxu0 %v3927
        %3987 = vmatpush1.bf16.msra.mxu0 %v3926
        %3988 = vmatprep.subr.bf16.mxu0 %v3929
        %3989 = vmatpush1.bf16.msra.mxu0 %v3928
        %3990 = vmatprep.subr.bf16.mxu0 %v3931
        %3991 = vmatpush1.bf16.msra.mxu0 %v3930
        %3992 = vmatprep.subr.bf16.mxu0 %v3933
        %3993 = vmatpush1.bf16.msra.mxu0 %v3932
        %3994 = vmatprep.subr.bf16.mxu0 %v3935
        %3995 = vmatpush1.bf16.msra.mxu0 %v3934
        %3996 = vmatprep.subr.bf16.mxu0 %v3937
        %3997 = vmatpush1.bf16.msra.mxu0 %v3936
        %3998 = vmatprep.subr.bf16.mxu0 %v3939
        %3999 = vmatpush1.bf16.msra.mxu0 %v3938
        %4000 = vmatprep.subr.bf16.mxu0 %v3941
        %4001 = vmatpush1.bf16.msra.mxu0 %v3940
        %4002 = vmatprep.subr.bf16.mxu0 %v3943
        %4003 = vmatpush1.bf16.msra.mxu0 %v3942
        %4004 = vmatprep.subr.bf16.mxu0 %v3945
        %4005 = vmatpush1.bf16.msra.mxu0 %v3944
        %4006 = vmatprep.subr.bf16.mxu0 %v3947
        %4007 = vmatpush1.bf16.msra.mxu0 %v3946
        %4008 = vmatprep.subr.bf16.mxu0 0
        %4009 = vmatpush1.bf16.msra.mxu0 0
        %4010 = vmatprep.mubr.bf16.mxu0 %v2854
        %4011 = vmatmul.mubr.bf16.gmra.mrb[0].mxu0 %v2698
        %v4012 = vpop.f32.mrb[0].mxu0
        %v4013 = vadd.f32 0.0, %v4012
        %v4014 = vpop.f32.mrb[0].mxu0
        %v4015 = vadd.f32 0.0, %v4014
        %v4016 = vpop.f32.mrb[0].mxu0
        %v4017 = vpop.f32.mrb[0].mxu0
        %4018 = vdwg.mxu0
        %v4019 = vadd.f32 %v3795, %v4013
        %v4020 = vadd.f32 %v3796, %v4015
        %s4021 = scalar_lea.vmem %s4, 2160
        %v4022 = vld [vmem:[%s4021] sm:$0xff]
        %v4023 = vld [vmem:[%s4021 + $0x8] sm:$0xff]
        %v4024 = vld [vmem:[%s4021 + $0x10] sm:$0xff]
        %v4025 = vld [vmem:[%s4021 + $0x18] sm:$0xff]
        %v4026 = vld [vmem:[%s4021 + $0x20] sm:$0xff]
        %v4027 = vld [vmem:[%s4021 + $0x28] sm:$0xff]
        %v4028 = vld [vmem:[%s4021 + $0x30] sm:$0xff]
        %v4029 = vld [vmem:[%s4021 + $0x38] sm:$0xff]
        %v4030 = vld [vmem:[%s4021 + $0x40] sm:$0xff]
        %v4031 = vld [vmem:[%s4021 + $0x48] sm:$0xff]
        %v4032 = vld [vmem:[%s4021 + $0x50] sm:$0xff]
        %v4033 = vld [vmem:[%s4021 + $0x58] sm:$0xff]
        %v4034 = vld [vmem:[%s4021 + $0x60] sm:$0xff]
        %v4035 = vld [vmem:[%s4021 + $0x68] sm:$0xff]
        %v4036 = vld [vmem:[%s4021 + $0x70] sm:$0xff]
        %v4037 = vld [vmem:[%s4021 + $0x78] sm:$0xff]
        %v4038 = vld [vmem:[%s4021 + $0x80] sm:$0xff]
        %v4039 = vld [vmem:[%s4021 + $0x88] sm:$0xff]
        %v4040 = vld [vmem:[%s4021 + $0x90] sm:$0xff]
        %v4041 = vld [vmem:[%s4021 + $0x98] sm:$0xff]
        %v4042 = vld [vmem:[%s4021 + $0xa0] sm:$0xff]
        %v4043 = vld [vmem:[%s4021 + $0xa8] sm:$0xff]
        %v4044 = vld [vmem:[%s4021 + $0xb0] sm:$0xff]
        %v4045 = vld [vmem:[%s4021 + $0xb8] sm:$0xff]
        %v4046 = vld [vmem:[%s4021 + $0xc0] sm:$0xff]
        %v4047 = vld [vmem:[%s4021 + $0xc8] sm:$0xff]
        %v4048 = vld [vmem:[%s4021 + $0xd0] sm:$0xff]
        %v4049 = vld [vmem:[%s4021 + $0xd8] sm:$0xff]
        %v4050 = vld [vmem:[%s4021 + $0xe0] sm:$0xff]
        %v4051 = vld [vmem:[%s4021 + $0xe8] sm:$0xff]
        %v4082 = vunpack.c.l.b16 %v4022
        %v4083 = vunpack.c.h.b16 %v4022
        %v4084 = vunpack.c.l.b16 %v4023
        %v4085 = vunpack.c.h.b16 %v4023
        %v4086 = vunpack.c.l.b16 %v4024
        %v4087 = vunpack.c.h.b16 %v4024
        %v4088 = vunpack.c.l.b16 %v4025
        %v4089 = vunpack.c.h.b16 %v4025
        %v4090 = vunpack.c.l.b16 %v4026
        %v4091 = vunpack.c.h.b16 %v4026
        %v4092 = vunpack.c.l.b16 %v4027
        %v4093 = vunpack.c.h.b16 %v4027
        %v4094 = vunpack.c.l.b16 %v4028
        %v4095 = vunpack.c.h.b16 %v4028
        %v4096 = vunpack.c.l.b16 %v4029
        %v4097 = vunpack.c.h.b16 %v4029
        %v4098 = vunpack.c.l.b16 %v4030
        %v4099 = vunpack.c.h.b16 %v4030
        %v4100 = vunpack.c.l.b16 %v4031
        %v4101 = vunpack.c.h.b16 %v4031
        %v4102 = vunpack.c.l.b16 %v4032
        %v4103 = vunpack.c.h.b16 %v4032
        %v4104 = vunpack.c.l.b16 %v4033
        %v4105 = vunpack.c.h.b16 %v4033
        %v4106 = vunpack.c.l.b16 %v4034
        %v4107 = vunpack.c.h.b16 %v4034
        %v4108 = vunpack.c.l.b16 %v4035
        %v4109 = vunpack.c.h.b16 %v4035
        %v4110 = vunpack.c.l.b16 %v4036
        %v4111 = vunpack.c.h.b16 %v4036
        %v4112 = vunpack.c.l.b16 %v4037
        %v4113 = vunpack.c.h.b16 %v4037
        %v4114 = vunpack.c.l.b16 %v4038
        %v4115 = vunpack.c.h.b16 %v4038
        %v4116 = vunpack.c.l.b16 %v4039
        %v4117 = vunpack.c.h.b16 %v4039
        %v4118 = vunpack.c.l.b16 %v4040
        %v4119 = vunpack.c.h.b16 %v4040
        %v4120 = vunpack.c.l.b16 %v4041
        %v4121 = vunpack.c.h.b16 %v4041
        %v4122 = vunpack.c.l.b16 %v4042
        %v4123 = vunpack.c.h.b16 %v4042
        %v4124 = vunpack.c.l.b16 %v4043
        %v4125 = vunpack.c.h.b16 %v4043
        %v4126 = vunpack.c.l.b16 %v4044
        %v4127 = vunpack.c.h.b16 %v4044
        %v4128 = vunpack.c.l.b16 %v4045
        %v4129 = vunpack.c.h.b16 %v4045
        %v4130 = vunpack.c.l.b16 %v4046
        %v4131 = vunpack.c.h.b16 %v4046
        %v4132 = vunpack.c.l.b16 %v4047
        %v4133 = vunpack.c.h.b16 %v4047
        %v4134 = vunpack.c.l.b16 %v4048
        %v4135 = vunpack.c.h.b16 %v4048
        %v4136 = vunpack.c.l.b16 %v4049
        %v4137 = vunpack.c.h.b16 %v4049
        %v4138 = vunpack.c.l.b16 %v4050
        %v4139 = vunpack.c.h.b16 %v4050
        %v4140 = vunpack.c.l.b16 %v4051
        %v4141 = vunpack.c.h.b16 %v4051
        %v4142 = vpack.c.b16 %v4084, %v4082
        %v4143 = vpack.c.b16 %v4085, %v4083
        %v4144 = vpack.c.b16 %v4088, %v4086
        %v4145 = vpack.c.b16 %v4089, %v4087
        %v4146 = vpack.c.b16 %v4092, %v4090
        %v4147 = vpack.c.b16 %v4093, %v4091
        %v4148 = vpack.c.b16 %v4096, %v4094
        %v4149 = vpack.c.b16 %v4097, %v4095
        %v4150 = vpack.c.b16 %v4100, %v4098
        %v4151 = vpack.c.b16 %v4101, %v4099
        %v4152 = vpack.c.b16 %v4104, %v4102
        %v4153 = vpack.c.b16 %v4105, %v4103
        %v4154 = vpack.c.b16 %v4108, %v4106
        %v4155 = vpack.c.b16 %v4109, %v4107
        %v4156 = vpack.c.b16 %v4112, %v4110
        %v4157 = vpack.c.b16 %v4113, %v4111
        %v4158 = vpack.c.b16 %v4116, %v4114
        %v4159 = vpack.c.b16 %v4117, %v4115
        %v4160 = vpack.c.b16 %v4120, %v4118
        %v4161 = vpack.c.b16 %v4121, %v4119
        %v4162 = vpack.c.b16 %v4124, %v4122
        %v4163 = vpack.c.b16 %v4125, %v4123
        %v4164 = vpack.c.b16 %v4128, %v4126
        %v4165 = vpack.c.b16 %v4129, %v4127
        %v4166 = vpack.c.b16 %v4132, %v4130
        %v4167 = vpack.c.b16 %v4133, %v4131
        %v4168 = vpack.c.b16 %v4136, %v4134
        %v4169 = vpack.c.b16 %v4137, %v4135
        %v4170 = vpack.c.b16 %v4140, %v4138
        %v4171 = vpack.c.b16 %v4141, %v4139
        %4202 = vmatprep.subr.bf16.mxu0 %v4143
        %4203 = vmatpush1.bf16.msra.mxu0 %v4142
        %4204 = vmatprep.subr.bf16.mxu0 %v4145
        %4205 = vmatpush1.bf16.msra.mxu0 %v4144
        %4206 = vmatprep.subr.bf16.mxu0 %v4147
        %4207 = vmatpush1.bf16.msra.mxu0 %v4146
        %4208 = vmatprep.subr.bf16.mxu0 %v4149
        %4209 = vmatpush1.bf16.msra.mxu0 %v4148
        %4210 = vmatprep.subr.bf16.mxu0 %v4151
        %4211 = vmatpush1.bf16.msra.mxu0 %v4150
        %4212 = vmatprep.subr.bf16.mxu0 %v4153
        %4213 = vmatpush1.bf16.msra.mxu0 %v4152
        %4214 = vmatprep.subr.bf16.mxu0 %v4155
        %4215 = vmatpush1.bf16.msra.mxu0 %v4154
        %4216 = vmatprep.subr.bf16.mxu0 %v4157
        %4217 = vmatpush1.bf16.msra.mxu0 %v4156
        %4218 = vmatprep.subr.bf16.mxu0 %v4159
        %4219 = vmatpush1.bf16.msra.mxu0 %v4158
        %4220 = vmatprep.subr.bf16.mxu0 %v4161
        %4221 = vmatpush1.bf16.msra.mxu0 %v4160
        %4222 = vmatprep.subr.bf16.mxu0 %v4163
        %4223 = vmatpush1.bf16.msra.mxu0 %v4162
        %4224 = vmatprep.subr.bf16.mxu0 %v4165
        %4225 = vmatpush1.bf16.msra.mxu0 %v4164
        %4226 = vmatprep.subr.bf16.mxu0 %v4167
        %4227 = vmatpush1.bf16.msra.mxu0 %v4166
        %4228 = vmatprep.subr.bf16.mxu0 %v4169
        %4229 = vmatpush1.bf16.msra.mxu0 %v4168
        %4230 = vmatprep.subr.bf16.mxu0 %v4171
        %4231 = vmatpush1.bf16.msra.mxu0 %v4170
        %4232 = vmatprep.subr.bf16.mxu0 0
        %4233 = vmatpush1.bf16.msra.mxu0 0
        %4234 = vmatprep.mubr.bf16.mxu0 %v3084
        %4235 = vmatmul.mubr.bf16.gmra.mrb[0].mxu0 %v2930
        %v4236 = vpop.f32.mrb[0].mxu0
        %v4237 = vadd.f32 0.0, %v4236
        %v4238 = vpop.f32.mrb[0].mxu0
        %v4239 = vadd.f32 0.0, %v4238
        %v4240 = vpop.f32.mrb[0].mxu0
        %v4241 = vpop.f32.mrb[0].mxu0
        %4242 = vdwg.mxu0
        %v4243 = vadd.f32 %v4019, %v4237
        %v4244 = vadd.f32 %v4020, %v4239
        %v4245 = vmax.f32 %v3127, %v4243
        %v4246 = vmax.f32 %v3128, %v4244
        %v4247 = vld [vmem:[%s5] sm:$0x3]
        %v4249 = vlaneseq
        %v4250 = vshrl.u32 %v4249, 7
        %v4251 = vsub.s32 0, %v4250
        %v4252 = vrot.slane %v4247, %v4251
        %v4253 = vlaneseq
        %v4254 = vshrl.u32 %v4253, 7
        %v4255 = vsub.s32 1, %v4254
        %v4256 = vrot.slane %v4247, %v4255
        %v4259 = vadd.f32 %v4245, %v4252
        %v4260 = vadd.f32 %v4246, %v4256
        %v4261 = vmax.f32 %v4259, 0.0
        %v4262 = vmax.f32 %v4260, 0.0
        %v4265 = vrot.slane %v4261, 1
        %v4266 = vrot.slane %v4262, 1
        %v4269 = vmax.f32 %v4261, %v4265
        %v4270 = vmax.f32 %v4262, %v4266
        %v4271 = vpack.c.bf16 %v4269, %v4269
        %v4272 = vpack.c.bf16 %v4270, %v4270
        %v4273 = vld [vmem:[%s6] sm:$0xff]
        %v4274 = vld [vmem:[%s6 + $0x8] sm:$0xff]
        %v4275 = vld [vmem:[%s6 + $0x10] sm:$0xff]
        %v4276 = vld [vmem:[%s6 + $0x18] sm:$0xff]
        %v4277 = vld [vmem:[%s6 + $0x20] sm:$0xff]
        %v4278 = vld [vmem:[%s6 + $0x28] sm:$0xff]
        %v4279 = vld [vmem:[%s6 + $0x30] sm:$0xff]
        %v4280 = vld [vmem:[%s6 + $0x38] sm:$0xff]
        %v4281 = vld [vmem:[%s6 + $0x40] sm:$0xff]
        %v4282 = vld [vmem:[%s6 + $0x48] sm:$0xff]
        %v4283 = vld [vmem:[%s6 + $0x50] sm:$0xff]
        %v4284 = vld [vmem:[%s6 + $0x58] sm:$0xff]
        %v4285 = vld [vmem:[%s6 + $0x60] sm:$0xff]
        %v4286 = vld [vmem:[%s6 + $0x68] sm:$0xff]
        %v4287 = vld [vmem:[%s6 + $0x70] sm:$0xff]
        %v4288 = vld [vmem:[%s6 + $0x78] sm:$0xff]
        %v4289 = vld [vmem:[%s6 + $0x80] sm:$0xff]
        %v4290 = vld [vmem:[%s6 + $0x88] sm:$0xff]
        %v4291 = vld [vmem:[%s6 + $0x90] sm:$0xff]
        %v4292 = vld [vmem:[%s6 + $0x98] sm:$0xff]
        %v4293 = vld [vmem:[%s6 + $0xa0] sm:$0xff]
        %v4294 = vld [vmem:[%s6 + $0xa8] sm:$0xff]
        %v4295 = vld [vmem:[%s6 + $0xb0] sm:$0xff]
        %v4296 = vld [vmem:[%s6 + $0xb8] sm:$0xff]
        %v4297 = vld [vmem:[%s6 + $0xc0] sm:$0xff]
        %s4298 = scalar_lea.vmem %s6, 200
        %v4299 = vld [vmem:[%s4298] sm:$0xff]
        %v4300 = vld [vmem:[%s4298 + $0x8] sm:$0xff]
        %v4301 = vld [vmem:[%s4298 + $0x10] sm:$0xff]
        %v4302 = vld [vmem:[%s4298 + $0x18] sm:$0xff]
        %v4303 = vld [vmem:[%s4298 + $0x20] sm:$0xff]
        %v4304 = vld [vmem:[%s4298 + $0x28] sm:$0xff]
        %v4305 = vld [vmem:[%s4298 + $0x30] sm:$0xff]
        %v4306 = vld [vmem:[%s4298 + $0x38] sm:$0xff]
        %v4307 = vld [vmem:[%s4298 + $0x40] sm:$0xff]
        %v4308 = vld [vmem:[%s4298 + $0x48] sm:$0xff]
        %v4309 = vld [vmem:[%s4298 + $0x50] sm:$0xff]
        %v4310 = vld [vmem:[%s4298 + $0x58] sm:$0xff]
        %v4311 = vld [vmem:[%s4298 + $0x60] sm:$0xff]
        %v4312 = vld [vmem:[%s4298 + $0x68] sm:$0xff]
        %v4313 = vld [vmem:[%s4298 + $0x70] sm:$0xff]
        %v4314 = vld [vmem:[%s4298 + $0x78] sm:$0xff]
        %v4315 = vld [vmem:[%s4298 + $0x80] sm:$0xff]
        %v4316 = vld [vmem:[%s4298 + $0x88] sm:$0xff]
        %v4317 = vld [vmem:[%s4298 + $0x90] sm:$0xff]
        %v4318 = vld [vmem:[%s4298 + $0x98] sm:$0xff]
        %v4319 = vld [vmem:[%s4298 + $0xa0] sm:$0xff]
        %v4320 = vld [vmem:[%s4298 + $0xa8] sm:$0xff]
        %v4321 = vld [vmem:[%s4298 + $0xb0] sm:$0xff]
        %v4322 = vld [vmem:[%s4298 + $0xb8] sm:$0xff]
        %v4323 = vld [vmem:[%s4298 + $0xc0] sm:$0xff]
        %v4326 = vrot.slane %v4271, 1
        %v4327 = vrot.slane %v4272, 1
        %v4354 = vunpack.c.l.b16 %v4299
        %v4355 = vunpack.c.h.b16 %v4299
        %v4356 = vunpack.c.l.b16 %v4300
        %v4357 = vunpack.c.h.b16 %v4300
        %v4358 = vunpack.c.l.b16 %v4301
        %v4359 = vunpack.c.h.b16 %v4301
        %v4360 = vunpack.c.l.b16 %v4302
        %v4361 = vunpack.c.h.b16 %v4302
        %v4362 = vunpack.c.l.b16 %v4303
        %v4363 = vunpack.c.h.b16 %v4303
        %v4364 = vunpack.c.l.b16 %v4304
        %v4365 = vunpack.c.h.b16 %v4304
        %v4366 = vunpack.c.l.b16 %v4305
        %v4367 = vunpack.c.h.b16 %v4305
        %v4368 = vunpack.c.l.b16 %v4306
        %v4369 = vunpack.c.h.b16 %v4306
        %v4370 = vunpack.c.l.b16 %v4307
        %v4371 = vunpack.c.h.b16 %v4307
        %v4372 = vunpack.c.l.b16 %v4308
        %v4373 = vunpack.c.h.b16 %v4308
        %v4374 = vunpack.c.l.b16 %v4309
        %v4375 = vunpack.c.h.b16 %v4309
        %v4376 = vunpack.c.l.b16 %v4310
        %v4377 = vunpack.c.h.b16 %v4310
        %v4378 = vunpack.c.l.b16 %v4311
        %v4379 = vunpack.c.h.b16 %v4311
        %v4380 = vunpack.c.l.b16 %v4312
        %v4381 = vunpack.c.h.b16 %v4312
        %v4382 = vunpack.c.l.b16 %v4313
        %v4383 = vunpack.c.h.b16 %v4313
        %v4384 = vunpack.c.l.b16 %v4314
        %v4385 = vunpack.c.h.b16 %v4314
        %v4386 = vunpack.c.l.b16 %v4315
        %v4387 = vunpack.c.h.b16 %v4315
        %v4388 = vunpack.c.l.b16 %v4316
        %v4389 = vunpack.c.h.b16 %v4316
        %v4390 = vunpack.c.l.b16 %v4317
        %v4391 = vunpack.c.h.b16 %v4317
        %v4392 = vunpack.c.l.b16 %v4318
        %v4393 = vunpack.c.h.b16 %v4318
        %v4394 = vunpack.c.l.b16 %v4319
        %v4395 = vunpack.c.h.b16 %v4319
        %v4396 = vunpack.c.l.b16 %v4320
        %v4397 = vunpack.c.h.b16 %v4320
        %v4398 = vunpack.c.l.b16 %v4321
        %v4399 = vunpack.c.h.b16 %v4321
        %v4400 = vunpack.c.l.b16 %v4322
        %v4401 = vunpack.c.h.b16 %v4322
        %v4402 = vunpack.c.l.b16 %v4323
        %v4403 = vunpack.c.h.b16 %v4323
        %v4404 = vpack.c.b16 %v4356, %v4354
        %v4405 = vpack.c.b16 %v4357, %v4355
        %v4406 = vpack.c.b16 %v4360, %v4358
        %v4407 = vpack.c.b16 %v4361, %v4359
        %v4408 = vpack.c.b16 %v4364, %v4362
        %v4409 = vpack.c.b16 %v4365, %v4363
        %v4410 = vpack.c.b16 %v4368, %v4366
        %v4411 = vpack.c.b16 %v4369, %v4367
        %v4412 = vpack.c.b16 %v4372, %v4370
        %v4413 = vpack.c.b16 %v4373, %v4371
        %v4414 = vpack.c.b16 %v4376, %v4374
        %v4415 = vpack.c.b16 %v4377, %v4375
        %v4416 = vpack.c.b16 %v4380, %v4378
        %v4417 = vpack.c.b16 %v4381, %v4379
        %v4418 = vpack.c.b16 %v4384, %v4382
        %v4419 = vpack.c.b16 %v4385, %v4383
        %v4420 = vpack.c.b16 %v4388, %v4386
        %v4421 = vpack.c.b16 %v4389, %v4387
        %v4422 = vpack.c.b16 %v4392, %v4390
        %v4423 = vpack.c.b16 %v4393, %v4391
        %v4424 = vpack.c.b16 %v4396, %v4394
        %v4425 = vpack.c.b16 %v4397, %v4395
        %v4426 = vpack.c.b16 %v4400, %v4398
        %v4427 = vpack.c.b16 %v4401, %v4399
        %v4428 = vpack.c.b16 %v4402, %v4402
        %v4429 = vpack.c.b16 %v4403, %v4403
        %vm4454 = vcmask 588800
        %v4456 = vsel %vm4454, %v4327, 0
        %vm4458 = vcmask 1043456
        %v4460 = vsel %vm4458, %v4428, 0
        %v4463 = vsel %vm4458, %v4429, 0
        %4465 = vmatprep.subr.bf16.mxu0 %v4405
        %4466 = vmatpush1.bf16.msra.mxu0 %v4404
        %4467 = vmatprep.subr.bf16.mxu0 %v4407
        %4468 = vmatpush1.bf16.msra.mxu0 %v4406
        %4469 = vmatprep.subr.bf16.mxu0 %v4409
        %4470 = vmatpush1.bf16.msra.mxu0 %v4408
        %4471 = vmatprep.subr.bf16.mxu0 %v4411
        %4472 = vmatpush1.bf16.msra.mxu0 %v4410
        %4473 = vmatprep.subr.bf16.mxu0 %v4413
        %4474 = vmatpush1.bf16.msra.mxu0 %v4412
        %4475 = vmatprep.subr.bf16.mxu0 %v4415
        %4476 = vmatpush1.bf16.msra.mxu0 %v4414
        %4477 = vmatprep.subr.bf16.mxu0 %v4417
        %4478 = vmatpush1.bf16.msra.mxu0 %v4416
        %4479 = vmatprep.subr.bf16.mxu0 %v4419
        %4480 = vmatpush1.bf16.msra.mxu0 %v4418
        %4481 = vmatprep.subr.bf16.mxu0 %v4421
        %4482 = vmatpush1.bf16.msra.mxu0 %v4420
        %4483 = vmatprep.subr.bf16.mxu0 %v4423
        %4484 = vmatpush1.bf16.msra.mxu0 %v4422
        %4485 = vmatprep.subr.bf16.mxu0 %v4425
        %4486 = vmatpush1.bf16.msra.mxu0 %v4424
        %4487 = vmatprep.subr.bf16.mxu0 %v4427
        %4488 = vmatpush1.bf16.msra.mxu0 %v4426
        %4489 = vmatprep.subr.bf16.mxu0 %v4463
        %4490 = vmatpush1.bf16.msra.mxu0 %v4460
        %4491 = vmatprep.subr.bf16.mxu0 0
        %4492 = vmatpush1.bf16.msra.mxu0 0
        %4493 = vmatprep.subr.bf16.mxu0 0
        %4494 = vmatpush1.bf16.msra.mxu0 0
        %4495 = vmatprep.subr.bf16.mxu0 0
        %4496 = vmatpush1.bf16.msra.mxu0 0
        %4497 = vmatprep.mubr.bf16.mxu0 %v4456
        %4498 = vmatmul.mubr.bf16.gmra.mrb[0].mxu0 %v4326
        %v4499 = vpop.f32.mrb[0].mxu0
        %v4500 = vadd.f32 0.0, %v4499
        %v4501 = vpop.f32.mrb[0].mxu0
        %v4502 = vadd.f32 0.0, %v4501
        %v4503 = vpop.f32.mrb[0].mxu0
        %v4504 = vpop.f32.mrb[0].mxu0
        %4505 = vdwg.mxu0
        %v4531 = vunpack.c.l.b16 %v4273
        %v4532 = vunpack.c.h.b16 %v4273
        %v4533 = vunpack.c.l.b16 %v4274
        %v4534 = vunpack.c.h.b16 %v4274
        %v4535 = vunpack.c.l.b16 %v4275
        %v4536 = vunpack.c.h.b16 %v4275
        %v4537 = vunpack.c.l.b16 %v4276
        %v4538 = vunpack.c.h.b16 %v4276
        %v4539 = vunpack.c.l.b16 %v4277
        %v4540 = vunpack.c.h.b16 %v4277
        %v4541 = vunpack.c.l.b16 %v4278
        %v4542 = vunpack.c.h.b16 %v4278
        %v4543 = vunpack.c.l.b16 %v4279
        %v4544 = vunpack.c.h.b16 %v4279
        %v4545 = vunpack.c.l.b16 %v4280
        %v4546 = vunpack.c.h.b16 %v4280
        %v4547 = vunpack.c.l.b16 %v4281
        %v4548 = vunpack.c.h.b16 %v4281
        %v4549 = vunpack.c.l.b16 %v4282
        %v4550 = vunpack.c.h.b16 %v4282
        %v4551 = vunpack.c.l.b16 %v4283
        %v4552 = vunpack.c.h.b16 %v4283
        %v4553 = vunpack.c.l.b16 %v4284
        %v4554 = vunpack.c.h.b16 %v4284
        %v4555 = vunpack.c.l.b16 %v4285
        %v4556 = vunpack.c.h.b16 %v4285
        %v4557 = vunpack.c.l.b16 %v4286
        %v4558 = vunpack.c.h.b16 %v4286
        %v4559 = vunpack.c.l.b16 %v4287
        %v4560 = vunpack.c.h.b16 %v4287
        %v4561 = vunpack.c.l.b16 %v4288
        %v4562 = vunpack.c.h.b16 %v4288
        %v4563 = vunpack.c.l.b16 %v4289
        %v4564 = vunpack.c.h.b16 %v4289
        %v4565 = vunpack.c.l.b16 %v4290
        %v4566 = vunpack.c.h.b16 %v4290
        %v4567 = vunpack.c.l.b16 %v4291
        %v4568 = vunpack.c.h.b16 %v4291
        %v4569 = vunpack.c.l.b16 %v4292
        %v4570 = vunpack.c.h.b16 %v4292
        %v4571 = vunpack.c.l.b16 %v4293
        %v4572 = vunpack.c.h.b16 %v4293
        %v4573 = vunpack.c.l.b16 %v4294
        %v4574 = vunpack.c.h.b16 %v4294
        %v4575 = vunpack.c.l.b16 %v4295
        %v4576 = vunpack.c.h.b16 %v4295
        %v4577 = vunpack.c.l.b16 %v4296
        %v4578 = vunpack.c.h.b16 %v4296
        %v4579 = vunpack.c.l.b16 %v4297
        %v4580 = vunpack.c.h.b16 %v4297
        %v4581 = vpack.c.b16 %v4533, %v4531
        %v4582 = vpack.c.b16 %v4534, %v4532
        %v4583 = vpack.c.b16 %v4537, %v4535
        %v4584 = vpack.c.b16 %v4538, %v4536
        %v4585 = vpack.c.b16 %v4541, %v4539
        %v4586 = vpack.c.b16 %v4542, %v4540
        %v4587 = vpack.c.b16 %v4545, %v4543
        %v4588 = vpack.c.b16 %v4546, %v4544
        %v4589 = vpack.c.b16 %v4549, %v4547
        %v4590 = vpack.c.b16 %v4550, %v4548
        %v4591 = vpack.c.b16 %v4553, %v4551
        %v4592 = vpack.c.b16 %v4554, %v4552
        %v4593 = vpack.c.b16 %v4557, %v4555
        %v4594 = vpack.c.b16 %v4558, %v4556
        %v4595 = vpack.c.b16 %v4561, %v4559
        %v4596 = vpack.c.b16 %v4562, %v4560
        %v4597 = vpack.c.b16 %v4565, %v4563
        %v4598 = vpack.c.b16 %v4566, %v4564
        %v4599 = vpack.c.b16 %v4569, %v4567
        %v4600 = vpack.c.b16 %v4570, %v4568
        %v4601 = vpack.c.b16 %v4573, %v4571
        %v4602 = vpack.c.b16 %v4574, %v4572
        %v4603 = vpack.c.b16 %v4577, %v4575
        %v4604 = vpack.c.b16 %v4578, %v4576
        %v4605 = vpack.c.b16 %v4579, %v4579
        %v4606 = vpack.c.b16 %v4580, %v4580
        %v4632 = vsel %vm4454, %v4272, 0
        %v4635 = vsel %vm4458, %v4605, 0
        %v4638 = vsel %vm4458, %v4606, 0
        %4640 = vmatprep.subr.bf16.mxu0 %v4582
        %4641 = vmatpush1.bf16.msra.mxu0 %v4581
        %4642 = vmatprep.subr.bf16.mxu0 %v4584
        %4643 = vmatpush1.bf16.msra.mxu0 %v4583
        %4644 = vmatprep.subr.bf16.mxu0 %v4586
        %4645 = vmatpush1.bf16.msra.mxu0 %v4585
        %4646 = vmatprep.subr.bf16.mxu0 %v4588
        %4647 = vmatpush1.bf16.msra.mxu0 %v4587
        %4648 = vmatprep.subr.bf16.mxu0 %v4590
        %4649 = vmatpush1.bf16.msra.mxu0 %v4589
        %4650 = vmatprep.subr.bf16.mxu0 %v4592
        %4651 = vmatpush1.bf16.msra.mxu0 %v4591
        %4652 = vmatprep.subr.bf16.mxu0 %v4594
        %4653 = vmatpush1.bf16.msra.mxu0 %v4593
        %4654 = vmatprep.subr.bf16.mxu0 %v4596
        %4655 = vmatpush1.bf16.msra.mxu0 %v4595
        %4656 = vmatprep.subr.bf16.mxu0 %v4598
        %4657 = vmatpush1.bf16.msra.mxu0 %v4597
        %4658 = vmatprep.subr.bf16.mxu0 %v4600
        %4659 = vmatpush1.bf16.msra.mxu0 %v4599
        %4660 = vmatprep.subr.bf16.mxu0 %v4602
        %4661 = vmatpush1.bf16.msra.mxu0 %v4601
        %4662 = vmatprep.subr.bf16.mxu0 %v4604
        %4663 = vmatpush1.bf16.msra.mxu0 %v4603
        %4664 = vmatprep.subr.bf16.mxu0 %v4638
        %4665 = vmatpush1.bf16.msra.mxu0 %v4635
        %4666 = vmatprep.subr.bf16.mxu0 0
        %4667 = vmatpush1.bf16.msra.mxu0 0
        %4668 = vmatprep.subr.bf16.mxu0 0
        %4669 = vmatpush1.bf16.msra.mxu0 0
        %4670 = vmatprep.subr.bf16.mxu0 0
        %4671 = vmatpush1.bf16.msra.mxu0 0
        %4672 = vmatprep.mubr.bf16.mxu0 %v4632
        %4673 = vmatmul.mubr.bf16.gmra.mrb[0].mxu0 %v4271
        %v4674 = vpop.f32.mrb[0].mxu0
        %v4675 = vadd.f32 %v4500, %v4674
        %v4676 = vpop.f32.mrb[0].mxu0
        %v4677 = vadd.f32 %v4502, %v4676
        %v4678 = vpop.f32.mrb[0].mxu0
        %v4679 = vpop.f32.mrb[0].mxu0
        %4680 = vdwg.mxu0
        %s4681 = scalar_lea.vmem %s6, 400
        %v4682 = vld [vmem:[%s4681] sm:$0xff]
        %v4683 = vld [vmem:[%s4681 + $0x8] sm:$0xff]
        %v4684 = vld [vmem:[%s4681 + $0x10] sm:$0xff]
        %v4685 = vld [vmem:[%s4681 + $0x18] sm:$0xff]
        %v4686 = vld [vmem:[%s4681 + $0x20] sm:$0xff]
        %v4687 = vld [vmem:[%s4681 + $0x28] sm:$0xff]
        %v4688 = vld [vmem:[%s4681 + $0x30] sm:$0xff]
        %v4689 = vld [vmem:[%s4681 + $0x38] sm:$0xff]
        %v4690 = vld [vmem:[%s4681 + $0x40] sm:$0xff]
        %v4691 = vld [vmem:[%s4681 + $0x48] sm:$0xff]
        %v4692 = vld [vmem:[%s4681 + $0x50] sm:$0xff]
        %v4693 = vld [vmem:[%s4681 + $0x58] sm:$0xff]
        %v4694 = vld [vmem:[%s4681 + $0x60] sm:$0xff]
        %v4695 = vld [vmem:[%s4681 + $0x68] sm:$0xff]
        %v4696 = vld [vmem:[%s4681 + $0x70] sm:$0xff]
        %v4697 = vld [vmem:[%s4681 + $0x78] sm:$0xff]
        %v4698 = vld [vmem:[%s4681 + $0x80] sm:$0xff]
        %v4699 = vld [vmem:[%s4681 + $0x88] sm:$0xff]
        %v4700 = vld [vmem:[%s4681 + $0x90] sm:$0xff]
        %v4701 = vld [vmem:[%s4681 + $0x98] sm:$0xff]
        %v4702 = vld [vmem:[%s4681 + $0xa0] sm:$0xff]
        %v4703 = vld [vmem:[%s4681 + $0xa8] sm:$0xff]
        %v4704 = vld [vmem:[%s4681 + $0xb0] sm:$0xff]
        %v4705 = vld [vmem:[%s4681 + $0xb8] sm:$0xff]
        %v4706 = vld [vmem:[%s4681 + $0xc0] sm:$0xff]
        %v4707 = vrot.slane %v4271, 2
        %v4708 = vrot.slane %v4272, 2
        %v4735 = vunpack.c.l.b16 %v4682
        %v4736 = vunpack.c.h.b16 %v4682
        %v4737 = vunpack.c.l.b16 %v4683
        %v4738 = vunpack.c.h.b16 %v4683
        %v4739 = vunpack.c.l.b16 %v4684
        %v4740 = vunpack.c.h.b16 %v4684
        %v4741 = vunpack.c.l.b16 %v4685
        %v4742 = vunpack.c.h.b16 %v4685
        %v4743 = vunpack.c.l.b16 %v4686
        %v4744 = vunpack.c.h.b16 %v4686
        %v4745 = vunpack.c.l.b16 %v4687
        %v4746 = vunpack.c.h.b16 %v4687
        %v4747 = vunpack.c.l.b16 %v4688
        %v4748 = vunpack.c.h.b16 %v4688
        %v4749 = vunpack.c.l.b16 %v4689
        %v4750 = vunpack.c.h.b16 %v4689
        %v4751 = vunpack.c.l.b16 %v4690
        %v4752 = vunpack.c.h.b16 %v4690
        %v4753 = vunpack.c.l.b16 %v4691
        %v4754 = vunpack.c.h.b16 %v4691
        %v4755 = vunpack.c.l.b16 %v4692
        %v4756 = vunpack.c.h.b16 %v4692
        %v4757 = vunpack.c.l.b16 %v4693
        %v4758 = vunpack.c.h.b16 %v4693
        %v4759 = vunpack.c.l.b16 %v4694
        %v4760 = vunpack.c.h.b16 %v4694
        %v4761 = vunpack.c.l.b16 %v4695
        %v4762 = vunpack.c.h.b16 %v4695
        %v4763 = vunpack.c.l.b16 %v4696
        %v4764 = vunpack.c.h.b16 %v4696
        %v4765 = vunpack.c.l.b16 %v4697
        %v4766 = vunpack.c.h.b16 %v4697
        %v4767 = vunpack.c.l.b16 %v4698
        %v4768 = vunpack.c.h.b16 %v4698
        %v4769 = vunpack.c.l.b16 %v4699
        %v4770 = vunpack.c.h.b16 %v4699
        %v4771 = vunpack.c.l.b16 %v4700
        %v4772 = vunpack.c.h.b16 %v4700
        %v4773 = vunpack.c.l.b16 %v4701
        %v4774 = vunpack.c.h.b16 %v4701
        %v4775 = vunpack.c.l.b16 %v4702
        %v4776 = vunpack.c.h.b16 %v4702
        %v4777 = vunpack.c.l.b16 %v4703
        %v4778 = vunpack.c.h.b16 %v4703
        %v4779 = vunpack.c.l.b16 %v4704
        %v4780 = vunpack.c.h.b16 %v4704
        %v4781 = vunpack.c.l.b16 %v4705
        %v4782 = vunpack.c.h.b16 %v4705
        %v4783 = vunpack.c.l.b16 %v4706
        %v4784 = vunpack.c.h.b16 %v4706
        %v4785 = vpack.c.b16 %v4737, %v4735
        %v4786 = vpack.c.b16 %v4738, %v4736
        %v4787 = vpack.c.b16 %v4741, %v4739
        %v4788 = vpack.c.b16 %v4742, %v4740
        %v4789 = vpack.c.b16 %v4745, %v4743
        %v4790 = vpack.c.b16 %v4746, %v4744
        %v4791 = vpack.c.b16 %v4749, %v4747
        %v4792 = vpack.c.b16 %v4750, %v4748
        %v4793 = vpack.c.b16 %v4753, %v4751
        %v4794 = vpack.c.b16 %v4754, %v4752
        %v4795 = vpack.c.b16 %v4757, %v4755
        %v4796 = vpack.c.b16 %v4758, %v4756
        %v4797 = vpack.c.b16 %v4761, %v4759
        %v4798 = vpack.c.b16 %v4762, %v4760
        %v4799 = vpack.c.b16 %v4765, %v4763
        %v4800 = vpack.c.b16 %v4766, %v4764
        %v4801 = vpack.c.b16 %v4769, %v4767
        %v4802 = vpack.c.b16 %v4770, %v4768
        %v4803 = vpack.c.b16 %v4773, %v4771
        %v4804 = vpack.c.b16 %v4774, %v4772
        %v4805 = vpack.c.b16 %v4777, %v4775
        %v4806 = vpack.c.b16 %v4778, %v4776
        %v4807 = vpack.c.b16 %v4781, %v4779
        %v4808 = vpack.c.b16 %v4782, %v4780
        %v4809 = vpack.c.b16 %v4783, %v4783
        %v4810 = vpack.c.b16 %v4784, %v4784
        %v4836 = vsel %vm4454, %v4708, 0
        %v4839 = vsel %vm4458, %v4809, 0
        %v4842 = vsel %vm4458, %v4810, 0
        %4844 = vmatprep.subr.bf16.mxu0 %v4786
        %4845 = vmatpush1.bf16.msra.mxu0 %v4785
        %4846 = vmatprep.subr.bf16.mxu0 %v4788
        %4847 = vmatpush1.bf16.msra.mxu0 %v4787
        %4848 = vmatprep.subr.bf16.mxu0 %v4790
        %4849 = vmatpush1.bf16.msra.mxu0 %v4789
        %4850 = vmatprep.subr.bf16.mxu0 %v4792
        %4851 = vmatpush1.bf16.msra.mxu0 %v4791
        %4852 = vmatprep.subr.bf16.mxu0 %v4794
        %4853 = vmatpush1.bf16.msra.mxu0 %v4793
        %4854 = vmatprep.subr.bf16.mxu0 %v4796
        %4855 = vmatpush1.bf16.msra.mxu0 %v4795
        %4856 = vmatprep.subr.bf16.mxu0 %v4798
        %4857 = vmatpush1.bf16.msra.mxu0 %v4797
        %4858 = vmatprep.subr.bf16.mxu0 %v4800
        %4859 = vmatpush1.bf16.msra.mxu0 %v4799
        %4860 = vmatprep.subr.bf16.mxu0 %v4802
        %4861 = vmatpush1.bf16.msra.mxu0 %v4801
        %4862 = vmatprep.subr.bf16.mxu0 %v4804
        %4863 = vmatpush1.bf16.msra.mxu0 %v4803
        %4864 = vmatprep.subr.bf16.mxu0 %v4806
        %4865 = vmatpush1.bf16.msra.mxu0 %v4805
        %4866 = vmatprep.subr.bf16.mxu0 %v4808
        %4867 = vmatpush1.bf16.msra.mxu0 %v4807
        %4868 = vmatprep.subr.bf16.mxu0 %v4842
        %4869 = vmatpush1.bf16.msra.mxu0 %v4839
        %4870 = vmatprep.subr.bf16.mxu0 0
        %4871 = vmatpush1.bf16.msra.mxu0 0
        %4872 = vmatprep.subr.bf16.mxu0 0
        %4873 = vmatpush1.bf16.msra.mxu0 0
        %4874 = vmatprep.subr.bf16.mxu0 0
        %4875 = vmatpush1.bf16.msra.mxu0 0
        %4876 = vmatprep.mubr.bf16.mxu0 %v4836
        %4877 = vmatmul.mubr.bf16.gmra.mrb[0].mxu0 %v4707
        %v4878 = vpop.f32.mrb[0].mxu0
        %v4879 = vadd.f32 0.0, %v4878
        %v4880 = vpop.f32.mrb[0].mxu0
        %v4881 = vadd.f32 0.0, %v4880
        %v4882 = vpop.f32.mrb[0].mxu0
        %v4883 = vpop.f32.mrb[0].mxu0
        %4884 = vdwg.mxu0
        %v4885 = vadd.f32 %v4675, %v4879
        %v4886 = vadd.f32 %v4677, %v4881
        %s4887 = scalar_lea.vmem %s6, 600
        %v4888 = vld [vmem:[%s4887] sm:$0xff]
        %v4889 = vld [vmem:[%s4887 + $0x8] sm:$0xff]
        %v4890 = vld [vmem:[%s4887 + $0x10] sm:$0xff]
        %v4891 = vld [vmem:[%s4887 + $0x18] sm:$0xff]
        %v4892 = vld [vmem:[%s4887 + $0x20] sm:$0xff]
        %v4893 = vld [vmem:[%s4887 + $0x28] sm:$0xff]
        %v4894 = vld [vmem:[%s4887 + $0x30] sm:$0xff]
        %v4895 = vld [vmem:[%s4887 + $0x38] sm:$0xff]
        %v4896 = vld [vmem:[%s4887 + $0x40] sm:$0xff]
        %v4897 = vld [vmem:[%s4887 + $0x48] sm:$0xff]
        %v4898 = vld [vmem:[%s4887 + $0x50] sm:$0xff]
        %v4899 = vld [vmem:[%s4887 + $0x58] sm:$0xff]
        %v4900 = vld [vmem:[%s4887 + $0x60] sm:$0xff]
        %v4901 = vld [vmem:[%s4887 + $0x68] sm:$0xff]
        %v4902 = vld [vmem:[%s4887 + $0x70] sm:$0xff]
        %v4903 = vld [vmem:[%s4887 + $0x78] sm:$0xff]
        %v4904 = vld [vmem:[%s4887 + $0x80] sm:$0xff]
        %v4905 = vld [vmem:[%s4887 + $0x88] sm:$0xff]
        %v4906 = vld [vmem:[%s4887 + $0x90] sm:$0xff]
        %v4907 = vld [vmem:[%s4887 + $0x98] sm:$0xff]
        %v4908 = vld [vmem:[%s4887 + $0xa0] sm:$0xff]
        %v4909 = vld [vmem:[%s4887 + $0xa8] sm:$0xff]
        %v4910 = vld [vmem:[%s4887 + $0xb0] sm:$0xff]
        %v4911 = vld [vmem:[%s4887 + $0xb8] sm:$0xff]
        %v4912 = vld [vmem:[%s4887 + $0xc0] sm:$0xff]
        %v4913 = vrot.slane %v4271, 3
        %v4914 = vrot.slane %v4272, 3
        %v4941 = vunpack.c.l.b16 %v4888
        %v4942 = vunpack.c.h.b16 %v4888
        %v4943 = vunpack.c.l.b16 %v4889
        %v4944 = vunpack.c.h.b16 %v4889
        %v4945 = vunpack.c.l.b16 %v4890
        %v4946 = vunpack.c.h.b16 %v4890
        %v4947 = vunpack.c.l.b16 %v4891
        %v4948 = vunpack.c.h.b16 %v4891
        %v4949 = vunpack.c.l.b16 %v4892
        %v4950 = vunpack.c.h.b16 %v4892
        %v4951 = vunpack.c.l.b16 %v4893
        %v4952 = vunpack.c.h.b16 %v4893
        %v4953 = vunpack.c.l.b16 %v4894
        %v4954 = vunpack.c.h.b16 %v4894
        %v4955 = vunpack.c.l.b16 %v4895
        %v4956 = vunpack.c.h.b16 %v4895
        %v4957 = vunpack.c.l.b16 %v4896
        %v4958 = vunpack.c.h.b16 %v4896
        %v4959 = vunpack.c.l.b16 %v4897
        %v4960 = vunpack.c.h.b16 %v4897
        %v4961 = vunpack.c.l.b16 %v4898
        %v4962 = vunpack.c.h.b16 %v4898
        %v4963 = vunpack.c.l.b16 %v4899
        %v4964 = vunpack.c.h.b16 %v4899
        %v4965 = vunpack.c.l.b16 %v4900
        %v4966 = vunpack.c.h.b16 %v4900
        %v4967 = vunpack.c.l.b16 %v4901
        %v4968 = vunpack.c.h.b16 %v4901
        %v4969 = vunpack.c.l.b16 %v4902
        %v4970 = vunpack.c.h.b16 %v4902
        %v4971 = vunpack.c.l.b16 %v4903
        %v4972 = vunpack.c.h.b16 %v4903
        %v4973 = vunpack.c.l.b16 %v4904
        %v4974 = vunpack.c.h.b16 %v4904
        %v4975 = vunpack.c.l.b16 %v4905
        %v4976 = vunpack.c.h.b16 %v4905
        %v4977 = vunpack.c.l.b16 %v4906
        %v4978 = vunpack.c.h.b16 %v4906
        %v4979 = vunpack.c.l.b16 %v4907
        %v4980 = vunpack.c.h.b16 %v4907
        %v4981 = vunpack.c.l.b16 %v4908
        %v4982 = vunpack.c.h.b16 %v4908
        %v4983 = vunpack.c.l.b16 %v4909
        %v4984 = vunpack.c.h.b16 %v4909
        %v4985 = vunpack.c.l.b16 %v4910
        %v4986 = vunpack.c.h.b16 %v4910
        %v4987 = vunpack.c.l.b16 %v4911
        %v4988 = vunpack.c.h.b16 %v4911
        %v4989 = vunpack.c.l.b16 %v4912
        %v4990 = vunpack.c.h.b16 %v4912
        %v4991 = vpack.c.b16 %v4943, %v4941
        %v4992 = vpack.c.b16 %v4944, %v4942
        %v4993 = vpack.c.b16 %v4947, %v4945
        %v4994 = vpack.c.b16 %v4948, %v4946
        %v4995 = vpack.c.b16 %v4951, %v4949
        %v4996 = vpack.c.b16 %v4952, %v4950
        %v4997 = vpack.c.b16 %v4955, %v4953
        %v4998 = vpack.c.b16 %v4956, %v4954
        %v4999 = vpack.c.b16 %v4959, %v4957
        %v5000 = vpack.c.b16 %v4960, %v4958
        %v5001 = vpack.c.b16 %v4963, %v4961
        %v5002 = vpack.c.b16 %v4964, %v4962
        %v5003 = vpack.c.b16 %v4967, %v4965
        %v5004 = vpack.c.b16 %v4968, %v4966
        %v5005 = vpack.c.b16 %v4971, %v4969
        %v5006 = vpack.c.b16 %v4972, %v4970
        %v5007 = vpack.c.b16 %v4975, %v4973
        %v5008 = vpack.c.b16 %v4976, %v4974
        %v5009 = vpack.c.b16 %v4979, %v4977
        %v5010 = vpack.c.b16 %v4980, %v4978
        %v5011 = vpack.c.b16 %v4983, %v4981
        %v5012 = vpack.c.b16 %v4984, %v4982
        %v5013 = vpack.c.b16 %v4987, %v4985
        %v5014 = vpack.c.b16 %v4988, %v4986
        %v5015 = vpack.c.b16 %v4989, %v4989
        %v5016 = vpack.c.b16 %v4990, %v4990
        %v5042 = vsel %vm4454, %v4914, 0
        %v5045 = vsel %vm4458, %v5015, 0
        %v5048 = vsel %vm4458, %v5016, 0
        %5050 = vmatprep.subr.bf16.mxu0 %v4992
        %5051 = vmatpush1.bf16.msra.mxu0 %v4991
        %5052 = vmatprep.subr.bf16.mxu0 %v4994
        %5053 = vmatpush1.bf16.msra.mxu0 %v4993
        %5054 = vmatprep.subr.bf16.mxu0 %v4996
        %5055 = vmatpush1.bf16.msra.mxu0 %v4995
        %5056 = vmatprep.subr.bf16.mxu0 %v4998
        %5057 = vmatpush1.bf16.msra.mxu0 %v4997
        %5058 = vmatprep.subr.bf16.mxu0 %v5000
        %5059 = vmatpush1.bf16.msra.mxu0 %v4999
        %5060 = vmatprep.subr.bf16.mxu0 %v5002
        %5061 = vmatpush1.bf16.msra.mxu0 %v5001
        %5062 = vmatprep.subr.bf16.mxu0 %v5004
        %5063 = vmatpush1.bf16.msra.mxu0 %v5003
        %5064 = vmatprep.subr.bf16.mxu0 %v5006
        %5065 = vmatpush1.bf16.msra.mxu0 %v5005
        %5066 = vmatprep.subr.bf16.mxu0 %v5008
        %5067 = vmatpush1.bf16.msra.mxu0 %v5007
        %5068 = vmatprep.subr.bf16.mxu0 %v5010
        %5069 = vmatpush1.bf16.msra.mxu0 %v5009
        %5070 = vmatprep.subr.bf16.mxu0 %v5012
        %5071 = vmatpush1.bf16.msra.mxu0 %v5011
        %5072 = vmatprep.subr.bf16.mxu0 %v5014
        %5073 = vmatpush1.bf16.msra.mxu0 %v5013
        %5074 = vmatprep.subr.bf16.mxu0 %v5048
        %5075 = vmatpush1.bf16.msra.mxu0 %v5045
        %5076 = vmatprep.subr.bf16.mxu0 0
        %5077 = vmatpush1.bf16.msra.mxu0 0
        %5078 = vmatprep.subr.bf16.mxu0 0
        %5079 = vmatpush1.bf16.msra.mxu0 0
        %5080 = vmatprep.subr.bf16.mxu0 0
        %5081 = vmatpush1.bf16.msra.mxu0 0
        %5082 = vmatprep.mubr.bf16.mxu0 %v5042
        %5083 = vmatmul.mubr.bf16.gmra.mrb[0].mxu0 %v4913
        %v5084 = vpop.f32.mrb[0].mxu0
        %v5085 = vadd.f32 0.0, %v5084
        %v5086 = vpop.f32.mrb[0].mxu0
        %v5087 = vadd.f32 0.0, %v5086
        %v5088 = vpop.f32.mrb[0].mxu0
        %v5089 = vpop.f32.mrb[0].mxu0
        %5090 = vdwg.mxu0
        %v5091 = vadd.f32 %v4885, %v5085
        %v5092 = vadd.f32 %v4886, %v5087
        %v5093 = vld [vmem:[%s7] sm:$0x3]
        %v5095 = vlaneseq
        %v5096 = vshrl.u32 %v5095, 7
        %v5097 = vsub.s32 0, %v5096
        %v5098 = vrot.slane %v5093, %v5097
        %v5099 = vlaneseq
        %v5100 = vshrl.u32 %v5099, 7
        %v5101 = vsub.s32 1, %v5100
        %v5102 = vrot.slane %v5093, %v5101
        %v5105 = vadd.f32 %v5091, %v5098
        %v5106 = vadd.f32 %v5092, %v5102
        %v5107 = vmax.f32 %v5105, 0.0
        %v5108 = vmax.f32 %v5106, 0.0
        %v5109 = vpack.c.bf16 %v5107, %v5107
        %v5110 = vpack.c.bf16 %v5108, %v5108
        %v5111 = vld [vmem:[%s8] sm:$0xf]
        %v5112 = vld [vmem:[%s8 + $0x4] sm:$0xf]
        %v5113 = vld [vmem:[%s8 + $0x8] sm:$0xf]
        %v5114 = vld [vmem:[%s8 + $0xc] sm:$0xf]
        %v5115 = vld [vmem:[%s8 + $0x10] sm:$0xf]
        %v5116 = vld [vmem:[%s8 + $0x14] sm:$0xf]
        %v5117 = vld [vmem:[%s8 + $0x18] sm:$0xf]
        %v5118 = vld [vmem:[%s8 + $0x1c] sm:$0xf]
        %v5119 = vld [vmem:[%s8 + $0x20] sm:$0xf]
        %v5120 = vld [vmem:[%s8 + $0x24] sm:$0xf]
        %v5121 = vld [vmem:[%s8 + $0x28] sm:$0xf]
        %v5122 = vld [vmem:[%s8 + $0x2c] sm:$0xf]
        %v5123 = vld [vmem:[%s8 + $0x30] sm:$0xf]
        %v5124 = vld [vmem:[%s8 + $0x34] sm:$0xf]
        %v5125 = vld [vmem:[%s8 + $0x38] sm:$0xf]
        %v5126 = vld [vmem:[%s8 + $0x3c] sm:$0xf]
        %v5127 = vld [vmem:[%s8 + $0x40] sm:$0xf]
        %v5128 = vld [vmem:[%s8 + $0x44] sm:$0xf]
        %v5129 = vld [vmem:[%s8 + $0x48] sm:$0xf]
        %v5130 = vld [vmem:[%s8 + $0x4c] sm:$0xf]
        %v5131 = vld [vmem:[%s8 + $0x50] sm:$0xf]
        %v5132 = vld [vmem:[%s8 + $0x54] sm:$0xf]
        %v5133 = vld [vmem:[%s8 + $0x58] sm:$0xf]
        %v5134 = vld [vmem:[%s8 + $0x5c] sm:$0xf]
        %v5135 = vld [vmem:[%s8 + $0x60] sm:$0xf]
        %v5136 = vld [vmem:[%s9] sm:$0x1]
        %v5162 = vunpack.c.l.b16 %v5111
        %v5163 = vunpack.c.l.b16 %v5112
        %v5164 = vunpack.c.l.b16 %v5113
        %v5165 = vunpack.c.l.b16 %v5114
        %v5166 = vunpack.c.l.b16 %v5115
        %v5167 = vunpack.c.l.b16 %v5116
        %v5168 = vunpack.c.l.b16 %v5117
        %v5169 = vunpack.c.l.b16 %v5118
        %v5170 = vunpack.c.l.b16 %v5119
        %v5171 = vunpack.c.l.b16 %v5120
        %v5172 = vunpack.c.l.b16 %v5121
        %v5173 = vunpack.c.l.b16 %v5122
        %v5174 = vunpack.c.l.b16 %v5123
        %v5175 = vunpack.c.l.b16 %v5124
        %v5176 = vunpack.c.l.b16 %v5125
        %v5177 = vunpack.c.l.b16 %v5126
        %v5178 = vunpack.c.l.b16 %v5127
        %v5179 = vunpack.c.l.b16 %v5128
        %v5180 = vunpack.c.l.b16 %v5129
        %v5181 = vunpack.c.l.b16 %v5130
        %v5182 = vunpack.c.l.b16 %v5131
        %v5183 = vunpack.c.l.b16 %v5132
        %v5184 = vunpack.c.l.b16 %v5133
        %v5185 = vunpack.c.l.b16 %v5134
        %v5186 = vunpack.c.l.b16 %v5135
        %v5187 = vpack.c.b16 %v5163, %v5162
        %v5188 = vpack.c.b16 %v5165, %v5164
        %v5189 = vpack.c.b16 %v5167, %v5166
        %v5190 = vpack.c.b16 %v5169, %v5168
        %v5191 = vpack.c.b16 %v5171, %v5170
        %v5192 = vpack.c.b16 %v5173, %v5172
        %v5193 = vpack.c.b16 %v5175, %v5174
        %v5194 = vpack.c.b16 %v5177, %v5176
        %v5195 = vpack.c.b16 %v5179, %v5178
        %v5196 = vpack.c.b16 %v5181, %v5180
        %v5197 = vpack.c.b16 %v5183, %v5182
        %v5198 = vpack.c.b16 %v5185, %v5184
        %v5199 = vpack.c.b16 %v5186, %v5186
        %v5213 = vsel %vm4454, %v5110, 0
        %v5216 = vsel %vm4458, %v5199, 0
        %5218 = vmatprep.subr.bf16.mxu0 0
        %5219 = vmatpush1.bf16.msra.mxu0 %v5187
        %5220 = vmatprep.subr.bf16.mxu0 0
        %5221 = vmatpush1.bf16.msra.mxu0 %v5188
        %5222 = vmatprep.subr.bf16.mxu0 0
        %5223 = vmatpush1.bf16.msra.mxu0 %v5189
        %5224 = vmatprep.subr.bf16.mxu0 0
        %5225 = vmatpush1.bf16.msra.mxu0 %v5190
        %5226 = vmatprep.subr.bf16.mxu0 0
        %5227 = vmatpush1.bf16.msra.mxu0 %v5191
        %5228 = vmatprep.subr.bf16.mxu0 0
        %5229 = vmatpush1.bf16.msra.mxu0 %v5192
        %5230 = vmatprep.subr.bf16.mxu0 0
        %5231 = vmatpush1.bf16.msra.mxu0 %v5193
        %5232 = vmatprep.subr.bf16.mxu0 0
        %5233 = vmatpush1.bf16.msra.mxu0 %v5194
        %5234 = vmatprep.subr.bf16.mxu0 0
        %5235 = vmatpush1.bf16.msra.mxu0 %v5195
        %5236 = vmatprep.subr.bf16.mxu0 0
        %5237 = vmatpush1.bf16.msra.mxu0 %v5196
        %5238 = vmatprep.subr.bf16.mxu0 0
        %5239 = vmatpush1.bf16.msra.mxu0 %v5197
        %5240 = vmatprep.subr.bf16.mxu0 0
        %5241 = vmatpush1.bf16.msra.mxu0 %v5198
        %5242 = vmatprep.subr.bf16.mxu0 0
        %5243 = vmatpush1.bf16.msra.mxu0 %v5216
        %5244 = vmatprep.subr.bf16.mxu0 0
        %5245 = vmatpush1.bf16.msra.mxu0 0
        %5246 = vmatprep.subr.bf16.mxu0 0
        %5247 = vmatpush1.bf16.msra.mxu0 0
        %5248 = vmatprep.subr.bf16.mxu0 0
        %5249 = vmatpush1.bf16.msra.mxu0 0
        %5250 = vmatprep.mubr.bf16.mxu0 %v5213
        %5251 = vmatmul.mubr.bf16.gmra.mrb[0].mxu0 %v5109
        %v5252 = vpop.f32.mrb[0].mxu0
        %v5253 = vadd.f32 %v5136, %v5252
        %v5254 = vpop.f32.mrb[0].mxu0
        %v5255 = vpop.f32.mrb[0].mxu0
        %v5256 = vpop.f32.mrb[0].mxu0
        %5257 = vdwg.mxu0
        %v5258 = vmax.f32 %v5253, 0.0
        %v5259 = vpack.c.bf16 %v5258, %v5258
        %v5260 = vld [vmem:[%s10] sm:$0xff]
        %v5261 = vld [vmem:[%s10 + $0x8] sm:$0xff]
        %v5262 = vld [vmem:[%s10 + $0x10] sm:$0xff]
        %v5263 = vld [vmem:[%s10 + $0x18] sm:$0xff]
        %v5264 = vld [vmem:[%s10 + $0x20] sm:$0xff]
        %v5265 = vld [vmem:[%s10 + $0x28] sm:$0xff]
        %v5266 = vld [vmem:[%s10 + $0x30] sm:$0xff]
        %v5267 = vld [vmem:[%s10 + $0x38] sm:$0xff]
        %v5268 = vld [vmem:[%s10 + $0x40] sm:$0xff]
        %v5269 = vld [vmem:[%s10 + $0x48] sm:$0xff]
        %v5270 = vld [vmem:[%s10 + $0x50] sm:$0xff]
        %v5271 = vld [vmem:[%s10 + $0x58] sm:$0xff]
        %v5272 = vld [vmem:[%s10 + $0x60] sm:$0x33]
        %v5273 = vld [vmem:[%s11] sm:$0x3]
        %v5287 = vunpack.c.l.b16 %v5260
        %v5288 = vunpack.c.h.b16 %v5260
        %v5289 = vunpack.c.l.b16 %v5261
        %v5290 = vunpack.c.h.b16 %v5261
        %v5291 = vunpack.c.l.b16 %v5262
        %v5292 = vunpack.c.h.b16 %v5262
        %v5293 = vunpack.c.l.b16 %v5263
        %v5294 = vunpack.c.h.b16 %v5263
        %v5295 = vunpack.c.l.b16 %v5264
        %v5296 = vunpack.c.h.b16 %v5264
        %v5297 = vunpack.c.l.b16 %v5265
        %v5298 = vunpack.c.h.b16 %v5265
        %v5299 = vunpack.c.l.b16 %v5266
        %v5300 = vunpack.c.h.b16 %v5266
        %v5301 = vunpack.c.l.b16 %v5267
        %v5302 = vunpack.c.h.b16 %v5267
        %v5303 = vunpack.c.l.b16 %v5268
        %v5304 = vunpack.c.h.b16 %v5268
        %v5305 = vunpack.c.l.b16 %v5269
        %v5306 = vunpack.c.h.b16 %v5269
        %v5307 = vunpack.c.l.b16 %v5270
        %v5308 = vunpack.c.h.b16 %v5270
        %v5309 = vunpack.c.l.b16 %v5271
        %v5310 = vunpack.c.h.b16 %v5271
        %v5311 = vunpack.c.l.b16 %v5272
        %v5312 = vunpack.c.h.b16 %v5272
        %v5313 = vpack.c.b16 %v5289, %v5287
        %v5314 = vpack.c.b16 %v5290, %v5288
        %v5315 = vpack.c.b16 %v5293, %v5291
        %v5316 = vpack.c.b16 %v5294, %v5292
        %v5317 = vpack.c.b16 %v5297, %v5295
        %v5318 = vpack.c.b16 %v5298, %v5296
        %v5319 = vpack.c.b16 %v5301, %v5299
        %v5320 = vpack.c.b16 %v5302, %v5300
        %v5321 = vpack.c.b16 %v5305, %v5303
        %v5322 = vpack.c.b16 %v5306, %v5304
        %v5323 = vpack.c.b16 %v5309, %v5307
        %v5324 = vpack.c.b16 %v5310, %v5308
        %v5325 = vpack.c.b16 %v5311, %v5311
        %v5326 = vpack.c.b16 %v5312, %v5312
        %v5340 = vlaneseq
        %v5341 = vshrl.u32 %v5340, 7
        %v5342 = vsub.s32 0, %v5341
        %v5343 = vrot.slane %v5273, %v5342
        %v5344 = vlaneseq
        %v5345 = vshrl.u32 %v5344, 7
        %v5346 = vsub.s32 1, %v5345
        %v5347 = vrot.slane %v5273, %v5346
        %vm5350 = vcmask 818176
        %v5352 = vsel %vm5350, %v5259, 0
        %vm5354 = vcmask 1041408
        %v5356 = vsel %vm5354, %v5325, 0
        %v5359 = vsel %vm5354, %v5326, 0
        %5361 = vmatprep.subr.bf16.mxu0 %v5314
        %5362 = vmatpush1.bf16.msra.mxu0 %v5313
        %5363 = vmatprep.subr.bf16.mxu0 %v5316
        %5364 = vmatpush1.bf16.msra.mxu0 %v5315
        %5365 = vmatprep.subr.bf16.mxu0 %v5318
        %5366 = vmatpush1.bf16.msra.mxu0 %v5317
        %5367 = vmatprep.subr.bf16.mxu0 %v5320
        %5368 = vmatpush1.bf16.msra.mxu0 %v5319
        %5369 = vmatprep.subr.bf16.mxu0 %v5322
        %5370 = vmatpush1.bf16.msra.mxu0 %v5321
        %5371 = vmatprep.subr.bf16.mxu0 %v5324
        %5372 = vmatpush1.bf16.msra.mxu0 %v5323
        %5373 = vmatprep.subr.bf16.mxu0 %v5359
        %5374 = vmatpush1.bf16.msra.mxu0 %v5356
        %5375 = vmatprep.subr.bf16.mxu0 0
        %5376 = vmatpush1.bf16.msra.mxu0 0
        %5377 = vmatprep.subr.bf16.mxu0 0
        %5378 = vmatpush1.bf16.msra.mxu0 0
        %5379 = vmatprep.subr.bf16.mxu0 0
        %5380 = vmatpush1.bf16.msra.mxu0 0
        %5381 = vmatprep.subr.bf16.mxu0 0
        %5382 = vmatpush1.bf16.msra.mxu0 0
        %5383 = vmatprep.subr.bf16.mxu0 0
        %5384 = vmatpush1.bf16.msra.mxu0 0
        %5385 = vmatprep.subr.bf16.mxu0 0
        %5386 = vmatpush1.bf16.msra.mxu0 0
        %5387 = vmatprep.subr.bf16.mxu0 0
        %5388 = vmatpush1.bf16.msra.mxu0 0
        %5389 = vmatprep.subr.bf16.mxu0 0
        %5390 = vmatpush1.bf16.msra.mxu0 0
        %5391 = vmatprep.subr.bf16.mxu0 0
        %5392 = vmatpush1.bf16.msra.mxu0 0
        %5393 = vmatprep.mubr.bf16.mxu0 0
        %5394 = vmatmul.mubr.bf16.gmra.mrb[0].mxu0 %v5352
        %v5395 = vpop.f32.mrb[0].mxu0
        %v5396 = vadd.f32 %v5343, %v5395
        %v5397 = vpop.f32.mrb[0].mxu0
        %v5398 = vadd.f32 %v5347, %v5397
        %v5399 = vpop.f32.mrb[0].mxu0
        %v5400 = vpop.f32.mrb[0].mxu0
        %5401 = vdwg.mxu0
        %v5402 = vmax.f32 %v5396, 0.0
        %v5403 = vmax.f32 %v5398, 0.0
        %v5404 = vpack.c.bf16 %v5402, %v5402
        %v5405 = vpack.c.bf16 %v5403, %v5403
        %v5406 = vld [vmem:[%s12] sm:$0xf]
        %v5407 = vld [vmem:[%s12 + $0x4] sm:$0xf]
        %v5408 = vld [vmem:[%s12 + $0x8] sm:$0xf]
        %v5409 = vld [vmem:[%s12 + $0xc] sm:$0xf]
        %v5410 = vld [vmem:[%s12 + $0x10] sm:$0xf]
        %v5411 = vld [vmem:[%s12 + $0x14] sm:$0xf]
        %v5412 = vld [vmem:[%s12 + $0x18] sm:$0xf]
        %v5413 = vld [vmem:[%s12 + $0x1c] sm:$0xf]
        %v5414 = vld [vmem:[%s12 + $0x20] sm:$0xf]
        %v5415 = vld [vmem:[%s12 + $0x24] sm:$0xf]
        %v5416 = vld [vmem:[%s12 + $0x28] sm:$0xf]
        %v5417 = vld [vmem:[%s12 + $0x2c] sm:$0xf]
        %v5418 = vld [vmem:[%s12 + $0x30] sm:$0xf]
        %v5419 = vld [vmem:[%s12 + $0x34] sm:$0xf]
        %v5420 = vld [vmem:[%s12 + $0x38] sm:$0xf]
        %v5421 = vld [vmem:[%s12 + $0x3c] sm:$0xf]
        %v5422 = vld [vmem:[%s12 + $0x40] sm:$0xf]
        %v5423 = vld [vmem:[%s12 + $0x44] sm:$0xf]
        %v5424 = vld [vmem:[%s12 + $0x48] sm:$0xf]
        %v5425 = vld [vmem:[%s12 + $0x4c] sm:$0xf]
        %v5426 = vld [vmem:[%s12 + $0x50] sm:$0xf]
        %v5427 = vld [vmem:[%s12 + $0x54] sm:$0xf]
        %v5428 = vld [vmem:[%s12 + $0x58] sm:$0xf]
        %v5429 = vld [vmem:[%s12 + $0x5c] sm:$0xf]
        %v5430 = vld [vmem:[%s12 + $0x60] sm:$0xf]
        %v5431 = vld [vmem:[%s13] sm:$0x1]
        %v5457 = vunpack.c.l.b16 %v5406
        %v5458 = vunpack.c.l.b16 %v5407
        %v5459 = vunpack.c.l.b16 %v5408
        %v5460 = vunpack.c.l.b16 %v5409
        %v5461 = vunpack.c.l.b16 %v5410
        %v5462 = vunpack.c.l.b16 %v5411
        %v5463 = vunpack.c.l.b16 %v5412
        %v5464 = vunpack.c.l.b16 %v5413
        %v5465 = vunpack.c.l.b16 %v5414
        %v5466 = vunpack.c.l.b16 %v5415
        %v5467 = vunpack.c.l.b16 %v5416
        %v5468 = vunpack.c.l.b16 %v5417
        %v5469 = vunpack.c.l.b16 %v5418
        %v5470 = vunpack.c.l.b16 %v5419
        %v5471 = vunpack.c.l.b16 %v5420
        %v5472 = vunpack.c.l.b16 %v5421
        %v5473 = vunpack.c.l.b16 %v5422
        %v5474 = vunpack.c.l.b16 %v5423
        %v5475 = vunpack.c.l.b16 %v5424
        %v5476 = vunpack.c.l.b16 %v5425
        %v5477 = vunpack.c.l.b16 %v5426
        %v5478 = vunpack.c.l.b16 %v5427
        %v5479 = vunpack.c.l.b16 %v5428
        %v5480 = vunpack.c.l.b16 %v5429
        %v5481 = vunpack.c.l.b16 %v5430
        %v5482 = vpack.c.b16 %v5458, %v5457
        %v5483 = vpack.c.b16 %v5460, %v5459
        %v5484 = vpack.c.b16 %v5462, %v5461
        %v5485 = vpack.c.b16 %v5464, %v5463
        %v5486 = vpack.c.b16 %v5466, %v5465
        %v5487 = vpack.c.b16 %v5468, %v5467
        %v5488 = vpack.c.b16 %v5470, %v5469
        %v5489 = vpack.c.b16 %v5472, %v5471
        %v5490 = vpack.c.b16 %v5474, %v5473
        %v5491 = vpack.c.b16 %v5476, %v5475
        %v5492 = vpack.c.b16 %v5478, %v5477
        %v5493 = vpack.c.b16 %v5480, %v5479
        %v5494 = vpack.c.b16 %v5481, %v5481
        %v5508 = vsel %vm4454, %v5405, 0
        %v5511 = vsel %vm4458, %v5494, 0
        %5513 = vmatprep.subr.bf16.mxu0 0
        %5514 = vmatpush1.bf16.msra.mxu0 %v5482
        %5515 = vmatprep.subr.bf16.mxu0 0
        %5516 = vmatpush1.bf16.msra.mxu0 %v5483
        %5517 = vmatprep.subr.bf16.mxu0 0
        %5518 = vmatpush1.bf16.msra.mxu0 %v5484
        %5519 = vmatprep.subr.bf16.mxu0 0
        %5520 = vmatpush1.bf16.msra.mxu0 %v5485
        %5521 = vmatprep.subr.bf16.mxu0 0
        %5522 = vmatpush1.bf16.msra.mxu0 %v5486
        %5523 = vmatprep.subr.bf16.mxu0 0
        %5524 = vmatpush1.bf16.msra.mxu0 %v5487
        %5525 = vmatprep.subr.bf16.mxu0 0
        %5526 = vmatpush1.bf16.msra.mxu0 %v5488
        %5527 = vmatprep.subr.bf16.mxu0 0
        %5528 = vmatpush1.bf16.msra.mxu0 %v5489
        %5529 = vmatprep.subr.bf16.mxu0 0
        %5530 = vmatpush1.bf16.msra.mxu0 %v5490
        %5531 = vmatprep.subr.bf16.mxu0 0
        %5532 = vmatpush1.bf16.msra.mxu0 %v5491
        %5533 = vmatprep.subr.bf16.mxu0 0
        %5534 = vmatpush1.bf16.msra.mxu0 %v5492
        %5535 = vmatprep.subr.bf16.mxu0 0
        %5536 = vmatpush1.bf16.msra.mxu0 %v5493
        %5537 = vmatprep.subr.bf16.mxu0 0
        %5538 = vmatpush1.bf16.msra.mxu0 %v5511
        %5539 = vmatprep.subr.bf16.mxu0 0
        %5540 = vmatpush1.bf16.msra.mxu0 0
        %5541 = vmatprep.subr.bf16.mxu0 0
        %5542 = vmatpush1.bf16.msra.mxu0 0
        %5543 = vmatprep.subr.bf16.mxu0 0
        %5544 = vmatpush1.bf16.msra.mxu0 0
        %5545 = vmatprep.mubr.bf16.mxu0 %v5508
        %5546 = vmatmul.mubr.bf16.gmra.mrb[0].mxu0 %v5404
        %v5547 = vpop.f32.mrb[0].mxu0
        %v5548 = vadd.f32 %v5431, %v5547
        %v5549 = vpop.f32.mrb[0].mxu0
        %v5550 = vpop.f32.mrb[0].mxu0
        %v5551 = vpop.f32.mrb[0].mxu0
        %5552 = vdwg.mxu0
        %v5553 = vmax.f32 %v5548, 0.0
        %v5554 = vpack.c.bf16 %v5553, %v5553
        %v5555 = vld [vmem:[%s14] sm:$0xf]
        %v5556 = vld [vmem:[%s14 + $0x4] sm:$0x7]
        %v5557 = vld [vmem:[%s15] sm:$0x1]
        %v5560 = vunpack.c.l.b16 %v5555
        %v5561 = vunpack.c.l.b16 %v5556
        %v5562 = vpack.c.b16 %v5561, %v5560
        %vm5563 = vcmask 113664
        %v5565 = vsel %vm5563, %v5554, 0
        %vm5567 = vcmask 1046528
        %v5569 = vsel %vm5567, %v5562, 0
        %5571 = vmatprep.subr.bf16.mxu0 0
        %5572 = vmatpush1.bf16.msra.mxu0 %v5569
        %5573 = vmatprep.subr.bf16.mxu0 0
        %5574 = vmatpush1.bf16.msra.mxu0 0
        %5575 = vmatprep.subr.bf16.mxu0 0
        %5576 = vmatpush1.bf16.msra.mxu0 0
        %5577 = vmatprep.subr.bf16.mxu0 0
        %5578 = vmatpush1.bf16.msra.mxu0 0
        %5579 = vmatprep.subr.bf16.mxu0 0
        %5580 = vmatpush1.bf16.msra.mxu0 0
        %5581 = vmatprep.subr.bf16.mxu0 0
        %5582 = vmatpush1.bf16.msra.mxu0 0
        %5583 = vmatprep.subr.bf16.mxu0 0
        %5584 = vmatpush1.bf16.msra.mxu0 0
        %5585 = vmatprep.subr.bf16.mxu0 0
        %5586 = vmatpush1.bf16.msra.mxu0 0
        %5587 = vmatprep.subr.bf16.mxu0 0
        %5588 = vmatpush1.bf16.msra.mxu0 0
        %5589 = vmatprep.subr.bf16.mxu0 0
        %5590 = vmatpush1.bf16.msra.mxu0 0
        %5591 = vmatprep.subr.bf16.mxu0 0
        %5592 = vmatpush1.bf16.msra.mxu0 0
        %5593 = vmatprep.subr.bf16.mxu0 0
        %5594 = vmatpush1.bf16.msra.mxu0 0
        %5595 = vmatprep.subr.bf16.mxu0 0
        %5596 = vmatpush1.bf16.msra.mxu0 0
        %5597 = vmatprep.subr.bf16.mxu0 0
        %5598 = vmatpush1.bf16.msra.mxu0 0
        %5599 = vmatprep.subr.bf16.mxu0 0
        %5600 = vmatpush1.bf16.msra.mxu0 0
        %5601 = vmatprep.subr.bf16.mxu0 0
        %5602 = vmatpush1.bf16.msra.mxu0 0
        %5603 = vmatprep.mubr.bf16.mxu0 0
        %5604 = vmatmul.mubr.bf16.gmra.mrb[0].mxu0 %v5565
        %v5605 = vpop.f32.mrb[0].mxu0
        %v5606 = vadd.f32 %v5557, %v5605
        %v5607 = vpop.f32.mrb[0].mxu0
        %v5608 = vpop.f32.mrb[0].mxu0
        %v5609 = vpop.f32.mrb[0].mxu0
        %5610 = vdwg.mxu0
        %v5611 = vmax.f32 %v5606, 0.0
        %v5612 = vpack.c.bf16 %v5611, %v5611
        %v5613 = vld [vmem:[%s16] sm:$0xf]
        %v5614 = vld [vmem:[%s17] sm:$0x1]
        %vm5615 = vcmask 56320
        %v5617 = vsel %vm5615, %v5612, 0
        %vm5619 = vcmask 1042432
        %v5620 = vsel %vm5619, 4294967295, 65535
        %v5621 = vsel %vm4458, %v5620, 0
        %v5623 = vand.u32 %v5613, %v5621
        %5625 = vmatprep.subr.bf16.mxu0 0
        %5626 = vmatpush1.bf16.msra.mxu0 %v5623
        %5627 = vmatprep.subr.bf16.mxu0 0
        %5628 = vmatpush1.bf16.msra.mxu0 0
        %5629 = vmatprep.subr.bf16.mxu0 0
        %5630 = vmatpush1.bf16.msra.mxu0 0
        %5631 = vmatprep.subr.bf16.mxu0 0
        %5632 = vmatpush1.bf16.msra.mxu0 0
        %5633 = vmatprep.subr.bf16.mxu0 0
        %5634 = vmatpush1.bf16.msra.mxu0 0
        %5635 = vmatprep.subr.bf16.mxu0 0
        %5636 = vmatpush1.bf16.msra.mxu0 0
        %5637 = vmatprep.subr.bf16.mxu0 0
        %5638 = vmatpush1.bf16.msra.mxu0 0
        %5639 = vmatprep.subr.bf16.mxu0 0
        %5640 = vmatpush1.bf16.msra.mxu0 0
        %5641 = vmatprep.subr.bf16.mxu0 0
        %5642 = vmatpush1.bf16.msra.mxu0 0
        %5643 = vmatprep.subr.bf16.mxu0 0
        %5644 = vmatpush1.bf16.msra.mxu0 0
        %5645 = vmatprep.subr.bf16.mxu0 0
        %5646 = vmatpush1.bf16.msra.mxu0 0
        %5647 = vmatprep.subr.bf16.mxu0 0
        %5648 = vmatpush1.bf16.msra.mxu0 0
        %5649 = vmatprep.subr.bf16.mxu0 0
        %5650 = vmatpush1.bf16.msra.mxu0 0
        %5651 = vmatprep.subr.bf16.mxu0 0
        %5652 = vmatpush1.bf16.msra.mxu0 0
        %5653 = vmatprep.subr.bf16.mxu0 0
        %5654 = vmatpush1.bf16.msra.mxu0 0
        %5655 = vmatprep.subr.bf16.mxu0 0
        %5656 = vmatpush1.bf16.msra.mxu0 0
        %5657 = vmatprep.mubr.bf16.mxu0 0
        %5658 = vmatmul.mubr.bf16.gmra.mrb[0].mxu0 %v5617
        %v5659 = vpop.f32.mrb[0].mxu0
        %v5660 = vadd.f32 %v5614, %v5659
        %v5661 = vpop.f32.mrb[0].mxu0
        %v5662 = vpop.f32.mrb[0].mxu0
        %v5663 = vpop.f32.mrb[0].mxu0
        %5664 = vdwg.mxu0
        %v5665 = vmul.f32 %v5660, 1000.0
        %v5666 = vld [vmem:[%s694] sm:$0x1]
        %v5667 = vld [vmem:[%s21] sm:$0x1f]
        %5669 = vrot.lane.b32.xlu0 %v5665, 127
        %v5670 = vpop.permute.xlu0 %5669
        %vm5671 = vcmask 39936
        %v5672 = vsel %vm5671, %v5670, 0
        %vm5674 = vcmask 1044480
        %v5676 = vsel %vm5674, %v5667, 0
        %5678 = vmatprep.subr.mxu0 0.0
        %5679 = vmatpush1.msra.mxu0 %v5676
        %5680 = vmatprep.subr.mxu0 0.0
        %5681 = vmatpush1.msra.mxu0 0.0
        %5682 = vmatprep.subr.mxu0 0.0
        %5683 = vmatpush1.msra.mxu0 0.0
        %5684 = vmatprep.subr.mxu0 0.0
        %5685 = vmatpush1.msra.mxu0 0.0
        %5686 = vmatprep.subr.mxu0 0.0
        %5687 = vmatpush1.msra.mxu0 0.0
        %5688 = vmatprep.subr.mxu0 0.0
        %5689 = vmatpush1.msra.mxu0 0.0
        %5690 = vmatprep.subr.mxu0 0.0
        %5691 = vmatpush1.msra.mxu0 0.0
        %5692 = vmatprep.subr.mxu0 0.0
        %5693 = vmatpush1.msra.mxu0 0.0
        %5694 = vmatprep.subr.mxu0 0.0
        %5695 = vmatpush1.msra.mxu0 0.0
        %5696 = vmatprep.subr.mxu0 0.0
        %5697 = vmatpush1.msra.mxu0 0.0
        %5698 = vmatprep.subr.mxu0 0.0
        %5699 = vmatpush1.msra.mxu0 0.0
        %5700 = vmatprep.subr.mxu0 0.0
        %5701 = vmatpush1.msra.mxu0 0.0
        %5702 = vmatprep.subr.mxu0 0.0
        %5703 = vmatpush1.msra.mxu0 0.0
        %5704 = vmatprep.subr.mxu0 0.0
        %5705 = vmatpush1.msra.mxu0 0.0
        %5706 = vmatprep.subr.mxu0 0.0
        %5707 = vmatpush1.msra.mxu0 0.0
        %5708 = vmatprep.subr.mxu0 0.0
        %5709 = vmatpush1.msra.mxu0 0.0
        %5710 = vmatprep.subr.mxu0 0.0
        %5711 = vmatpush1.msra.mxu0 0.0
        %5712 = vmatprep.subr.mxu0 0.0
        %5713 = vmatpush1.msra.mxu0 0.0
        %5714 = vmatprep.subr.mxu0 0.0
        %5715 = vmatpush1.msra.mxu0 0.0
        %5716 = vmatprep.subr.mxu0 0.0
        %5717 = vmatpush1.msra.mxu0 0.0
        %5718 = vmatprep.subr.mxu0 0.0
        %5719 = vmatpush1.msra.mxu0 0.0
        %5720 = vmatprep.subr.mxu0 0.0
        %5721 = vmatpush1.msra.mxu0 0.0
        %5722 = vmatprep.subr.mxu0 0.0
        %5723 = vmatpush1.msra.mxu0 0.0
        %5724 = vmatprep.subr.mxu0 0.0
        %5725 = vmatpush1.msra.mxu0 0.0
        %5726 = vmatprep.subr.mxu0 0.0
        %5727 = vmatpush1.msra.mxu0 0.0
        %5728 = vmatprep.subr.mxu0 0.0
        %5729 = vmatpush1.msra.mxu0 0.0
        %5730 = vmatprep.subr.mxu0 0.0
        %5731 = vmatpush1.msra.mxu0 0.0
        %5732 = vmatprep.subr.mxu0 0.0
        %5733 = vmatpush1.msra.mxu0 0.0
        %5734 = vmatprep.subr.mxu0 0.0
        %5735 = vmatpush1.msra.mxu0 0.0
        %5736 = vmatprep.subr.mxu0 0.0
        %5737 = vmatpush1.msra.mxu0 0.0
        %5738 = vmatprep.subr.mxu0 0.0
        %5739 = vmatpush1.msra.mxu0 0.0
        %5740 = vmatprep.subr.mxu0 0.0
        %5741 = vmatpush1.msra.mxu0 0.0
        %5742 = vmatprep.mubr.f32.mxu0 0.0
        %5743 = vmatmul.mubr.f32.gmra.mrb[0].mxu0 %v5672
        %v5744 = vpop.f32.mrb[0].mxu0
        %v5745 = vadd.f32 0.0, %v5744
        %v5746 = vpop.f32.mrb[0].mxu0
        %5747 = vdwg.mxu0
        %v5748 = vld [vmem:[%s18] sm:$0x1]
        %5750 = vset.pattern.permute.xlu0 0
        %5751 = vperm.xlu0 %5750, %v5666
        %v5752 = vpop.permute.xlu0 %5751
        %v5754 = vlaneseq
        %v5755 = vshrl.u32 %v5754, 7
        %v5756 = vsub.s32 0, %v5755
        %v5757 = vrot.slane %v5752, %v5756
        %v5758 = vmul.f32 %v5757, %v5748
        %v5759 = vld [vmem:[%s19] sm:$0x1]
        %v5760 = vadd.f32 %v5758, %v5759
        %v5761 = vld [vmem:[%s20] sm:$0x1]
        %5762 = vset.pattern.permute.xlu0 0
        %5763 = vperm.xlu0 %5762, %v5665
        %v5764 = vpop.permute.xlu0 %5763
        %v5766 = vmul.f32 %v5764, %v5761
        %v5767 = vadd.f32 %v5760, %v5766
        %v5768 = vsub.f32 %v5665, %v5666
        %5770 = vset.pattern.permute.xlu0 0
        %5771 = vperm.xlu0 %5770, %v5768
        %v5772 = vpop.permute.xlu0 %5771
        %v5774 = vmul.f32 %v5772, %v5745
        %v5775 = vadd.f32 %v5767, %v5774
        %vm5776 = vcmask 819200
        %5777 = vst.msk [vmem:[%s686] sm:$0x1] %vm5776, %v5775
        %s5778 = sand.u32 %s516, 1
        %s5779 = scalar_lea.sflag [#allocation3], %s5778
        %s5780 = sand.u32 %s516, 1
        %s5781 = scalar_lea.vmem [#allocation2], %s5780
        // Predicated region
        $region109: #{ndp_cnn_forward.1} parent=107 // pred_check
          %p5782 = pneg %p526
        $region110: #{ndp_cnn_forward.1} parent=107 // pred_check_branch
          %5784 = sbr.rel (%p5782) target = $region112
        $region111: #{ndp_cnn_forward.1} parent=107 // pred_region
          %s5786 = ssub.s32 16, 16
          %5787 = vsyncadd %s5779, %s5786
          %s5788 = smul.addr %s36, 16
          %s5789 = scalar_lea.hbm %s22, %s5788
          %s5791 = sshll.u32 %s5781, 4
          %s5792 = int_to_ptr.vmem [resolvable:$true] %s5791
          %5794 = dma.vmem_to_hbm [thread:$0]  %s5792, 16, %s5789, %s5779
        $region112: #{ndp_cnn_forward.1} parent=107 // pred_fallthru
          _
      $region108: #{ndp_cnn_forward.1} parent=5 // pred_fallthru
        _
      %p5795 = scmp.le.s32.totalorder 2, %s31
      // Predicated region
      $region113: #{ndp_cnn_forward.1} parent=5 // pred_check
        %p5796 = pneg %p5795
      $region114: #{ndp_cnn_forward.1} parent=5 // pred_check_branch
        %5798 = sbr.rel (%p5796) target = $region116
      $region115: #{ndp_cnn_forward.1} parent=5 // pred_region
        %s5799 = ssub.s32 %s31, 2
        // Predicated region
        $region117: #{ndp_cnn_forward.1} parent=115 // pred_check
          %p5800 = pneg %p532
        $region118: #{ndp_cnn_forward.1} parent=115 // pred_check_branch
          %5802 = sbr.rel (%p5800) target = $region120
        $region119: #{ndp_cnn_forward.1} parent=115 // pred_region
          %s5803 = sand.u32 %s517, 1
          %s5804 = scalar_lea.sflag [#allocation3], %s5803
          %s5805 = sand.u32 %s517, 1
          %s5806 = scalar_lea.vmem [#allocation2], %s5805
          %5807 = dma.done %s5804, 16
        $region120: #{ndp_cnn_forward.1} parent=115 // pred_fallthru
          _
      $region116: #{ndp_cnn_forward.1} parent=5 // pred_fallthru
        _
    $region6: #{ndp_cnn_forward.1} parent=1 // loop_footer
      %s35 = sadd.s32 1, %s31
    $region7: #{ndp_cnn_forward.1} parent=1 // loop_footer_branch
      %30 = sbr.rel target = $region3
    $region8: #{ndp_cnn_forward.1} parent=1 // loop_exit
      _
    %5808 = vsyncpa [#allocation3], 1
    %s5809 = scalar_lea.sflag [#allocation3], 1
    %5810 = vsyncpa %s5809, 1

</llo_original>
